<compile_context>
chip_gen: v7x
topology: tpu7x:2x2x1
jax: 0.10.0
libtpu: 0.0.40
codegen_flags: <defaults>
</compile_context>

<pallas_src>
import functools

import jax
import jax.numpy as jnp
from jax.experimental import pallas as pl
from jax.experimental.pallas import tpu as pltpu

_OFF = 8  # interior column offset inside the padded scratch (sublane-aligned)


def _res_stack_kernel(x_ref, w3_ref, b3_ref, w1_ref, b1_ref, o_ref, xp_ref, *,
                      H, W, C, Cr, WP):
    # x_ref : (H, W, C)         input activation for this batch element (NHWC)
    # w3_ref: (L, 9, C, Cr)     bf16 3x3 conv weights, tap index = dy*3 + dx
    # b3_ref: (L, 1, Cr)        f32 3x3 conv bias
    # w1_ref: (L, Cr, C)        bf16 1x1 conv weights
    # b1_ref: (L, 1, C)         f32 1x1 conv bias
    # o_ref : (H, W, C)         output (written only at the last layer)
    # xp_ref: (H+2, WP, C)      VMEM scratch: halo-padded resident state (f32)
    l = pl.program_id(1)
    n_layers = pl.num_programs(1)

    @pl.when(l == 0)
    def _init():
        # Zero only the halo strips (aligned stores), then load this batch
        # element's activation into the aligned interior window.
        xp_ref[:, pl.ds(0, _OFF), :] = jnp.zeros((H + 2, _OFF, C), jnp.float32)
        rpad = WP - _OFF - W
        xp_ref[:, pl.ds(_OFF + W, rpad), :] = jnp.zeros((H + 2, rpad, C),
                                                        jnp.float32)
        zrow = jnp.zeros((1, W, C), jnp.float32)
        xp_ref[pl.ds(0, 1), pl.ds(_OFF, W), :] = zrow          # top halo row
        xp_ref[pl.ds(H + 1, 1), pl.ds(_OFF, W), :] = zrow      # bottom halo row
        xp_ref[pl.ds(1, H), pl.ds(_OFF, W), :] = x_ref[...]    # interior

    xp = xp_ref[...]                      # (H+2, WP, C) pre-ReLU state, f32
    a = jnp.maximum(xp, 0.0)              # ReLU; zero border stays 0 == padding

    # Per-layer weights; the full stacks are VMEM-resident across the grid.
    w3_l = w3_ref[l]                      # (9, C, Cr) bf16
    b3_l = b3_ref[l]                      # (1, Cr)    f32
    w1_l = w1_ref[l]                      # (Cr, C)    bf16
    b1_l = b1_ref[l]                      # (1, C)     f32

    # 3x3 "same" conv as 9 accumulating bf16 matmuls (K = C), f32 accumulator,
    # bias folded into the accumulator init.
    acc = jnp.broadcast_to(b3_l, (H * W, Cr)).astype(jnp.float32)
    for dy in range(3):
        a_dy = a[dy:dy + H]                               # (H, WP, C)
        for dx in range(3):
            tap = a_dy[:, _OFF - 1 + dx:_OFF - 1 + dx + W, :].reshape(H * W, C)
            acc = acc + jnp.dot(tap.astype(jnp.bfloat16), w3_l[dy * 3 + dx],
                                preferred_element_type=jnp.float32)

    h = jnp.maximum(acc, 0.0)                             # (H*W, Cr) f32
    y = jnp.dot(h.astype(jnp.bfloat16), w1_l,
                preferred_element_type=jnp.float32) + b1_l    # (H*W, C) f32

    x_old = xp[1:1 + H, _OFF:_OFF + W, :]                 # pre-ReLU residual in
    x_new = x_old + y.reshape(H, W, C)                    # residual add (f32)

    @pl.when(l < n_layers - 1)
    def _carry():
        # Aligned interior store (leading-dim row offset, 8-aligned columns).
        xp_ref[pl.ds(1, H), pl.ds(_OFF, W), :] = x_new

    @pl.when(l == n_layers - 1)
    def _finalize():
        o_ref[...] = jnp.maximum(x_new, 0.0).astype(o_ref.dtype)  # final ReLU


def residual_stack_forward(x_nhwc, w3s, b3s, w1s, b1s):
    """x_nhwc: (B,H,W,C) f32; w3s: (L,9,C,Cr) bf16; b3s: (L,1,Cr) f32;
    w1s: (L,Cr,C) bf16; b1s: (L,1,C) f32."""
    B, H, W, C = x_nhwc.shape
    L = w3s.shape[0]
    Cr = w3s.shape[-1]
    WP = _OFF + ((W + 1 + 7) // 8) * 8        # padded width >= 8 + W + 1

    kernel = functools.partial(_res_stack_kernel, H=H, W=W, C=C, Cr=Cr, WP=WP)

    flops = 2 * B * L * H * W * C * Cr * 10   # 9 taps + 1x1 conv
    bytes_accessed = (2 * B * H * W * C * 4
                      + w3s.size * w3s.dtype.itemsize
                      + w1s.size * w1s.dtype.itemsize
                      + b3s.size * 4 + b1s.size * 4)

    return pl.pallas_call(
        kernel,
        out_shape=jax.ShapeDtypeStruct((B, H, W, C), x_nhwc.dtype),
        grid_spec=pltpu.PrefetchScalarGridSpec(
            num_scalar_prefetch=0,
            grid=(B, L),
            in_specs=[
                # x: indexed by batch only -> stays VMEM-resident across layers.
                pl.BlockSpec((None, H, W, C), lambda b, l: (b, 0, 0, 0)),
                # weights: full (L, ...) blocks with constant index_map ->
                # DMA'd once, resident for the whole grid (no per-(b,l) refetch).
                pl.BlockSpec((L, 9, C, Cr), lambda b, l: (0, 0, 0, 0)),
                pl.BlockSpec((L, 1, Cr), lambda b, l: (0, 0, 0)),
                pl.BlockSpec((L, Cr, C), lambda b, l: (0, 0, 0)),
                pl.BlockSpec((L, 1, C), lambda b, l: (0, 0, 0)),
            ],
            out_specs=pl.BlockSpec((None, H, W, C), lambda b, l: (b, 0, 0, 0)),
            scratch_shapes=[pltpu.VMEM((H + 2, WP, C), jnp.float32)],
        ),
        compiler_params=pltpu.CompilerParams(
            dimension_semantics=("parallel", "arbitrary"),
            # <= ~48 MiB keeps the same config safe on v7x (64 MiB VMEM/TC);
            # raise toward 100 MiB on v5e/v6e when scaling H/W/C.
            vmem_limit_bytes=48 * 1024 * 1024,
        ),
        cost_estimate=pl.CostEstimate(flops=flops, transcendentals=0,
                                      bytes_accessed=bytes_accessed),
    )(x_nhwc, w3s, b3s, w1s, b1s)


class ResidualStack:
    """JAX/Pallas port of the PyTorch ResidualStack module (NCHW interface)."""

    def __init__(self, num_hiddens, num_res_layers, num_res_hiddens, key):
        C, Cr = num_hiddens, num_res_hiddens
        self.params = []
        for _ in range(num_res_layers):
            key, k1, k2, k3, k4 = jax.random.split(key, 5)
            # Deterministic synthetic init (shapes mirror nn.Conv2d params).
            w3 = jax.random.normal(k1, (3, 3, C, Cr), jnp.float32) * 0.05  # HWIO
            b3 = jax.random.normal(k2, (1, Cr), jnp.float32) * 0.05
            w1 = jax.random.normal(k3, (Cr, C), jnp.float32) * 0.05
            b1 = jax.random.normal(k4, (1, C), jnp.float32) * 0.05
            self.params.append((w3, b3, w1, b1))

        # Stacked kernel weights: matmul operands in bf16 (accumulation stays
        # f32 inside the kernel); biases and residual state stay f32.
        self.w3s = jnp.stack(
            [w3.reshape(9, C, Cr) for (w3, _, _, _) in self.params]
        ).astype(jnp.bfloat16)                                     # (L,9,C,Cr)
        self.b3s = jnp.stack([b3 for (_, b3, _, _) in self.params])  # (L,1,Cr)
        self.w1s = jnp.stack(
            [w1 for (_, _, w1, _) in self.params]).astype(jnp.bfloat16)  # (L,Cr,C)
        self.b1s = jnp.stack([b1 for (_, _, _, b1) in self.params])  # (L,1,C)

    def __call__(self, x_nchw):
        # PyTorch is NCHW -> NHWC for the kernel (channels on the lane axis),
        # back to NCHW at the end.
        x = jnp.transpose(x_nchw, (0, 2, 3, 1))
        y = residual_stack_forward(x, self.w3s, self.b3s, self.w1s, self.b1s)
        return jnp.transpose(y, (0, 3, 1, 2))


def _reference_forward(x_nchw, params):
    """Pure-JAX f32 reference matching the PyTorch module exactly."""
    x = jnp.transpose(x_nchw, (0, 2, 3, 1))  # NHWC
    for (w3, b3, w1, b1) in params:
        a = jax.nn.relu(x)
        h = jax.lax.conv_general_dilated(
            a, w3, window_strides=(1, 1), padding="SAME",
            dimension_numbers=("NHWC", "HWIO", "NHWC")) + b3[0]
        h = jax.nn.relu(h)
        y = jax.lax.conv_general_dilated(
            h, w1[None, None], window_strides=(1, 1), padding="SAME",
            dimension_numbers=("NHWC", "HWIO", "NHWC")) + b1[0]
        x = x + y
    x = jax.nn.relu(x)
    return jnp.transpose(x, (0, 3, 1, 2))


if __name__ == "__main__":
    key = jax.random.PRNGKey(0)
    k_x, k_p = jax.random.split(key)

    batch, num_hiddens, H, W = 2, 32, 16, 16
    num_res_layers, num_res_hiddens = 2, 16

    x = jax.random.normal(k_x, (batch, num_hiddens, H, W), jnp.float32)

    stack = ResidualStack(num_hiddens, num_res_layers, num_res_hiddens, k_p)

    out = jax.block_until_ready(stack(x))
    ref = jax.block_until_ready(_reference_forward(x, stack.params))

    assert out.shape == ref.shape == (batch, num_hiddens, H, W)
    # bf16 matmul operands (f32 accumulation) -> looser tolerance vs f32 ref.
    assert jnp.allclose(out, ref, atol=5e-2, rtol=5e-2), (
        f"max abs err {jnp.max(jnp.abs(out - ref))}")

    print("KERNEL_OK")
</pallas_src>

<mosaic_0001>
module attributes {stable_mosaic.version = 11 : i64} {
  func.func @_res_stack_kernel(%arg0: i32, %arg1: i32, %arg2: memref<1x16x16x32xf32, #tpu.memory_space<vmem>>, %arg3: memref<2x9x32x16xbf16, #tpu.memory_space<vmem>>, %arg4: memref<2x1x16xf32, #tpu.memory_space<vmem>>, %arg5: memref<2x16x32xbf16, #tpu.memory_space<vmem>>, %arg6: memref<2x1x32xf32, #tpu.memory_space<vmem>>, %arg7: memref<1x16x16x32xf32, #tpu.memory_space<vmem>>, %arg8: memref<18x32x32xf32, #tpu.memory_space<vmem>>) attributes {dimension_semantics = [#tpu.dimension_semantics<parallel>, #tpu.dimension_semantics<arbitrary>], iteration_bounds = array<i64: 2, 2>, scalar_prefetch = 0 : i64, scratch_operands = 1 : i64, tpu.core_type = #tpu.core_type<tc>, window_params = [{transform_indices = @transform_0, window_bounds = array<i64: 1, 16, 16, 32>}, {pipeline_mode = #tpu.pipeline_mode<synchronous>, transform_indices = @transform_1, window_bounds = array<i64: 2, 9, 32, 16>}, {pipeline_mode = #tpu.pipeline_mode<synchronous>, transform_indices = @transform_2, window_bounds = array<i64: 2, 1, 16>}, {pipeline_mode = #tpu.pipeline_mode<synchronous>, transform_indices = @transform_3, window_bounds = array<i64: 2, 16, 32>}, {pipeline_mode = #tpu.pipeline_mode<synchronous>, transform_indices = @transform_4, window_bounds = array<i64: 2, 1, 32>}, {transform_indices = @transform_5, window_bounds = array<i64: 1, 16, 16, 32>}]} {
    %c0_i32 = arith.constant 0 : i32
    %0 = arith.cmpi eq, %arg1, %c0_i32 : i32
    %1 = arith.extui %0 : i1 to i32
    %c0_i32_0 = arith.constant 0 : i32
    %2 = arith.cmpi ne, %1, %c0_i32_0 : i32
    scf.if %2 {
      %cst_26 = arith.constant 0.000000e+00 : f32
      %101 = vector.broadcast %cst_26 : f32 to vector<18x8x32xf32>
      %c0_27 = arith.constant 0 : index
      %c0_28 = arith.constant 0 : index
      %c0_29 = arith.constant 0 : index
      %102 = vector.load %arg8[%c0_27, %c0_28, %c0_29] : memref<18x32x32xf32, #tpu.memory_space<vmem>>, vector<18x8x32xf32>
      tpu.vector_store %arg8[%c0_27, %c0_28, %c0_29], %101 {strides = array<i32>} : memref<18x32x32xf32, #tpu.memory_space<vmem>>, vector<18x8x32xf32>,
      %cst_30 = arith.constant 0.000000e+00 : f32
      %103 = vector.broadcast %cst_30 : f32 to vector<18x8x32xf32>
      %c0_31 = arith.constant 0 : index
      %c24 = arith.constant 24 : index
      %c0_32 = arith.constant 0 : index
      %104 = vector.load %arg8[%c0_31, %c24, %c0_32] : memref<18x32x32xf32, #tpu.memory_space<vmem>>, vector<18x8x32xf32>
      tpu.vector_store %arg8[%c0_31, %c24, %c0_32], %103 {strides = array<i32>} : memref<18x32x32xf32, #tpu.memory_space<vmem>>, vector<18x8x32xf32>,
      %cst_33 = arith.constant 0.000000e+00 : f32
      %105 = vector.broadcast %cst_33 : f32 to vector<1x16x32xf32>
      %c0_34 = arith.constant 0 : index
      %c8 = arith.constant 8 : index
      %c0_35 = arith.constant 0 : index
      %106 = vector.load %arg8[%c0_34, %c8, %c0_35] : memref<18x32x32xf32, #tpu.memory_space<vmem>>, vector<1x16x32xf32>
      tpu.vector_store %arg8[%c0_34, %c8, %c0_35], %105 {strides = array<i32>} : memref<18x32x32xf32, #tpu.memory_space<vmem>>, vector<1x16x32xf32>,
      %c17 = arith.constant 17 : index
      %c8_36 = arith.constant 8 : index
      %c0_37 = arith.constant 0 : index
      %107 = vector.load %arg8[%c17, %c8_36, %c0_37] : memref<18x32x32xf32, #tpu.memory_space<vmem>>, vector<1x16x32xf32>
      tpu.vector_store %arg8[%c17, %c8_36, %c0_37], %105 {strides = array<i32>} : memref<18x32x32xf32, #tpu.memory_space<vmem>>, vector<1x16x32xf32>,
      %c0_38 = arith.constant 0 : index
      %c0_39 = arith.constant 0 : index
      %c0_40 = arith.constant 0 : index
      %c0_41 = arith.constant 0 : index
      %108 = vector.load %arg2[%c0_38, %c0_39, %c0_40, %c0_41] : memref<1x16x16x32xf32, #tpu.memory_space<vmem>>, vector<1x16x16x32xf32>
      %109 = vector.shape_cast %108 : vector<1x16x16x32xf32> to vector<16x16x32xf32>
      %c1 = arith.constant 1 : index
      %c8_42 = arith.constant 8 : index
      %c0_43 = arith.constant 0 : index
      %110 = vector.load %arg8[%c1, %c8_42, %c0_43] : memref<18x32x32xf32, #tpu.memory_space<vmem>>, vector<16x16x32xf32>
      tpu.vector_store %arg8[%c1, %c8_42, %c0_43], %109 {strides = array<i32>} : memref<18x32x32xf32, #tpu.memory_space<vmem>>, vector<16x16x32xf32>,
    } else {
    }
    %c0 = arith.constant 0 : index
    %c0_1 = arith.constant 0 : index
    %c0_2 = arith.constant 0 : index
    %3 = vector.load %arg8[%c0, %c0_1, %c0_2] : memref<18x32x32xf32, #tpu.memory_space<vmem>>, vector<18x32x32xf32>
    %cst = arith.constant 0.000000e+00 : f32
    %4 = vector.broadcast %cst : f32 to vector<18x32x32xf32>
    %5 = arith.maximumf %3, %4 : vector<18x32x32xf32>
    %6 = arith.index_cast %arg1 : i32 to index
    %c0_3 = arith.constant 0 : index
    %c0_4 = arith.constant 0 : index
    %c0_5 = arith.constant 0 : index
    %7 = vector.load %arg3[%6, %c0_3, %c0_4, %c0_5] : memref<2x9x32x16xbf16, #tpu.memory_space<vmem>>, vector<1x9x32x16xbf16>
    %8 = vector.shape_cast %7 : vector<1x9x32x16xbf16> to vector<9x32x16xbf16>
    %9 = arith.index_cast %arg1 : i32 to index
    %c0_6 = arith.constant 0 : index
    %c0_7 = arith.constant 0 : index
    %10 = vector.load %arg4[%9, %c0_6, %c0_7] : memref<2x1x16xf32, #tpu.memory_space<vmem>>, vector<1x1x16xf32>
    %11 = vector.shape_cast %10 : vector<1x1x16xf32> to vector<1x16xf32>
    %12 = arith.index_cast %arg1 : i32 to index
    %c0_8 = arith.constant 0 : index
    %c0_9 = arith.constant 0 : index
    %13 = vector.load %arg5[%12, %c0_8, %c0_9] : memref<2x16x32xbf16, #tpu.memory_space<vmem>>, vector<1x16x32xbf16>
    %14 = vector.shape_cast %13 : vector<1x16x32xbf16> to vector<16x32xbf16>
    %15 = arith.index_cast %arg1 : i32 to index
    %c0_10 = arith.constant 0 : index
    %c0_11 = arith.constant 0 : index
    %16 = vector.load %arg6[%15, %c0_10, %c0_11] : memref<2x1x32xf32, #tpu.memory_space<vmem>>, vector<1x1x32xf32>
    %17 = vector.shape_cast %16 : vector<1x1x32xf32> to vector<1x32xf32>
    %18 = vector.shape_cast %11 : vector<1x16xf32> to vector<1x16xf32>
    %19 = vector.broadcast %18 : vector<1x16xf32> to vector<256x16xf32>
    %20 = vector.extract_strided_slice %5 {offsets = [0, 0, 0], sizes = [16, 32, 32], strides = [1, 1, 1]} : vector<18x32x32xf32> to vector<16x32x32xf32>
    %21 = vector.extract_strided_slice %20 {offsets = [0, 7, 0], sizes = [16, 16, 32], strides = [1, 1, 1]} : vector<16x32x32xf32> to vector<16x16x32xf32>
    %22 = vector.shape_cast %21 : vector<16x16x32xf32> to vector<256x32xf32>
    %23 = arith.truncf %22 : vector<256x32xf32> to vector<256x32xbf16>
    %24 = vector.extract_strided_slice %8 {offsets = [0, 0, 0], sizes = [1, 32, 16], strides = [1, 1, 1]} : vector<9x32x16xbf16> to vector<1x32x16xbf16>
    %25 = vector.shape_cast %24 : vector<1x32x16xbf16> to vector<32x16xbf16>
    %cst_12 = arith.constant dense<0.000000e+00> : vector<256x16xf32>
    %26 = tpu.matmul %23, %25, %cst_12 {dimension_numbers = #tpu.dot_dimension_numbers<[1], [0], [0], [1], [0, 0, 1, 1], [], []>} : vector<256x32xbf16>, vector<32x16xbf16>, vector<256x16xf32> -> vector<256x16xf32>
    %27 = arith.addf %19, %26 : vector<256x16xf32>
    %28 = vector.extract_strided_slice %20 {offsets = [0, 8, 0], sizes = [16, 16, 32], strides = [1, 1, 1]} : vector<16x32x32xf32> to vector<16x16x32xf32>
    %29 = vector.shape_cast %28 : vector<16x16x32xf32> to vector<256x32xf32>
    %30 = arith.truncf %29 : vector<256x32xf32> to vector<256x32xbf16>
    %31 = vector.extract_strided_slice %8 {offsets = [1, 0, 0], sizes = [1, 32, 16], strides = [1, 1, 1]} : vector<9x32x16xbf16> to vector<1x32x16xbf16>
    %32 = vector.shape_cast %31 : vector<1x32x16xbf16> to vector<32x16xbf16>
    %cst_13 = arith.constant dense<0.000000e+00> : vector<256x16xf32>
    %33 = tpu.matmul %30, %32, %cst_13 {dimension_numbers = #tpu.dot_dimension_numbers<[1], [0], [0], [1], [0, 0, 1, 1], [], []>} : vector<256x32xbf16>, vector<32x16xbf16>, vector<256x16xf32> -> vector<256x16xf32>
    %34 = arith.addf %27, %33 : vector<256x16xf32>
    %35 = vector.extract_strided_slice %20 {offsets = [0, 9, 0], sizes = [16, 16, 32], strides = [1, 1, 1]} : vector<16x32x32xf32> to vector<16x16x32xf32>
    %36 = vector.shape_cast %35 : vector<16x16x32xf32> to vector<256x32xf32>
    %37 = arith.truncf %36 : vector<256x32xf32> to vector<256x32xbf16>
    %38 = vector.extract_strided_slice %8 {offsets = [2, 0, 0], sizes = [1, 32, 16], strides = [1, 1, 1]} : vector<9x32x16xbf16> to vector<1x32x16xbf16>
    %39 = vector.shape_cast %38 : vector<1x32x16xbf16> to vector<32x16xbf16>
    %cst_14 = arith.constant dense<0.000000e+00> : vector<256x16xf32>
    %40 = tpu.matmul %37, %39, %cst_14 {dimension_numbers = #tpu.dot_dimension_numbers<[1], [0], [0], [1], [0, 0, 1, 1], [], []>} : vector<256x32xbf16>, vector<32x16xbf16>, vector<256x16xf32> -> vector<256x16xf32>
    %41 = arith.addf %34, %40 : vector<256x16xf32>
    %42 = vector.extract_strided_slice %5 {offsets = [1, 0, 0], sizes = [16, 32, 32], strides = [1, 1, 1]} : vector<18x32x32xf32> to vector<16x32x32xf32>
    %43 = vector.extract_strided_slice %42 {offsets = [0, 7, 0], sizes = [16, 16, 32], strides = [1, 1, 1]} : vector<16x32x32xf32> to vector<16x16x32xf32>
    %44 = vector.shape_cast %43 : vector<16x16x32xf32> to vector<256x32xf32>
    %45 = arith.truncf %44 : vector<256x32xf32> to vector<256x32xbf16>
    %46 = vector.extract_strided_slice %8 {offsets = [3, 0, 0], sizes = [1, 32, 16], strides = [1, 1, 1]} : vector<9x32x16xbf16> to vector<1x32x16xbf16>
    %47 = vector.shape_cast %46 : vector<1x32x16xbf16> to vector<32x16xbf16>
    %cst_15 = arith.constant dense<0.000000e+00> : vector<256x16xf32>
    %48 = tpu.matmul %45, %47, %cst_15 {dimension_numbers = #tpu.dot_dimension_numbers<[1], [0], [0], [1], [0, 0, 1, 1], [], []>} : vector<256x32xbf16>, vector<32x16xbf16>, vector<256x16xf32> -> vector<256x16xf32>
    %49 = arith.addf %41, %48 : vector<256x16xf32>
    %50 = vector.extract_strided_slice %42 {offsets = [0, 8, 0], sizes = [16, 16, 32], strides = [1, 1, 1]} : vector<16x32x32xf32> to vector<16x16x32xf32>
    %51 = vector.shape_cast %50 : vector<16x16x32xf32> to vector<256x32xf32>
    %52 = arith.truncf %51 : vector<256x32xf32> to vector<256x32xbf16>
    %53 = vector.extract_strided_slice %8 {offsets = [4, 0, 0], sizes = [1, 32, 16], strides = [1, 1, 1]} : vector<9x32x16xbf16> to vector<1x32x16xbf16>
    %54 = vector.shape_cast %53 : vector<1x32x16xbf16> to vector<32x16xbf16>
    %cst_16 = arith.constant dense<0.000000e+00> : vector<256x16xf32>
    %55 = tpu.matmul %52, %54, %cst_16 {dimension_numbers = #tpu.dot_dimension_numbers<[1], [0], [0], [1], [0, 0, 1, 1], [], []>} : vector<256x32xbf16>, vector<32x16xbf16>, vector<256x16xf32> -> vector<256x16xf32>
    %56 = arith.addf %49, %55 : vector<256x16xf32>
    %57 = vector.extract_strided_slice %42 {offsets = [0, 9, 0], sizes = [16, 16, 32], strides = [1, 1, 1]} : vector<16x32x32xf32> to vector<16x16x32xf32>
    %58 = vector.shape_cast %57 : vector<16x16x32xf32> to vector<256x32xf32>
    %59 = arith.truncf %58 : vector<256x32xf32> to vector<256x32xbf16>
    %60 = vector.extract_strided_slice %8 {offsets = [5, 0, 0], sizes = [1, 32, 16], strides = [1, 1, 1]} : vector<9x32x16xbf16> to vector<1x32x16xbf16>
    %61 = vector.shape_cast %60 : vector<1x32x16xbf16> to vector<32x16xbf16>
    %cst_17 = arith.constant dense<0.000000e+00> : vector<256x16xf32>
    %62 = tpu.matmul %59, %61, %cst_17 {dimension_numbers = #tpu.dot_dimension_numbers<[1], [0], [0], [1], [0, 0, 1, 1], [], []>} : vector<256x32xbf16>, vector<32x16xbf16>, vector<256x16xf32> -> vector<256x16xf32>
    %63 = arith.addf %56, %62 : vector<256x16xf32>
    %64 = vector.extract_strided_slice %5 {offsets = [2, 0, 0], sizes = [16, 32, 32], strides = [1, 1, 1]} : vector<18x32x32xf32> to vector<16x32x32xf32>
    %65 = vector.extract_strided_slice %64 {offsets = [0, 7, 0], sizes = [16, 16, 32], strides = [1, 1, 1]} : vector<16x32x32xf32> to vector<16x16x32xf32>
    %66 = vector.shape_cast %65 : vector<16x16x32xf32> to vector<256x32xf32>
    %67 = arith.truncf %66 : vector<256x32xf32> to vector<256x32xbf16>
    %68 = vector.extract_strided_slice %8 {offsets = [6, 0, 0], sizes = [1, 32, 16], strides = [1, 1, 1]} : vector<9x32x16xbf16> to vector<1x32x16xbf16>
    %69 = vector.shape_cast %68 : vector<1x32x16xbf16> to vector<32x16xbf16>
    %cst_18 = arith.constant dense<0.000000e+00> : vector<256x16xf32>
    %70 = tpu.matmul %67, %69, %cst_18 {dimension_numbers = #tpu.dot_dimension_numbers<[1], [0], [0], [1], [0, 0, 1, 1], [], []>} : vector<256x32xbf16>, vector<32x16xbf16>, vector<256x16xf32> -> vector<256x16xf32>
    %71 = arith.addf %63, %70 : vector<256x16xf32>
    %72 = vector.extract_strided_slice %64 {offsets = [0, 8, 0], sizes = [16, 16, 32], strides = [1, 1, 1]} : vector<16x32x32xf32> to vector<16x16x32xf32>
    %73 = vector.shape_cast %72 : vector<16x16x32xf32> to vector<256x32xf32>
    %74 = arith.truncf %73 : vector<256x32xf32> to vector<256x32xbf16>
    %75 = vector.extract_strided_slice %8 {offsets = [7, 0, 0], sizes = [1, 32, 16], strides = [1, 1, 1]} : vector<9x32x16xbf16> to vector<1x32x16xbf16>
    %76 = vector.shape_cast %75 : vector<1x32x16xbf16> to vector<32x16xbf16>
    %cst_19 = arith.constant dense<0.000000e+00> : vector<256x16xf32>
    %77 = tpu.matmul %74, %76, %cst_19 {dimension_numbers = #tpu.dot_dimension_numbers<[1], [0], [0], [1], [0, 0, 1, 1], [], []>} : vector<256x32xbf16>, vector<32x16xbf16>, vector<256x16xf32> -> vector<256x16xf32>
    %78 = arith.addf %71, %77 : vector<256x16xf32>
    %79 = vector.extract_strided_slice %64 {offsets = [0, 9, 0], sizes = [16, 16, 32], strides = [1, 1, 1]} : vector<16x32x32xf32> to vector<16x16x32xf32>
    %80 = vector.shape_cast %79 : vector<16x16x32xf32> to vector<256x32xf32>
    %81 = arith.truncf %80 : vector<256x32xf32> to vector<256x32xbf16>
    %82 = vector.extract_strided_slice %8 {offsets = [8, 0, 0], sizes = [1, 32, 16], strides = [1, 1, 1]} : vector<9x32x16xbf16> to vector<1x32x16xbf16>
    %83 = vector.shape_cast %82 : vector<1x32x16xbf16> to vector<32x16xbf16>
    %cst_20 = arith.constant dense<0.000000e+00> : vector<256x16xf32>
    %84 = tpu.matmul %81, %83, %cst_20 {dimension_numbers = #tpu.dot_dimension_numbers<[1], [0], [0], [1], [0, 0, 1, 1], [], []>} : vector<256x32xbf16>, vector<32x16xbf16>, vector<256x16xf32> -> vector<256x16xf32>
    %85 = arith.addf %78, %84 : vector<256x16xf32>
    %cst_21 = arith.constant 0.000000e+00 : f32
    %86 = vector.broadcast %cst_21 : f32 to vector<256x16xf32>
    %87 = arith.maximumf %85, %86 : vector<256x16xf32>
    %88 = arith.truncf %87 : vector<256x16xf32> to vector<256x16xbf16>
    %cst_22 = arith.constant dense<0.000000e+00> : vector<256x32xf32>
    %89 = tpu.matmul %88, %14, %cst_22 {dimension_numbers = #tpu.dot_dimension_numbers<[1], [0], [0], [1], [0, 0, 1, 1], [], []>} : vector<256x16xbf16>, vector<16x32xbf16>, vector<256x32xf32> -> vector<256x32xf32>
    %90 = vector.broadcast %17 : vector<1x32xf32> to vector<256x32xf32>
    %91 = arith.addf %89, %90 : vector<256x32xf32>
    %92 = vector.extract_strided_slice %3 {offsets = [1, 8, 0], sizes = [16, 16, 32], strides = [1, 1, 1]} : vector<18x32x32xf32> to vector<16x16x32xf32>
    %93 = vector.shape_cast %91 : vector<256x32xf32> to vector<16x16x32xf32>
    %94 = arith.addf %92, %93 : vector<16x16x32xf32>
    %c1_i32 = arith.constant 1 : i32
    %95 = arith.cmpi slt, %arg1, %c1_i32 : i32
    %96 = arith.extui %95 : i1 to i32
    %c0_i32_23 = arith.constant 0 : i32
    %97 = arith.cmpi ne, %96, %c0_i32_23 : i32
    scf.if %97 {
      %c1 = arith.constant 1 : index
      %c8 = arith.constant 8 : index
      %c0_26 = arith.constant 0 : index
      %101 = vector.load %arg8[%c1, %c8, %c0_26] : memref<18x32x32xf32, #tpu.memory_space<vmem>>, vector<16x16x32xf32>
      tpu.vector_store %arg8[%c1, %c8, %c0_26], %94 {strides = array<i32>} : memref<18x32x32xf32, #tpu.memory_space<vmem>>, vector<16x16x32xf32>,
    } else {
    }
    %c1_i32_24 = arith.constant 1 : i32
    %98 = arith.cmpi eq, %arg1, %c1_i32_24 : i32
    %99 = arith.extui %98 : i1 to i32
    %c0_i32_25 = arith.constant 0 : i32
    %100 = arith.cmpi ne, %99, %c0_i32_25 : i32
    scf.if %100 {
      %cst_26 = arith.constant 0.000000e+00 : f32
      %101 = vector.broadcast %cst_26 : f32 to vector<16x16x32xf32>
      %102 = arith.maximumf %94, %101 : vector<16x16x32xf32>
      %c0_27 = arith.constant 0 : index
      %c0_28 = arith.constant 0 : index
      %c0_29 = arith.constant 0 : index
      %c0_30 = arith.constant 0 : index
      %103 = vector.load %arg7[%c0_27, %c0_28, %c0_29, %c0_30] : memref<1x16x16x32xf32, #tpu.memory_space<vmem>>, vector<1x16x16x32xf32>
      %104 = vector.shape_cast %103 : vector<1x16x16x32xf32> to vector<16x16x32xf32>
      %105 = vector.shape_cast %102 : vector<16x16x32xf32> to vector<1x16x16x32xf32>
      tpu.vector_store %arg7[%c0_27, %c0_28, %c0_29, %c0_30], %105 {strides = array<i32>} : memref<1x16x16x32xf32, #tpu.memory_space<vmem>>, vector<1x16x16x32xf32>,
    } else {
    }
    return
  }
  func.func @transform_0(%arg0: i32, %arg1: i32) -> (i32, i32, i32, i32) {
    %c0_i32 = arith.constant 0 : i32
    %c0_i32_0 = arith.constant 0 : i32
    %c0_i32_1 = arith.constant 0 : i32
    %c0_i32_2 = arith.constant 0 : i32
    return %arg0, %c0_i32, %c0_i32_0, %c0_i32_1 : i32, i32, i32, i32
  }
  func.func @transform_1(%arg0: i32, %arg1: i32) -> (i32, i32, i32, i32) {
    %c0_i32 = arith.constant 0 : i32
    %c0_i32_0 = arith.constant 0 : i32
    %c0_i32_1 = arith.constant 0 : i32
    %c0_i32_2 = arith.constant 0 : i32
    %c0_i32_3 = arith.constant 0 : i32
    return %c0_i32, %c0_i32_0, %c0_i32_1, %c0_i32_2 : i32, i32, i32, i32
  }
  func.func @transform_2(%arg0: i32, %arg1: i32) -> (i32, i32, i32) {
    %c0_i32 = arith.constant 0 : i32
    %c0_i32_0 = arith.constant 0 : i32
    %c0_i32_1 = arith.constant 0 : i32
    %c0_i32_2 = arith.constant 0 : i32
    return %c0_i32, %c0_i32_0, %c0_i32_1 : i32, i32, i32
  }
  func.func @transform_3(%arg0: i32, %arg1: i32) -> (i32, i32, i32) {
    %c0_i32 = arith.constant 0 : i32
    %c0_i32_0 = arith.constant 0 : i32
    %c0_i32_1 = arith.constant 0 : i32
    %c0_i32_2 = arith.constant 0 : i32
    return %c0_i32, %c0_i32_0, %c0_i32_1 : i32, i32, i32
  }
  func.func @transform_4(%arg0: i32, %arg1: i32) -> (i32, i32, i32) {
    %c0_i32 = arith.constant 0 : i32
    %c0_i32_0 = arith.constant 0 : i32
    %c0_i32_1 = arith.constant 0 : i32
    %c0_i32_2 = arith.constant 0 : i32
    return %c0_i32, %c0_i32_0, %c0_i32_1 : i32, i32, i32
  }
  func.func @transform_5(%arg0: i32, %arg1: i32) -> (i32, i32, i32, i32) {
    %c0_i32 = arith.constant 0 : i32
    %c0_i32_0 = arith.constant 0 : i32
    %c0_i32_1 = arith.constant 0 : i32
    %c0_i32_2 = arith.constant 0 : i32
    return %arg0, %c0_i32, %c0_i32_0, %c0_i32_1 : i32, i32, i32, i32
  }
}

</mosaic_0001>

<llo_original>
// kernel: tpu_custom_call.1
$region0: #{tpu_custom_call.1}
  #allocation0 [shape = 'u32[]', space=smem, size = 0x4, offset = 0x4, fixed_abs, tag = 'smem constant byte address 0x4 - core index']
  #allocation1 [shape = 'u32[144,128]{1,0:T(1,128)}', space=vmem, size = 0x12000, scoped, tag = 'internal scratch']
  #allocation2 [shape = 'f32[18,32,32]{2,1,0:T(8,128)}', space=vmem, size = 0x48000, scoped, tag = 'scratch operand']
  %s0 = inlined_call_operand.hbm [shape: f32[2,16,16,32], index: 0, kind: input, shape index: {}]
  %s1 = inlined_call_operand.vmem [shape: bf16[2,9,32,16], index: 1, kind: input, shape index: {}]
  %s2 = inlined_call_operand.vmem [shape: f32[2,1,16], index: 2, kind: input, shape index: {}]
  %s3 = inlined_call_operand.vmem [shape: bf16[2,16,32], index: 3, kind: input, shape index: {}]
  %s4 = inlined_call_operand.vmem [shape: f32[2,1,32], index: 4, kind: input, shape index: {}]
  %s5 = inlined_call_operand.hbm [shape: f32[2,16,16,32], index: 5, kind: output, shape index: {}]
  %s6 = sld [smem:[#allocation0]]
  $region69: #{tpu_custom_call.1} parent=0
    _
  %s8 = ssub.s32 1, %s6
  %s9 = scalar_select 0, %s8, %s6
  $region1: #{tpu_custom_call.1} parent=0
    #allocation3 [shape = 'u8[262144]{0}', space=vmem, size = 0x40000, scoped, tag = 'input window, operand 0']
    #allocation4 [shape = 's32[2]{0}', space=sflag, size = 0x8, scoped, tag = 'scoped memory for tpu_custom_call.1']
    #allocation5 [shape = 's32[2]{0}', space=sflag, size = 0x8, scoped, tag = 'scoped memory for tpu_custom_call.1']
    #allocation6 [shape = 'u8[262144]{0}', space=vmem, size = 0x40000, scoped, tag = 'output window, operand 0']
    %10 = vsyncpa [#allocation4], 0
    %s11 = scalar_lea.sflag [#allocation4], 1
    %12 = vsyncpa %s11, 0
    %13 = vsyncpa [#allocation5], 0
    %s14 = scalar_lea.sflag [#allocation5], 1
    %15 = vsyncpa %s14, 0
    loop: start=0, step=1, limit=6
    $region2: #{tpu_custom_call.1} parent=1 // loop_pre_header
      _
    $region3: #{tpu_custom_call.1} parent=1 // loop_header
      %s17 = sphi 0, %s21
      %p18 = scmp.ge.s32.totalorder %s17, 6
      %s24 = sphi 0, %s36
      %s25 = sphi 0, %s32
      %s26 = sphi 0, %s24
      %s27 = sphi 0, %s25
      %s28 = sphi 0, %s26
      %s29 = sphi 0, %s27
      %s39 = sphi 0, %s41
      %s42 = sphi 0, %s39
      %s43 = sphi 0, %s42
      %s59 = sphi 0, %s43
      %s63 = sphi 0, %s63
      %s65 = sphi 0, %s63
      %s66 = sphi 0, %s65
      %s80 = sphi 0, %s66
      %s84 = sphi 0, %s84
      %s86 = sphi 0, %s84
      %s87 = sphi 0, %s86
      %s101 = sphi 0, %s87
      %s105 = sphi 0, %s105
      %s107 = sphi 0, %s105
      %s108 = sphi 0, %s107
      %s122 = sphi 0, %s108
      %s126 = sphi 0, %s126
      %s128 = sphi 0, %s126
      %s129 = sphi 0, %s128
      %s143 = sphi 0, %s129
      %s149 = sphi 0, %s151
      %s152 = sphi 0, %s149
      %s153 = sphi 0, %s152
      %s169 = sphi 0, %s153
    $region4: #{tpu_custom_call.1} parent=1 // loop_header_branch
      %20 = sbr.rel (%p18) target = $region8
    $region5: #{tpu_custom_call.1} parent=1 // loop_body
      %s22 = ssub.s32 %s17, 1
      %s23 = ssub.s32 %s17, 2
      %s30 = sadd.s32 1, %s25
      %p31 = scmp.ge.s32.totalorder %s30, 2
      %s32 = scalar_select %p31, 0, %s30
      %s33 = sadd.s32 1, %s24
      %s34 = scalar_select %p31, %s33, %s24
      %p35 = scmp.ge.s32.totalorder %s34, 2
      %s36 = scalar_select %p35, 0, %s34
      %s37 = ssub.s32 %s24, %s36
      %p38 = scmp.eq.s32.totalorder %s37, 0
      %s40 = sadd.s32 %s39, 1
      %s41 = scalar_select %p38, %s39, %s40
      %p44 = pneg %p38
      %p45 = scmp.eq.s32.totalorder %s17, 3
      %p46 = por %p44, %p45
      %p47 = scmp.ne.s32.totalorder %s39, %s42
      %p48 = scmp.eq.s32.totalorder %s17, 0
      %p49 = por %p47, %p48
      %p50 = scmp.ne.s32.totalorder %s39, %s42
      %p51 = scmp.eq.s32.totalorder %s22, 3
      %p52 = por %p50, %p51
      %p53 = scmp.ne.s32.totalorder %s42, %s43
      %p54 = scmp.eq.s32.totalorder %s22, 0
      %p55 = por %p53, %p54
      %p56 = scmp.ne.s32.totalorder %s42, %s43
      %p57 = scmp.eq.s32.totalorder %s23, 3
      %p58 = por %p56, %p57
      %p60 = scmp.ne.s32.totalorder %s43, %s59
      %p61 = scmp.eq.s32.totalorder %s23, 0
      %p62 = por %p60, %p61
      %s64 = sadd.s32 %s63, 1
      %p67 = scmp.eq.s32.totalorder %s17, 3
      %p68 = scmp.ne.s32.totalorder %s63, %s65
      %p69 = scmp.eq.s32.totalorder %s17, 0
      %p70 = por %p68, %p69
      %p71 = scmp.ne.s32.totalorder %s63, %s65
      %p72 = scmp.eq.s32.totalorder %s22, 3
      %p73 = por %p71, %p72
      %p74 = scmp.ne.s32.totalorder %s65, %s66
      %p75 = scmp.eq.s32.totalorder %s22, 0
      %p76 = por %p74, %p75
      %p77 = scmp.ne.s32.totalorder %s65, %s66
      %p78 = scmp.eq.s32.totalorder %s23, 3
      %p79 = por %p77, %p78
      %p81 = scmp.ne.s32.totalorder %s66, %s80
      %p82 = scmp.eq.s32.totalorder %s23, 0
      %p83 = por %p81, %p82
      %s85 = sadd.s32 %s84, 1
      %p88 = scmp.eq.s32.totalorder %s17, 3
      %p89 = scmp.ne.s32.totalorder %s84, %s86
      %p90 = scmp.eq.s32.totalorder %s17, 0
      %p91 = por %p89, %p90
      %p92 = scmp.ne.s32.totalorder %s84, %s86
      %p93 = scmp.eq.s32.totalorder %s22, 3
      %p94 = por %p92, %p93
      %p95 = scmp.ne.s32.totalorder %s86, %s87
      %p96 = scmp.eq.s32.totalorder %s22, 0
      %p97 = por %p95, %p96
      %p98 = scmp.ne.s32.totalorder %s86, %s87
      %p99 = scmp.eq.s32.totalorder %s23, 3
      %p100 = por %p98, %p99
      %p102 = scmp.ne.s32.totalorder %s87, %s101
      %p103 = scmp.eq.s32.totalorder %s23, 0
      %p104 = por %p102, %p103
      %s106 = sadd.s32 %s105, 1
      %p109 = scmp.eq.s32.totalorder %s17, 3
      %p110 = scmp.ne.s32.totalorder %s105, %s107
      %p111 = scmp.eq.s32.totalorder %s17, 0
      %p112 = por %p110, %p111
      %p113 = scmp.ne.s32.totalorder %s105, %s107
      %p114 = scmp.eq.s32.totalorder %s22, 3
      %p115 = por %p113, %p114
      %p116 = scmp.ne.s32.totalorder %s107, %s108
      %p117 = scmp.eq.s32.totalorder %s22, 0
      %p118 = por %p116, %p117
      %p119 = scmp.ne.s32.totalorder %s107, %s108
      %p120 = scmp.eq.s32.totalorder %s23, 3
      %p121 = por %p119, %p120
      %p123 = scmp.ne.s32.totalorder %s108, %s122
      %p124 = scmp.eq.s32.totalorder %s23, 0
      %p125 = por %p123, %p124
      %s127 = sadd.s32 %s126, 1
      %p130 = scmp.eq.s32.totalorder %s17, 3
      %p131 = scmp.ne.s32.totalorder %s126, %s128
      %p132 = scmp.eq.s32.totalorder %s17, 0
      %p133 = por %p131, %p132
      %p134 = scmp.ne.s32.totalorder %s126, %s128
      %p135 = scmp.eq.s32.totalorder %s22, 3
      %p136 = por %p134, %p135
      %p137 = scmp.ne.s32.totalorder %s128, %s129
      %p138 = scmp.eq.s32.totalorder %s22, 0
      %p139 = por %p137, %p138
      %p140 = scmp.ne.s32.totalorder %s128, %s129
      %p141 = scmp.eq.s32.totalorder %s23, 3
      %p142 = por %p140, %p141
      %p144 = scmp.ne.s32.totalorder %s129, %s143
      %p145 = scmp.eq.s32.totalorder %s23, 0
      %p146 = por %p144, %p145
      %s147 = ssub.s32 %s24, %s36
      %p148 = scmp.eq.s32.totalorder %s147, 0
      %s150 = sadd.s32 %s149, 1
      %s151 = scalar_select %p148, %s149, %s150
      %p154 = pneg %p148
      %p155 = scmp.eq.s32.totalorder %s17, 3
      %p156 = por %p154, %p155
      %p157 = scmp.ne.s32.totalorder %s149, %s152
      %p158 = scmp.eq.s32.totalorder %s17, 0
      %p159 = por %p157, %p158
      %p160 = scmp.ne.s32.totalorder %s149, %s152
      %p161 = scmp.eq.s32.totalorder %s22, 3
      %p162 = por %p160, %p161
      %p163 = scmp.ne.s32.totalorder %s152, %s153
      %p164 = scmp.eq.s32.totalorder %s22, 0
      %p165 = por %p163, %p164
      %p166 = scmp.ne.s32.totalorder %s152, %s153
      %p167 = scmp.eq.s32.totalorder %s23, 3
      %p168 = por %p166, %p167
      %p170 = scmp.ne.s32.totalorder %s153, %s169
      %p171 = scmp.eq.s32.totalorder %s23, 0
      %p172 = por %p170, %p171
      %p173 = scmp.le.s32.totalorder 1, %s17
      %p174 = scmp.lt.s32.totalorder %s17, 5
      %p175 = pnand %p173, %p174
      %p176 = pneg %p175
      // Predicated region
      $region9: #{tpu_custom_call.1} parent=5 // pred_check
        _
      $region10: #{tpu_custom_call.1} parent=5 // pred_check_branch
        %178 = sbr.rel (%p175) target = $region12
      $region11: #{tpu_custom_call.1} parent=5 // pred_region
        %s179 = ssub.s32 %s17, 1
        // Predicated region
        $region13: #{tpu_custom_call.1} parent=11 // pred_check
          %p180 = pneg %p76
        $region14: #{tpu_custom_call.1} parent=11 // pred_check_branch
          %182 = sbr.rel (%p180) target = $region16
        $region15: #{tpu_custom_call.1} parent=11 // pred_region
          _
        $region16: #{tpu_custom_call.1} parent=11 // pred_fallthru
          _
        // Predicated region
        $region17: #{tpu_custom_call.1} parent=11 // pred_check
          %p183 = pneg %p97
        $region18: #{tpu_custom_call.1} parent=11 // pred_check_branch
          %185 = sbr.rel (%p183) target = $region20
        $region19: #{tpu_custom_call.1} parent=11 // pred_region
          _
        $region20: #{tpu_custom_call.1} parent=11 // pred_fallthru
          _
        // Predicated region
        $region21: #{tpu_custom_call.1} parent=11 // pred_check
          %p186 = pneg %p118
        $region22: #{tpu_custom_call.1} parent=11 // pred_check_branch
          %188 = sbr.rel (%p186) target = $region24
        $region23: #{tpu_custom_call.1} parent=11 // pred_region
          _
        $region24: #{tpu_custom_call.1} parent=11 // pred_fallthru
          _
        // Predicated region
        $region25: #{tpu_custom_call.1} parent=11 // pred_check
          %p189 = pneg %p139
        $region26: #{tpu_custom_call.1} parent=11 // pred_check_branch
          %191 = sbr.rel (%p189) target = $region28
        $region27: #{tpu_custom_call.1} parent=11 // pred_region
          _
        $region28: #{tpu_custom_call.1} parent=11 // pred_fallthru
          _
      $region12: #{tpu_custom_call.1} parent=5 // pred_fallthru
        _
      %p192 = scmp.lt.s32.totalorder %s17, 4
      // Predicated region
      $region29: #{tpu_custom_call.1} parent=5 // pred_check
        %p193 = pneg %p192
      $region30: #{tpu_custom_call.1} parent=5 // pred_check_branch
        %195 = sbr.rel (%p193) target = $region32
      $region31: #{tpu_custom_call.1} parent=5 // pred_region
        // Predicated region
        $region33: #{tpu_custom_call.1} parent=31 // pred_check
          %p196 = pneg %p49
        $region34: #{tpu_custom_call.1} parent=31 // pred_check_branch
          %198 = sbr.rel (%p196) target = $region36
        $region35: #{tpu_custom_call.1} parent=31 // pred_region
          %s199 = sand.u32 %s39, 1
          %s200 = scalar_lea.sflag [#allocation4], %s199
          %s201 = sand.u32 %s39, 1
          %s202 = smul.addr %s201, 256
          %s203 = scalar_lea.vmem [#allocation3], %s202
          %s205 = ssub.s32 4096, 4096
          %206 = vsyncadd %s200, %s205
          %s207 = smul.addr %s24, 32
          %s208 = smul.addr %s207, 128
          %s209 = scalar_lea.hbm %s0, %s208
          %s210 = sshll.u32 %s203, 4
          %s211 = int_to_ptr.vmem [resolvable:$true] %s210
          %216 = dma.hbm_to_vmem [thread:$0]  %s209, 4096, %s211, %s200, 128, 128, 8
        $region36: #{tpu_custom_call.1} parent=31 // pred_fallthru
          _
      $region32: #{tpu_custom_call.1} parent=5 // pred_fallthru
        _
      %p217 = scmp.le.s32.totalorder 1, %s17
      %p218 = scmp.lt.s32.totalorder %s17, 5
      %p219 = pnand %p217, %p218
      %p220 = pneg %p219
      // Predicated region
      $region37: #{tpu_custom_call.1} parent=5 // pred_check
        _
      $region38: #{tpu_custom_call.1} parent=5 // pred_check_branch
        %222 = sbr.rel (%p219) target = $region40
      $region39: #{tpu_custom_call.1} parent=5 // pred_region
        %s223 = ssub.s32 %s17, 1
        %s224 = sand.u32 %s42, 1
        %s225 = scalar_lea.sflag [#allocation4], %s224
        %s226 = sand.u32 %s42, 1
        %s227 = smul.addr %s226, 256
        %s228 = scalar_lea.vmem [#allocation3], %s227
        // Predicated region
        $region41: #{tpu_custom_call.1} parent=39 // pred_check
          %p229 = pneg %p55
        $region42: #{tpu_custom_call.1} parent=39 // pred_check_branch
          %231 = sbr.rel (%p229) target = $region44
        $region43: #{tpu_custom_call.1} parent=39 // pred_region
          %232 = dma.done %s225, 4096
        $region44: #{tpu_custom_call.1} parent=39 // pred_fallthru
          _
        %s233 = sand.u32 %s42, 1
        %s234 = scalar_lea.sflag [#allocation4], %s233
        %s235 = sand.u32 %s42, 1
        %s236 = smul.addr %s235, 256
        %s237 = scalar_lea.vmem [#allocation3], %s236
        %p238 = pneg %p55
        %p239 = pneg %p52
        %p240 = pneg %p76
        %p241 = pneg %p73
        %p242 = pneg %p97
        %p243 = pneg %p94
        %p244 = pneg %p118
        %p245 = pneg %p115
        %p246 = pneg %p139
        %p247 = pneg %p136
        %p248 = pneg %p165
        %p249 = pneg %p162
        %s250 = sand.u32 %s152, 1
        %s251 = scalar_lea.sflag [#allocation5], %s250
        %s252 = sand.u32 %s152, 1
        %s253 = smul.addr %s252, 256
        %s254 = scalar_lea.vmem [#allocation6], %s253
        %p256 = scmp.eq.s32.totalorder %s27, 0
        // Predicated region
        $region45: #{tpu_custom_call.1} parent=39 // pred_check
          %p257 = pneg %p256
        $region46: #{tpu_custom_call.1} parent=39 // pred_check_branch
          %259 = sbr.rel (%p257) target = $region48
        $region47: #{tpu_custom_call.1} parent=39 // pred_region
          %vm260 = vcmask 261120
          %261 = vst.msk [vmem:[#allocation2] sm:$0xff] %vm260, 0.0
          %262 = vst.msk [vmem:[#allocation2 + $0x20] sm:$0xff] %vm260, 0.0
          %263 = vst.msk [vmem:[#allocation2 + $0x40] sm:$0xff] %vm260, 0.0
          %264 = vst.msk [vmem:[#allocation2 + $0x60] sm:$0xff] %vm260, 0.0
          %265 = vst.msk [vmem:[#allocation2 + $0x80] sm:$0xff] %vm260, 0.0
          %266 = vst.msk [vmem:[#allocation2 + $0xa0] sm:$0xff] %vm260, 0.0
          %267 = vst.msk [vmem:[#allocation2 + $0xc0] sm:$0xff] %vm260, 0.0
          %268 = vst.msk [vmem:[#allocation2 + $0xe0] sm:$0xff] %vm260, 0.0
          %269 = vst.msk [vmem:[#allocation2 + $0x100] sm:$0xff] %vm260, 0.0
          %270 = vst.msk [vmem:[#allocation2 + $0x120] sm:$0xff] %vm260, 0.0
          %271 = vst.msk [vmem:[#allocation2 + $0x140] sm:$0xff] %vm260, 0.0
          %272 = vst.msk [vmem:[#allocation2 + $0x160] sm:$0xff] %vm260, 0.0
          %273 = vst.msk [vmem:[#allocation2 + $0x180] sm:$0xff] %vm260, 0.0
          %274 = vst.msk [vmem:[#allocation2 + $0x1a0] sm:$0xff] %vm260, 0.0
          %275 = vst.msk [vmem:[#allocation2 + $0x1c0] sm:$0xff] %vm260, 0.0
          %276 = vst.msk [vmem:[#allocation2 + $0x1e0] sm:$0xff] %vm260, 0.0
          %277 = vst.msk [vmem:[#allocation2 + $0x200] sm:$0xff] %vm260, 0.0
          %278 = vst.msk [vmem:[#allocation2 + $0x220] sm:$0xff] %vm260, 0.0
          %279 = vst.msk [vmem:[#allocation2 + $0x18] sm:$0xff] %vm260, 0.0
          %280 = vst.msk [vmem:[#allocation2 + $0x38] sm:$0xff] %vm260, 0.0
          %281 = vst.msk [vmem:[#allocation2 + $0x58] sm:$0xff] %vm260, 0.0
          %282 = vst.msk [vmem:[#allocation2 + $0x78] sm:$0xff] %vm260, 0.0
          %283 = vst.msk [vmem:[#allocation2 + $0x98] sm:$0xff] %vm260, 0.0
          %284 = vst.msk [vmem:[#allocation2 + $0xb8] sm:$0xff] %vm260, 0.0
          %285 = vst.msk [vmem:[#allocation2 + $0xd8] sm:$0xff] %vm260, 0.0
          %286 = vst.msk [vmem:[#allocation2 + $0xf8] sm:$0xff] %vm260, 0.0
          %287 = vst.msk [vmem:[#allocation2 + $0x118] sm:$0xff] %vm260, 0.0
          %288 = vst.msk [vmem:[#allocation2 + $0x138] sm:$0xff] %vm260, 0.0
          %289 = vst.msk [vmem:[#allocation2 + $0x158] sm:$0xff] %vm260, 0.0
          %290 = vst.msk [vmem:[#allocation2 + $0x178] sm:$0xff] %vm260, 0.0
          %291 = vst.msk [vmem:[#allocation2 + $0x198] sm:$0xff] %vm260, 0.0
          %292 = vst.msk [vmem:[#allocation2 + $0x1b8] sm:$0xff] %vm260, 0.0
          %293 = vst.msk [vmem:[#allocation2 + $0x1d8] sm:$0xff] %vm260, 0.0
          %294 = vst.msk [vmem:[#allocation2 + $0x1f8] sm:$0xff] %vm260, 0.0
          %295 = vst.msk [vmem:[#allocation2 + $0x218] sm:$0xff] %vm260, 0.0
          %296 = vst.msk [vmem:[#allocation2 + $0x238] sm:$0xff] %vm260, 0.0
          %297 = vst.msk [vmem:[#allocation2 + $0x8] sm:$0xff] %vm260, 0.0
          %298 = vst.msk [vmem:[#allocation2 + $0x10] sm:$0xff] %vm260, 0.0
          %s299 = scalar_lea.vmem [#allocation2], 544
          %300 = vst.msk [vmem:[%s299 + $0x8] sm:$0xff] %vm260, 0.0
          %301 = vst.msk [vmem:[%s299 + $0x10] sm:$0xff] %vm260, 0.0
          %v302 = vld [vmem:[%s228] sm:$0xff]
          %v303 = vld [vmem:[%s228 + $0x8] sm:$0xff]
          %v304 = vld [vmem:[%s228 + $0x10] sm:$0xff]
          %v305 = vld [vmem:[%s228 + $0x18] sm:$0xff]
          %v306 = vld [vmem:[%s228 + $0x20] sm:$0xff]
          %v307 = vld [vmem:[%s228 + $0x28] sm:$0xff]
          %v308 = vld [vmem:[%s228 + $0x30] sm:$0xff]
          %v309 = vld [vmem:[%s228 + $0x38] sm:$0xff]
          %v310 = vld [vmem:[%s228 + $0x40] sm:$0xff]
          %v311 = vld [vmem:[%s228 + $0x48] sm:$0xff]
          %v312 = vld [vmem:[%s228 + $0x50] sm:$0xff]
          %v313 = vld [vmem:[%s228 + $0x58] sm:$0xff]
          %v314 = vld [vmem:[%s228 + $0x60] sm:$0xff]
          %v315 = vld [vmem:[%s228 + $0x68] sm:$0xff]
          %v316 = vld [vmem:[%s228 + $0x70] sm:$0xff]
          %v317 = vld [vmem:[%s228 + $0x78] sm:$0xff]
          %v318 = vld [vmem:[%s228 + $0x80] sm:$0xff]
          %v319 = vld [vmem:[%s228 + $0x88] sm:$0xff]
          %v320 = vld [vmem:[%s228 + $0x90] sm:$0xff]
          %v321 = vld [vmem:[%s228 + $0x98] sm:$0xff]
          %v322 = vld [vmem:[%s228 + $0xa0] sm:$0xff]
          %v323 = vld [vmem:[%s228 + $0xa8] sm:$0xff]
          %v324 = vld [vmem:[%s228 + $0xb0] sm:$0xff]
          %v325 = vld [vmem:[%s228 + $0xb8] sm:$0xff]
          %v326 = vld [vmem:[%s228 + $0xc0] sm:$0xff]
          %v327 = vld [vmem:[%s228 + $0xc8] sm:$0xff]
          %v328 = vld [vmem:[%s228 + $0xd0] sm:$0xff]
          %v329 = vld [vmem:[%s228 + $0xd8] sm:$0xff]
          %v330 = vld [vmem:[%s228 + $0xe0] sm:$0xff]
          %v331 = vld [vmem:[%s228 + $0xe8] sm:$0xff]
          %v332 = vld [vmem:[%s228 + $0xf0] sm:$0xff]
          %v333 = vld [vmem:[%s228 + $0xf8] sm:$0xff]
          %s334 = scalar_lea.vmem [#allocation2], 32
          %335 = vst.msk [vmem:[%s334 + $0x8] sm:$0xff] %vm260, %v302
          %336 = vst.msk [vmem:[%s334 + $0x10] sm:$0xff] %vm260, %v303
          %337 = vst.msk [vmem:[%s334 + $0x28] sm:$0xff] %vm260, %v304
          %338 = vst.msk [vmem:[%s334 + $0x30] sm:$0xff] %vm260, %v305
          %339 = vst.msk [vmem:[%s334 + $0x48] sm:$0xff] %vm260, %v306
          %340 = vst.msk [vmem:[%s334 + $0x50] sm:$0xff] %vm260, %v307
          %341 = vst.msk [vmem:[%s334 + $0x68] sm:$0xff] %vm260, %v308
          %342 = vst.msk [vmem:[%s334 + $0x70] sm:$0xff] %vm260, %v309
          %343 = vst.msk [vmem:[%s334 + $0x88] sm:$0xff] %vm260, %v310
          %344 = vst.msk [vmem:[%s334 + $0x90] sm:$0xff] %vm260, %v311
          %345 = vst.msk [vmem:[%s334 + $0xa8] sm:$0xff] %vm260, %v312
          %346 = vst.msk [vmem:[%s334 + $0xb0] sm:$0xff] %vm260, %v313
          %347 = vst.msk [vmem:[%s334 + $0xc8] sm:$0xff] %vm260, %v314
          %348 = vst.msk [vmem:[%s334 + $0xd0] sm:$0xff] %vm260, %v315
          %349 = vst.msk [vmem:[%s334 + $0xe8] sm:$0xff] %vm260, %v316
          %350 = vst.msk [vmem:[%s334 + $0xf0] sm:$0xff] %vm260, %v317
          %351 = vst.msk [vmem:[%s334 + $0x108] sm:$0xff] %vm260, %v318
          %352 = vst.msk [vmem:[%s334 + $0x110] sm:$0xff] %vm260, %v319
          %353 = vst.msk [vmem:[%s334 + $0x128] sm:$0xff] %vm260, %v320
          %354 = vst.msk [vmem:[%s334 + $0x130] sm:$0xff] %vm260, %v321
          %355 = vst.msk [vmem:[%s334 + $0x148] sm:$0xff] %vm260, %v322
          %356 = vst.msk [vmem:[%s334 + $0x150] sm:$0xff] %vm260, %v323
          %357 = vst.msk [vmem:[%s334 + $0x168] sm:$0xff] %vm260, %v324
          %358 = vst.msk [vmem:[%s334 + $0x170] sm:$0xff] %vm260, %v325
          %359 = vst.msk [vmem:[%s334 + $0x188] sm:$0xff] %vm260, %v326
          %360 = vst.msk [vmem:[%s334 + $0x190] sm:$0xff] %vm260, %v327
          %361 = vst.msk [vmem:[%s334 + $0x1a8] sm:$0xff] %vm260, %v328
          %362 = vst.msk [vmem:[%s334 + $0x1b0] sm:$0xff] %vm260, %v329
          %363 = vst.msk [vmem:[%s334 + $0x1c8] sm:$0xff] %vm260, %v330
          %364 = vst.msk [vmem:[%s334 + $0x1d0] sm:$0xff] %vm260, %v331
          %365 = vst.msk [vmem:[%s334 + $0x1e8] sm:$0xff] %vm260, %v332
          %366 = vst.msk [vmem:[%s334 + $0x1f0] sm:$0xff] %vm260, %v333
        $region48: #{tpu_custom_call.1} parent=39 // pred_fallthru
          _
        %v367 = vld [vmem:[#allocation2] sm:$0xff]
        %v368 = vld [vmem:[#allocation2 + $0x8] sm:$0xff]
        %v369 = vld [vmem:[#allocation2 + $0x10] sm:$0xff]
        %v370 = vld [vmem:[#allocation2 + $0x18] sm:$0xff]
        %v371 = vld [vmem:[#allocation2 + $0x20] sm:$0xff]
        %v372 = vld [vmem:[#allocation2 + $0x28] sm:$0xff]
        %v373 = vld [vmem:[#allocation2 + $0x30] sm:$0xff]
        %v374 = vld [vmem:[#allocation2 + $0x38] sm:$0xff]
        %v375 = vld [vmem:[#allocation2 + $0x40] sm:$0xff]
        %v376 = vld [vmem:[#allocation2 + $0x48] sm:$0xff]
        %v377 = vld [vmem:[#allocation2 + $0x50] sm:$0xff]
        %v378 = vld [vmem:[#allocation2 + $0x58] sm:$0xff]
        %v379 = vld [vmem:[#allocation2 + $0x60] sm:$0xff]
        %v380 = vld [vmem:[#allocation2 + $0x68] sm:$0xff]
        %v381 = vld [vmem:[#allocation2 + $0x70] sm:$0xff]
        %v382 = vld [vmem:[#allocation2 + $0x78] sm:$0xff]
        %v383 = vld [vmem:[#allocation2 + $0x80] sm:$0xff]
        %v384 = vld [vmem:[#allocation2 + $0x88] sm:$0xff]
        %v385 = vld [vmem:[#allocation2 + $0x90] sm:$0xff]
        %v386 = vld [vmem:[#allocation2 + $0x98] sm:$0xff]
        %v387 = vld [vmem:[#allocation2 + $0xa0] sm:$0xff]
        %v388 = vld [vmem:[#allocation2 + $0xa8] sm:$0xff]
        %v389 = vld [vmem:[#allocation2 + $0xb0] sm:$0xff]
        %v390 = vld [vmem:[#allocation2 + $0xb8] sm:$0xff]
        %v391 = vld [vmem:[#allocation2 + $0xc0] sm:$0xff]
        %v392 = vld [vmem:[#allocation2 + $0xc8] sm:$0xff]
        %v393 = vld [vmem:[#allocation2 + $0xd0] sm:$0xff]
        %v394 = vld [vmem:[#allocation2 + $0xd8] sm:$0xff]
        %v395 = vld [vmem:[#allocation2 + $0xe0] sm:$0xff]
        %v396 = vld [vmem:[#allocation2 + $0xe8] sm:$0xff]
        %v397 = vld [vmem:[#allocation2 + $0xf0] sm:$0xff]
        %v398 = vld [vmem:[#allocation2 + $0xf8] sm:$0xff]
        %v399 = vld [vmem:[#allocation2 + $0x100] sm:$0xff]
        %v400 = vld [vmem:[#allocation2 + $0x108] sm:$0xff]
        %v401 = vld [vmem:[#allocation2 + $0x110] sm:$0xff]
        %v402 = vld [vmem:[#allocation2 + $0x118] sm:$0xff]
        %v403 = vld [vmem:[#allocation2 + $0x120] sm:$0xff]
        %v404 = vld [vmem:[#allocation2 + $0x128] sm:$0xff]
        %v405 = vld [vmem:[#allocation2 + $0x130] sm:$0xff]
        %v406 = vld [vmem:[#allocation2 + $0x138] sm:$0xff]
        %v407 = vld [vmem:[#allocation2 + $0x140] sm:$0xff]
        %v408 = vld [vmem:[#allocation2 + $0x148] sm:$0xff]
        %v409 = vld [vmem:[#allocation2 + $0x150] sm:$0xff]
        %v410 = vld [vmem:[#allocation2 + $0x158] sm:$0xff]
        %v411 = vld [vmem:[#allocation2 + $0x160] sm:$0xff]
        %v412 = vld [vmem:[#allocation2 + $0x168] sm:$0xff]
        %v413 = vld [vmem:[#allocation2 + $0x170] sm:$0xff]
        %v414 = vld [vmem:[#allocation2 + $0x178] sm:$0xff]
        %v415 = vld [vmem:[#allocation2 + $0x180] sm:$0xff]
        %v416 = vld [vmem:[#allocation2 + $0x188] sm:$0xff]
        %v417 = vld [vmem:[#allocation2 + $0x190] sm:$0xff]
        %v418 = vld [vmem:[#allocation2 + $0x198] sm:$0xff]
        %v419 = vld [vmem:[#allocation2 + $0x1a0] sm:$0xff]
        %v420 = vld [vmem:[#allocation2 + $0x1a8] sm:$0xff]
        %v421 = vld [vmem:[#allocation2 + $0x1b0] sm:$0xff]
        %v422 = vld [vmem:[#allocation2 + $0x1b8] sm:$0xff]
        %v423 = vld [vmem:[#allocation2 + $0x1c0] sm:$0xff]
        %v424 = vld [vmem:[#allocation2 + $0x1c8] sm:$0xff]
        %v425 = vld [vmem:[#allocation2 + $0x1d0] sm:$0xff]
        %v426 = vld [vmem:[#allocation2 + $0x1d8] sm:$0xff]
        %v427 = vld [vmem:[#allocation2 + $0x1e0] sm:$0xff]
        %v428 = vld [vmem:[#allocation2 + $0x1e8] sm:$0xff]
        %v429 = vld [vmem:[#allocation2 + $0x1f0] sm:$0xff]
        %v430 = vld [vmem:[#allocation2 + $0x1f8] sm:$0xff]
        %v431 = vld [vmem:[#allocation2 + $0x200] sm:$0xff]
        %v432 = vld [vmem:[#allocation2 + $0x208] sm:$0xff]
        %v433 = vld [vmem:[#allocation2 + $0x210] sm:$0xff]
        %v434 = vld [vmem:[#allocation2 + $0x218] sm:$0xff]
        %v435 = vld [vmem:[#allocation2 + $0x220] sm:$0xff]
        %v436 = vld [vmem:[#allocation2 + $0x228] sm:$0xff]
        %v437 = vld [vmem:[#allocation2 + $0x230] sm:$0xff]
        %v438 = vld [vmem:[#allocation2 + $0x238] sm:$0xff]
        %v439 = vmax.f32 %v367, 0.0
        %v440 = vmax.f32 %v368, 0.0
        %v441 = vmax.f32 %v369, 0.0
        %v442 = vmax.f32 %v370, 0.0
        %v443 = vmax.f32 %v371, 0.0
        %v444 = vmax.f32 %v372, 0.0
        %v445 = vmax.f32 %v373, 0.0
        %v446 = vmax.f32 %v374, 0.0
        %v447 = vmax.f32 %v375, 0.0
        %v448 = vmax.f32 %v376, 0.0
        %v449 = vmax.f32 %v377, 0.0
        %v450 = vmax.f32 %v378, 0.0
        %v451 = vmax.f32 %v379, 0.0
        %v452 = vmax.f32 %v380, 0.0
        %v453 = vmax.f32 %v381, 0.0
        %v454 = vmax.f32 %v382, 0.0
        %v455 = vmax.f32 %v383, 0.0
        %v456 = vmax.f32 %v384, 0.0
        %v457 = vmax.f32 %v385, 0.0
        %v458 = vmax.f32 %v386, 0.0
        %v459 = vmax.f32 %v387, 0.0
        %v460 = vmax.f32 %v388, 0.0
        %v461 = vmax.f32 %v389, 0.0
        %v462 = vmax.f32 %v390, 0.0
        %v463 = vmax.f32 %v391, 0.0
        %v464 = vmax.f32 %v392, 0.0
        %v465 = vmax.f32 %v393, 0.0
        %v466 = vmax.f32 %v394, 0.0
        %v467 = vmax.f32 %v395, 0.0
        %v468 = vmax.f32 %v396, 0.0
        %v469 = vmax.f32 %v397, 0.0
        %v470 = vmax.f32 %v398, 0.0
        %v471 = vmax.f32 %v399, 0.0
        %v472 = vmax.f32 %v400, 0.0
        %v473 = vmax.f32 %v401, 0.0
        %v474 = vmax.f32 %v402, 0.0
        %v475 = vmax.f32 %v403, 0.0
        %v476 = vmax.f32 %v404, 0.0
        %v477 = vmax.f32 %v405, 0.0
        %v478 = vmax.f32 %v406, 0.0
        %v479 = vmax.f32 %v407, 0.0
        %v480 = vmax.f32 %v408, 0.0
        %v481 = vmax.f32 %v409, 0.0
        %v482 = vmax.f32 %v410, 0.0
        %v483 = vmax.f32 %v411, 0.0
        %v484 = vmax.f32 %v412, 0.0
        %v485 = vmax.f32 %v413, 0.0
        %v486 = vmax.f32 %v414, 0.0
        %v487 = vmax.f32 %v415, 0.0
        %v488 = vmax.f32 %v416, 0.0
        %v489 = vmax.f32 %v417, 0.0
        %v490 = vmax.f32 %v418, 0.0
        %v491 = vmax.f32 %v419, 0.0
        %v492 = vmax.f32 %v420, 0.0
        %v493 = vmax.f32 %v421, 0.0
        %v494 = vmax.f32 %v422, 0.0
        %v495 = vmax.f32 %v423, 0.0
        %v496 = vmax.f32 %v424, 0.0
        %v497 = vmax.f32 %v425, 0.0
        %v498 = vmax.f32 %v426, 0.0
        %v499 = vmax.f32 %v427, 0.0
        %v500 = vmax.f32 %v428, 0.0
        %v501 = vmax.f32 %v429, 0.0
        %v502 = vmax.f32 %v430, 0.0
        %v503 = vmax.f32 %v431, 0.0
        %v504 = vmax.f32 %v432, 0.0
        %v505 = vmax.f32 %v433, 0.0
        %v506 = vmax.f32 %v434, 0.0
        %v507 = vmax.f32 %v435, 0.0
        %v508 = vmax.f32 %v436, 0.0
        %v509 = vmax.f32 %v437, 0.0
        %v510 = vmax.f32 %v438, 0.0
        %s511 = smul.u32 %s27, 36
        %s512 = smul.addr %s511, 4
        %s513 = scalar_lea.vmem %s1, %s512
        %v514 = vld [vmem:[%s513] sm:$0xf]
        %v515 = vld [vmem:[%s513 + $0x4] sm:$0xf]
        %v516 = vld [vmem:[%s513 + $0x8] sm:$0xf]
        %v517 = vld [vmem:[%s513 + $0xc] sm:$0xf]
        %v518 = vld [vmem:[%s513 + $0x10] sm:$0xf]
        %v519 = vld [vmem:[%s513 + $0x14] sm:$0xf]
        %v520 = vld [vmem:[%s513 + $0x18] sm:$0xf]
        %v521 = vld [vmem:[%s513 + $0x1c] sm:$0xf]
        %v522 = vld [vmem:[%s513 + $0x20] sm:$0xf]
        %v523 = vld [vmem:[%s513 + $0x24] sm:$0xf]
        %v524 = vld [vmem:[%s513 + $0x28] sm:$0xf]
        %v525 = vld [vmem:[%s513 + $0x2c] sm:$0xf]
        %v526 = vld [vmem:[%s513 + $0x30] sm:$0xf]
        %v527 = vld [vmem:[%s513 + $0x34] sm:$0xf]
        %v528 = vld [vmem:[%s513 + $0x38] sm:$0xf]
        %v529 = vld [vmem:[%s513 + $0x3c] sm:$0xf]
        %v530 = vld [vmem:[%s513 + $0x40] sm:$0xf]
        %v531 = vld [vmem:[%s513 + $0x44] sm:$0xf]
        %v532 = vld [vmem:[%s513 + $0x48] sm:$0xf]
        %v533 = vld [vmem:[%s513 + $0x4c] sm:$0xf]
        %v534 = vld [vmem:[%s513 + $0x50] sm:$0xf]
        %v535 = vld [vmem:[%s513 + $0x54] sm:$0xf]
        %v536 = vld [vmem:[%s513 + $0x58] sm:$0xf]
        %v537 = vld [vmem:[%s513 + $0x5c] sm:$0xf]
        %v538 = vld [vmem:[%s513 + $0x60] sm:$0xf]
        %v539 = vld [vmem:[%s513 + $0x64] sm:$0xf]
        %v540 = vld [vmem:[%s513 + $0x68] sm:$0xf]
        %v541 = vld [vmem:[%s513 + $0x6c] sm:$0xf]
        %v542 = vld [vmem:[%s513 + $0x70] sm:$0xf]
        %v543 = vld [vmem:[%s513 + $0x74] sm:$0xf]
        %v544 = vld [vmem:[%s513 + $0x78] sm:$0xf]
        %v545 = vld [vmem:[%s513 + $0x7c] sm:$0xf]
        %v546 = vld [vmem:[%s513 + $0x80] sm:$0xf]
        %v547 = vld [vmem:[%s513 + $0x84] sm:$0xf]
        %v548 = vld [vmem:[%s513 + $0x88] sm:$0xf]
        %v549 = vld [vmem:[%s513 + $0x8c] sm:$0xf]
        %s550 = scalar_lea.vmem %s2, %s27
        %v551 = vld [vmem:[%s550] sm:$0x1]
        %s552 = smul.u32 %s27, 2
        %s553 = smul.addr %s552, 4
        %s554 = scalar_lea.vmem %s3, %s553
        %v555 = vld [vmem:[%s554] sm:$0xf]
        %v556 = vld [vmem:[%s554 + $0x4] sm:$0xf]
        %s557 = scalar_lea.vmem %s4, %s27
        %v558 = vld [vmem:[%s557] sm:$0x1]
        %v560 = vlaneseq
        %v561 = vshrl.u32 %v560, 7
        %v562 = vsub.s32 0, %v561
        %v563 = vrot.slane %v551, %v562
        %vm613 = vcmask 1040384
        %v614 = vrot.slane %v439, 7
        %v615 = vrot.slane %v440, 7
        %v616 = vsel %vm613, %v614, %v615
        %v617 = vrot.slane %v441, 7
        %v618 = vsel %vm613, %v615, %v617
        %v619 = vrot.slane %v443, 7
        %v620 = vrot.slane %v444, 7
        %v621 = vsel %vm613, %v619, %v620
        %v622 = vrot.slane %v445, 7
        %v623 = vsel %vm613, %v620, %v622
        %v624 = vrot.slane %v447, 7
        %v625 = vrot.slane %v448, 7
        %v626 = vsel %vm613, %v624, %v625
        %v627 = vrot.slane %v449, 7
        %v628 = vsel %vm613, %v625, %v627
        %v629 = vrot.slane %v451, 7
        %v630 = vrot.slane %v452, 7
        %v631 = vsel %vm613, %v629, %v630
        %v632 = vrot.slane %v453, 7
        %v633 = vsel %vm613, %v630, %v632
        %v634 = vrot.slane %v455, 7
        %v635 = vrot.slane %v456, 7
        %v636 = vsel %vm613, %v634, %v635
        %v637 = vrot.slane %v457, 7
        %v638 = vsel %vm613, %v635, %v637
        %v639 = vrot.slane %v459, 7
        %v640 = vrot.slane %v460, 7
        %v641 = vsel %vm613, %v639, %v640
        %v642 = vrot.slane %v461, 7
        %v643 = vsel %vm613, %v640, %v642
        %v644 = vrot.slane %v463, 7
        %v645 = vrot.slane %v464, 7
        %v646 = vsel %vm613, %v644, %v645
        %v647 = vrot.slane %v465, 7
        %v648 = vsel %vm613, %v645, %v647
        %v649 = vrot.slane %v467, 7
        %v650 = vrot.slane %v468, 7
        %v651 = vsel %vm613, %v649, %v650
        %v652 = vrot.slane %v469, 7
        %v653 = vsel %vm613, %v650, %v652
        %v654 = vrot.slane %v471, 7
        %v655 = vrot.slane %v472, 7
        %v656 = vsel %vm613, %v654, %v655
        %v657 = vrot.slane %v473, 7
        %v658 = vsel %vm613, %v655, %v657
        %v659 = vrot.slane %v475, 7
        %v660 = vrot.slane %v476, 7
        %v661 = vsel %vm613, %v659, %v660
        %v662 = vrot.slane %v477, 7
        %v663 = vsel %vm613, %v660, %v662
        %v664 = vrot.slane %v479, 7
        %v665 = vrot.slane %v480, 7
        %v666 = vsel %vm613, %v664, %v665
        %v667 = vrot.slane %v481, 7
        %v668 = vsel %vm613, %v665, %v667
        %v669 = vrot.slane %v483, 7
        %v670 = vrot.slane %v484, 7
        %v671 = vsel %vm613, %v669, %v670
        %v672 = vrot.slane %v485, 7
        %v673 = vsel %vm613, %v670, %v672
        %v674 = vrot.slane %v487, 7
        %v675 = vrot.slane %v488, 7
        %v676 = vsel %vm613, %v674, %v675
        %v677 = vrot.slane %v489, 7
        %v678 = vsel %vm613, %v675, %v677
        %v679 = vrot.slane %v491, 7
        %v680 = vrot.slane %v492, 7
        %v681 = vsel %vm613, %v679, %v680
        %v682 = vrot.slane %v493, 7
        %v683 = vsel %vm613, %v680, %v682
        %v684 = vrot.slane %v495, 7
        %v685 = vrot.slane %v496, 7
        %v686 = vsel %vm613, %v684, %v685
        %v687 = vrot.slane %v497, 7
        %v688 = vsel %vm613, %v685, %v687
        %v689 = vrot.slane %v499, 7
        %v690 = vrot.slane %v500, 7
        %v691 = vsel %vm613, %v689, %v690
        %v692 = vrot.slane %v501, 7
        %v693 = vsel %vm613, %v690, %v692
        %v726 = vpack.c.bf16 %v618, %v616
        %v727 = vpack.c.bf16 %v623, %v621
        %v728 = vpack.c.bf16 %v628, %v626
        %v729 = vpack.c.bf16 %v633, %v631
        %v730 = vpack.c.bf16 %v638, %v636
        %v731 = vpack.c.bf16 %v643, %v641
        %v732 = vpack.c.bf16 %v648, %v646
        %v733 = vpack.c.bf16 %v653, %v651
        %v734 = vpack.c.bf16 %v658, %v656
        %v735 = vpack.c.bf16 %v663, %v661
        %v736 = vpack.c.bf16 %v668, %v666
        %v737 = vpack.c.bf16 %v673, %v671
        %v738 = vpack.c.bf16 %v678, %v676
        %v739 = vpack.c.bf16 %v683, %v681
        %v740 = vpack.c.bf16 %v688, %v686
        %v741 = vpack.c.bf16 %v693, %v691
        %v746 = vunpack.c.l.b16 %v514
        %v747 = vunpack.c.l.b16 %v515
        %v748 = vunpack.c.l.b16 %v516
        %v749 = vunpack.c.l.b16 %v517
        %v750 = vpack.c.b16 %v747, %v746
        %v751 = vpack.c.b16 %v749, %v748
        %vm754 = vcmask 261120
        %v756 = vsel %vm754, %v726, 0
        %v759 = vsel %vm754, %v727, 0
        %v762 = vsel %vm754, %v728, 0
        %v765 = vsel %vm754, %v729, 0
        %v768 = vsel %vm754, %v730, 0
        %v771 = vsel %vm754, %v731, 0
        %v774 = vsel %vm754, %v732, 0
        %v777 = vsel %vm754, %v733, 0
        %v780 = vsel %vm754, %v734, 0
        %v783 = vsel %vm754, %v735, 0
        %v786 = vsel %vm754, %v736, 0
        %v789 = vsel %vm754, %v737, 0
        %v792 = vsel %vm754, %v738, 0
        %v795 = vsel %vm754, %v739, 0
        %v798 = vsel %vm754, %v740, 0
        %v801 = vsel %vm754, %v741, 0
        %803 = vmatprep.subr.bf16.mxu0 0
        %804 = vmatpush1.bf16.msra.mxu0 %v750
        %805 = vmatprep.subr.bf16.mxu0 0
        %806 = vmatpush1.bf16.msra.mxu0 %v751
        %807 = vmatprep.subr.bf16.mxu0 0
        %808 = vmatpush1.bf16.msra.mxu0 0
        %809 = vmatprep.subr.bf16.mxu0 0
        %810 = vmatpush1.bf16.msra.mxu0 0
        %811 = vmatprep.subr.bf16.mxu0 0
        %812 = vmatpush1.bf16.msra.mxu0 0
        %813 = vmatprep.subr.bf16.mxu0 0
        %814 = vmatpush1.bf16.msra.mxu0 0
        %815 = vmatprep.subr.bf16.mxu0 0
        %816 = vmatpush1.bf16.msra.mxu0 0
        %817 = vmatprep.subr.bf16.mxu0 0
        %818 = vmatpush1.bf16.msra.mxu0 0
        %819 = vmatprep.subr.bf16.mxu0 0
        %820 = vmatpush1.bf16.msra.mxu0 0
        %821 = vmatprep.subr.bf16.mxu0 0
        %822 = vmatpush1.bf16.msra.mxu0 0
        %823 = vmatprep.subr.bf16.mxu0 0
        %824 = vmatpush1.bf16.msra.mxu0 0
        %825 = vmatprep.subr.bf16.mxu0 0
        %826 = vmatpush1.bf16.msra.mxu0 0
        %827 = vmatprep.subr.bf16.mxu0 0
        %828 = vmatpush1.bf16.msra.mxu0 0
        %829 = vmatprep.subr.bf16.mxu0 0
        %830 = vmatpush1.bf16.msra.mxu0 0
        %831 = vmatprep.subr.bf16.mxu0 0
        %832 = vmatpush1.bf16.msra.mxu0 0
        %833 = vmatprep.subr.bf16.mxu0 0
        %834 = vmatpush1.bf16.msra.mxu0 0
        %835 = vmatprep.mubr.bf16.mxu0 0
        %836 = vmatmul.mubr.bf16.gmra.mrb[0].mxu0 %v756
        %v837 = vpop.f32.mrb[0].mxu0
        %v838 = vadd.f32 0.0, %v837
        %v839 = vpop.f32.mrb[0].mxu0
        %v840 = vpop.f32.mrb[0].mxu0
        %v841 = vadd.f32 0.0, %v840
        %v842 = vpop.f32.mrb[0].mxu0
        %843 = vmatprep.mubr.bf16.mxu0 0
        %844 = vmatmul.mubr.bf16.gmra.mrb[0].mxu0 %v759
        %v845 = vpop.f32.mrb[0].mxu0
        %v846 = vadd.f32 0.0, %v845
        %v847 = vpop.f32.mrb[0].mxu0
        %v848 = vpop.f32.mrb[0].mxu0
        %v849 = vadd.f32 0.0, %v848
        %v850 = vpop.f32.mrb[0].mxu0
        %851 = vmatprep.mubr.bf16.mxu0 0
        %852 = vmatmul.mubr.bf16.gmra.mrb[0].mxu0 %v762
        %v853 = vpop.f32.mrb[0].mxu0
        %v854 = vadd.f32 0.0, %v853
        %v855 = vpop.f32.mrb[0].mxu0
        %v856 = vpop.f32.mrb[0].mxu0
        %v857 = vadd.f32 0.0, %v856
        %v858 = vpop.f32.mrb[0].mxu0
        %859 = vmatprep.mubr.bf16.mxu0 0
        %860 = vmatmul.mubr.bf16.gmra.mrb[0].mxu0 %v765
        %v861 = vpop.f32.mrb[0].mxu0
        %v862 = vadd.f32 0.0, %v861
        %v863 = vpop.f32.mrb[0].mxu0
        %v864 = vpop.f32.mrb[0].mxu0
        %v865 = vadd.f32 0.0, %v864
        %v866 = vpop.f32.mrb[0].mxu0
        %867 = vmatprep.mubr.bf16.mxu0 0
        %868 = vmatmul.mubr.bf16.gmra.mrb[0].mxu0 %v768
        %v869 = vpop.f32.mrb[0].mxu0
        %v870 = vadd.f32 0.0, %v869
        %v871 = vpop.f32.mrb[0].mxu0
        %v872 = vpop.f32.mrb[0].mxu0
        %v873 = vadd.f32 0.0, %v872
        %v874 = vpop.f32.mrb[0].mxu0
        %875 = vmatprep.mubr.bf16.mxu0 0
        %876 = vmatmul.mubr.bf16.gmra.mrb[0].mxu0 %v771
        %v877 = vpop.f32.mrb[0].mxu0
        %v878 = vadd.f32 0.0, %v877
        %v879 = vpop.f32.mrb[0].mxu0
        %v880 = vpop.f32.mrb[0].mxu0
        %v881 = vadd.f32 0.0, %v880
        %v882 = vpop.f32.mrb[0].mxu0
        %883 = vmatprep.mubr.bf16.mxu0 0
        %884 = vmatmul.mubr.bf16.gmra.mrb[0].mxu0 %v774
        %v885 = vpop.f32.mrb[0].mxu0
        %v886 = vadd.f32 0.0, %v885
        %v887 = vpop.f32.mrb[0].mxu0
        %v888 = vpop.f32.mrb[0].mxu0
        %v889 = vadd.f32 0.0, %v888
        %v890 = vpop.f32.mrb[0].mxu0
        %891 = vmatprep.mubr.bf16.mxu0 0
        %892 = vmatmul.mubr.bf16.gmra.mrb[0].mxu0 %v777
        %v893 = vpop.f32.mrb[0].mxu0
        %v894 = vadd.f32 0.0, %v893
        %v895 = vpop.f32.mrb[0].mxu0
        %v896 = vpop.f32.mrb[0].mxu0
        %v897 = vadd.f32 0.0, %v896
        %v898 = vpop.f32.mrb[0].mxu0
        %899 = vmatprep.mubr.bf16.mxu0 0
        %900 = vmatmul.mubr.bf16.gmra.mrb[0].mxu0 %v780
        %v901 = vpop.f32.mrb[0].mxu0
        %v902 = vadd.f32 0.0, %v901
        %v903 = vpop.f32.mrb[0].mxu0
        %v904 = vpop.f32.mrb[0].mxu0
        %v905 = vadd.f32 0.0, %v904
        %v906 = vpop.f32.mrb[0].mxu0
        %907 = vmatprep.mubr.bf16.mxu0 0
        %908 = vmatmul.mubr.bf16.gmra.mrb[0].mxu0 %v783
        %v909 = vpop.f32.mrb[0].mxu0
        %v910 = vadd.f32 0.0, %v909
        %v911 = vpop.f32.mrb[0].mxu0
        %v912 = vpop.f32.mrb[0].mxu0
        %v913 = vadd.f32 0.0, %v912
        %v914 = vpop.f32.mrb[0].mxu0
        %915 = vmatprep.mubr.bf16.mxu0 0
        %916 = vmatmul.mubr.bf16.gmra.mrb[0].mxu0 %v786
        %v917 = vpop.f32.mrb[0].mxu0
        %v918 = vadd.f32 0.0, %v917
        %v919 = vpop.f32.mrb[0].mxu0
        %v920 = vpop.f32.mrb[0].mxu0
        %v921 = vadd.f32 0.0, %v920
        %v922 = vpop.f32.mrb[0].mxu0
        %923 = vmatprep.mubr.bf16.mxu0 0
        %924 = vmatmul.mubr.bf16.gmra.mrb[0].mxu0 %v789
        %v925 = vpop.f32.mrb[0].mxu0
        %v926 = vadd.f32 0.0, %v925
        %v927 = vpop.f32.mrb[0].mxu0
        %v928 = vpop.f32.mrb[0].mxu0
        %v929 = vadd.f32 0.0, %v928
        %v930 = vpop.f32.mrb[0].mxu0
        %931 = vmatprep.mubr.bf16.mxu0 0
        %932 = vmatmul.mubr.bf16.gmra.mrb[0].mxu0 %v792
        %v933 = vpop.f32.mrb[0].mxu0
        %v934 = vadd.f32 0.0, %v933
        %v935 = vpop.f32.mrb[0].mxu0
        %v936 = vpop.f32.mrb[0].mxu0
        %v937 = vadd.f32 0.0, %v936
        %v938 = vpop.f32.mrb[0].mxu0
        %939 = vmatprep.mubr.bf16.mxu0 0
        %940 = vmatmul.mubr.bf16.gmra.mrb[0].mxu0 %v795
        %v941 = vpop.f32.mrb[0].mxu0
        %v942 = vadd.f32 0.0, %v941
        %v943 = vpop.f32.mrb[0].mxu0
        %v944 = vpop.f32.mrb[0].mxu0
        %v945 = vadd.f32 0.0, %v944
        %v946 = vpop.f32.mrb[0].mxu0
        %947 = vmatprep.mubr.bf16.mxu0 0
        %948 = vmatmul.mubr.bf16.gmra.mrb[0].mxu0 %v798
        %v949 = vpop.f32.mrb[0].mxu0
        %v950 = vadd.f32 0.0, %v949
        %v951 = vpop.f32.mrb[0].mxu0
        %v952 = vpop.f32.mrb[0].mxu0
        %v953 = vadd.f32 0.0, %v952
        %v954 = vpop.f32.mrb[0].mxu0
        %955 = vmatprep.mubr.bf16.mxu0 0
        %956 = vmatmul.mubr.bf16.gmra.mrb[0].mxu0 %v801
        %v957 = vpop.f32.mrb[0].mxu0
        %v958 = vadd.f32 0.0, %v957
        %v959 = vpop.f32.mrb[0].mxu0
        %v960 = vpop.f32.mrb[0].mxu0
        %v961 = vadd.f32 0.0, %v960
        %v962 = vpop.f32.mrb[0].mxu0
        %963 = vdwg.mxu0
        %v964 = vadd.f32 %v563, %v838
        %v965 = vadd.f32 %v563, %v841
        %v966 = vadd.f32 %v563, %v846
        %v967 = vadd.f32 %v563, %v849
        %v968 = vadd.f32 %v563, %v854
        %v969 = vadd.f32 %v563, %v857
        %v970 = vadd.f32 %v563, %v862
        %v971 = vadd.f32 %v563, %v865
        %v972 = vadd.f32 %v563, %v870
        %v973 = vadd.f32 %v563, %v873
        %v974 = vadd.f32 %v563, %v878
        %v975 = vadd.f32 %v563, %v881
        %v976 = vadd.f32 %v563, %v886
        %v977 = vadd.f32 %v563, %v889
        %v978 = vadd.f32 %v563, %v894
        %v979 = vadd.f32 %v563, %v897
        %v980 = vadd.f32 %v563, %v902
        %v981 = vadd.f32 %v563, %v905
        %v982 = vadd.f32 %v563, %v910
        %v983 = vadd.f32 %v563, %v913
        %v984 = vadd.f32 %v563, %v918
        %v985 = vadd.f32 %v563, %v921
        %v986 = vadd.f32 %v563, %v926
        %v987 = vadd.f32 %v563, %v929
        %v988 = vadd.f32 %v563, %v934
        %v989 = vadd.f32 %v563, %v937
        %v990 = vadd.f32 %v563, %v942
        %v991 = vadd.f32 %v563, %v945
        %v992 = vadd.f32 %v563, %v950
        %v993 = vadd.f32 %v563, %v953
        %v994 = vadd.f32 %v563, %v958
        %v995 = vadd.f32 %v563, %v961
        %v996 = vpack.c.bf16 %v441, %v440
        %v997 = vpack.c.bf16 %v445, %v444
        %v998 = vpack.c.bf16 %v449, %v448
        %v999 = vpack.c.bf16 %v453, %v452
        %v1000 = vpack.c.bf16 %v457, %v456
        %v1001 = vpack.c.bf16 %v461, %v460
        %v1002 = vpack.c.bf16 %v465, %v464
        %v1003 = vpack.c.bf16 %v469, %v468
        %v1004 = vpack.c.bf16 %v473, %v472
        %v1005 = vpack.c.bf16 %v477, %v476
        %v1006 = vpack.c.bf16 %v481, %v480
        %v1007 = vpack.c.bf16 %v485, %v484
        %v1008 = vpack.c.bf16 %v489, %v488
        %v1009 = vpack.c.bf16 %v493, %v492
        %v1010 = vpack.c.bf16 %v497, %v496
        %v1011 = vpack.c.bf16 %v501, %v500
        %v1016 = vunpack.c.l.b16 %v518
        %v1017 = vunpack.c.l.b16 %v519
        %v1018 = vunpack.c.l.b16 %v520
        %v1019 = vunpack.c.l.b16 %v521
        %v1020 = vpack.c.b16 %v1017, %v1016
        %v1021 = vpack.c.b16 %v1019, %v1018
        %v1025 = vsel %vm754, %v996, 0
        %v1028 = vsel %vm754, %v997, 0
        %v1031 = vsel %vm754, %v998, 0
        %v1034 = vsel %vm754, %v999, 0
        %v1037 = vsel %vm754, %v1000, 0
        %v1040 = vsel %vm754, %v1001, 0
        %v1043 = vsel %vm754, %v1002, 0
        %v1046 = vsel %vm754, %v1003, 0
        %v1049 = vsel %vm754, %v1004, 0
        %v1052 = vsel %vm754, %v1005, 0
        %v1055 = vsel %vm754, %v1006, 0
        %v1058 = vsel %vm754, %v1007, 0
        %v1061 = vsel %vm754, %v1008, 0
        %v1064 = vsel %vm754, %v1009, 0
        %v1067 = vsel %vm754, %v1010, 0
        %v1070 = vsel %vm754, %v1011, 0
        %1072 = vmatprep.subr.bf16.mxu0 0
        %1073 = vmatpush1.bf16.msra.mxu0 %v1020
        %1074 = vmatprep.subr.bf16.mxu0 0
        %1075 = vmatpush1.bf16.msra.mxu0 %v1021
        %1076 = vmatprep.subr.bf16.mxu0 0
        %1077 = vmatpush1.bf16.msra.mxu0 0
        %1078 = vmatprep.subr.bf16.mxu0 0
        %1079 = vmatpush1.bf16.msra.mxu0 0
        %1080 = vmatprep.subr.bf16.mxu0 0
        %1081 = vmatpush1.bf16.msra.mxu0 0
        %1082 = vmatprep.subr.bf16.mxu0 0
        %1083 = vmatpush1.bf16.msra.mxu0 0
        %1084 = vmatprep.subr.bf16.mxu0 0
        %1085 = vmatpush1.bf16.msra.mxu0 0
        %1086 = vmatprep.subr.bf16.mxu0 0
        %1087 = vmatpush1.bf16.msra.mxu0 0
        %1088 = vmatprep.subr.bf16.mxu0 0
        %1089 = vmatpush1.bf16.msra.mxu0 0
        %1090 = vmatprep.subr.bf16.mxu0 0
        %1091 = vmatpush1.bf16.msra.mxu0 0
        %1092 = vmatprep.subr.bf16.mxu0 0
        %1093 = vmatpush1.bf16.msra.mxu0 0
        %1094 = vmatprep.subr.bf16.mxu0 0
        %1095 = vmatpush1.bf16.msra.mxu0 0
        %1096 = vmatprep.subr.bf16.mxu0 0
        %1097 = vmatpush1.bf16.msra.mxu0 0
        %1098 = vmatprep.subr.bf16.mxu0 0
        %1099 = vmatpush1.bf16.msra.mxu0 0
        %1100 = vmatprep.subr.bf16.mxu0 0
        %1101 = vmatpush1.bf16.msra.mxu0 0
        %1102 = vmatprep.subr.bf16.mxu0 0
        %1103 = vmatpush1.bf16.msra.mxu0 0
        %1104 = vmatprep.mubr.bf16.mxu0 0
        %1105 = vmatmul.mubr.bf16.gmra.mrb[0].mxu0 %v1025
        %v1106 = vpop.f32.mrb[0].mxu0
        %v1107 = vadd.f32 0.0, %v1106
        %v1108 = vpop.f32.mrb[0].mxu0
        %v1109 = vpop.f32.mrb[0].mxu0
        %v1110 = vadd.f32 0.0, %v1109
        %v1111 = vpop.f32.mrb[0].mxu0
        %1112 = vmatprep.mubr.bf16.mxu0 0
        %1113 = vmatmul.mubr.bf16.gmra.mrb[0].mxu0 %v1028
        %v1114 = vpop.f32.mrb[0].mxu0
        %v1115 = vadd.f32 0.0, %v1114
        %v1116 = vpop.f32.mrb[0].mxu0
        %v1117 = vpop.f32.mrb[0].mxu0
        %v1118 = vadd.f32 0.0, %v1117
        %v1119 = vpop.f32.mrb[0].mxu0
        %1120 = vmatprep.mubr.bf16.mxu0 0
        %1121 = vmatmul.mubr.bf16.gmra.mrb[0].mxu0 %v1031
        %v1122 = vpop.f32.mrb[0].mxu0
        %v1123 = vadd.f32 0.0, %v1122
        %v1124 = vpop.f32.mrb[0].mxu0
        %v1125 = vpop.f32.mrb[0].mxu0
        %v1126 = vadd.f32 0.0, %v1125
        %v1127 = vpop.f32.mrb[0].mxu0
        %1128 = vmatprep.mubr.bf16.mxu0 0
        %1129 = vmatmul.mubr.bf16.gmra.mrb[0].mxu0 %v1034
        %v1130 = vpop.f32.mrb[0].mxu0
        %v1131 = vadd.f32 0.0, %v1130
        %v1132 = vpop.f32.mrb[0].mxu0
        %v1133 = vpop.f32.mrb[0].mxu0
        %v1134 = vadd.f32 0.0, %v1133
        %v1135 = vpop.f32.mrb[0].mxu0
        %1136 = vmatprep.mubr.bf16.mxu0 0
        %1137 = vmatmul.mubr.bf16.gmra.mrb[0].mxu0 %v1037
        %v1138 = vpop.f32.mrb[0].mxu0
        %v1139 = vadd.f32 0.0, %v1138
        %v1140 = vpop.f32.mrb[0].mxu0
        %v1141 = vpop.f32.mrb[0].mxu0
        %v1142 = vadd.f32 0.0, %v1141
        %v1143 = vpop.f32.mrb[0].mxu0
        %1144 = vmatprep.mubr.bf16.mxu0 0
        %1145 = vmatmul.mubr.bf16.gmra.mrb[0].mxu0 %v1040
        %v1146 = vpop.f32.mrb[0].mxu0
        %v1147 = vadd.f32 0.0, %v1146
        %v1148 = vpop.f32.mrb[0].mxu0
        %v1149 = vpop.f32.mrb[0].mxu0
        %v1150 = vadd.f32 0.0, %v1149
        %v1151 = vpop.f32.mrb[0].mxu0
        %1152 = vmatprep.mubr.bf16.mxu0 0
        %1153 = vmatmul.mubr.bf16.gmra.mrb[0].mxu0 %v1043
        %v1154 = vpop.f32.mrb[0].mxu0
        %v1155 = vadd.f32 0.0, %v1154
        %v1156 = vpop.f32.mrb[0].mxu0
        %v1157 = vpop.f32.mrb[0].mxu0
        %v1158 = vadd.f32 0.0, %v1157
        %v1159 = vpop.f32.mrb[0].mxu0
        %1160 = vmatprep.mubr.bf16.mxu0 0
        %1161 = vmatmul.mubr.bf16.gmra.mrb[0].mxu0 %v1046
        %v1162 = vpop.f32.mrb[0].mxu0
        %v1163 = vadd.f32 0.0, %v1162
        %v1164 = vpop.f32.mrb[0].mxu0
        %v1165 = vpop.f32.mrb[0].mxu0
        %v1166 = vadd.f32 0.0, %v1165
        %v1167 = vpop.f32.mrb[0].mxu0
        %1168 = vmatprep.mubr.bf16.mxu0 0
        %1169 = vmatmul.mubr.bf16.gmra.mrb[0].mxu0 %v1049
        %v1170 = vpop.f32.mrb[0].mxu0
        %v1171 = vadd.f32 0.0, %v1170
        %v1172 = vpop.f32.mrb[0].mxu0
        %v1173 = vpop.f32.mrb[0].mxu0
        %v1174 = vadd.f32 0.0, %v1173
        %v1175 = vpop.f32.mrb[0].mxu0
        %1176 = vmatprep.mubr.bf16.mxu0 0
        %1177 = vmatmul.mubr.bf16.gmra.mrb[0].mxu0 %v1052
        %v1178 = vpop.f32.mrb[0].mxu0
        %v1179 = vadd.f32 0.0, %v1178
        %v1180 = vpop.f32.mrb[0].mxu0
        %v1181 = vpop.f32.mrb[0].mxu0
        %v1182 = vadd.f32 0.0, %v1181
        %v1183 = vpop.f32.mrb[0].mxu0
        %1184 = vmatprep.mubr.bf16.mxu0 0
        %1185 = vmatmul.mubr.bf16.gmra.mrb[0].mxu0 %v1055
        %v1186 = vpop.f32.mrb[0].mxu0
        %v1187 = vadd.f32 0.0, %v1186
        %v1188 = vpop.f32.mrb[0].mxu0
        %v1189 = vpop.f32.mrb[0].mxu0
        %v1190 = vadd.f32 0.0, %v1189
        %v1191 = vpop.f32.mrb[0].mxu0
        %1192 = vmatprep.mubr.bf16.mxu0 0
        %1193 = vmatmul.mubr.bf16.gmra.mrb[0].mxu0 %v1058
        %v1194 = vpop.f32.mrb[0].mxu0
        %v1195 = vadd.f32 0.0, %v1194
        %v1196 = vpop.f32.mrb[0].mxu0
        %v1197 = vpop.f32.mrb[0].mxu0
        %v1198 = vadd.f32 0.0, %v1197
        %v1199 = vpop.f32.mrb[0].mxu0
        %1200 = vmatprep.mubr.bf16.mxu0 0
        %1201 = vmatmul.mubr.bf16.gmra.mrb[0].mxu0 %v1061
        %v1202 = vpop.f32.mrb[0].mxu0
        %v1203 = vadd.f32 0.0, %v1202
        %v1204 = vpop.f32.mrb[0].mxu0
        %v1205 = vpop.f32.mrb[0].mxu0
        %v1206 = vadd.f32 0.0, %v1205
        %v1207 = vpop.f32.mrb[0].mxu0
        %1208 = vmatprep.mubr.bf16.mxu0 0
        %1209 = vmatmul.mubr.bf16.gmra.mrb[0].mxu0 %v1064
        %v1210 = vpop.f32.mrb[0].mxu0
        %v1211 = vadd.f32 0.0, %v1210
        %v1212 = vpop.f32.mrb[0].mxu0
        %v1213 = vpop.f32.mrb[0].mxu0
        %v1214 = vadd.f32 0.0, %v1213
        %v1215 = vpop.f32.mrb[0].mxu0
        %1216 = vmatprep.mubr.bf16.mxu0 0
        %1217 = vmatmul.mubr.bf16.gmra.mrb[0].mxu0 %v1067
        %v1218 = vpop.f32.mrb[0].mxu0
        %v1219 = vadd.f32 0.0, %v1218
        %v1220 = vpop.f32.mrb[0].mxu0
        %v1221 = vpop.f32.mrb[0].mxu0
        %v1222 = vadd.f32 0.0, %v1221
        %v1223 = vpop.f32.mrb[0].mxu0
        %1224 = vmatprep.mubr.bf16.mxu0 0
        %1225 = vmatmul.mubr.bf16.gmra.mrb[0].mxu0 %v1070
        %v1226 = vpop.f32.mrb[0].mxu0
        %v1227 = vadd.f32 0.0, %v1226
        %v1228 = vpop.f32.mrb[0].mxu0
        %v1229 = vpop.f32.mrb[0].mxu0
        %v1230 = vadd.f32 0.0, %v1229
        %v1231 = vpop.f32.mrb[0].mxu0
        %1232 = vdwg.mxu0
        %v1233 = vadd.f32 %v964, %v1107
        %v1234 = vadd.f32 %v965, %v1110
        %v1235 = vadd.f32 %v966, %v1115
        %v1236 = vadd.f32 %v967, %v1118
        %v1237 = vadd.f32 %v968, %v1123
        %v1238 = vadd.f32 %v969, %v1126
        %v1239 = vadd.f32 %v970, %v1131
        %v1240 = vadd.f32 %v971, %v1134
        %v1241 = vadd.f32 %v972, %v1139
        %v1242 = vadd.f32 %v973, %v1142
        %v1243 = vadd.f32 %v974, %v1147
        %v1244 = vadd.f32 %v975, %v1150
        %v1245 = vadd.f32 %v976, %v1155
        %v1246 = vadd.f32 %v977, %v1158
        %v1247 = vadd.f32 %v978, %v1163
        %v1248 = vadd.f32 %v979, %v1166
        %v1249 = vadd.f32 %v980, %v1171
        %v1250 = vadd.f32 %v981, %v1174
        %v1251 = vadd.f32 %v982, %v1179
        %v1252 = vadd.f32 %v983, %v1182
        %v1253 = vadd.f32 %v984, %v1187
        %v1254 = vadd.f32 %v985, %v1190
        %v1255 = vadd.f32 %v986, %v1195
        %v1256 = vadd.f32 %v987, %v1198
        %v1257 = vadd.f32 %v988, %v1203
        %v1258 = vadd.f32 %v989, %v1206
        %v1259 = vadd.f32 %v990, %v1211
        %v1260 = vadd.f32 %v991, %v1214
        %v1261 = vadd.f32 %v992, %v1219
        %v1262 = vadd.f32 %v993, %v1222
        %v1263 = vadd.f32 %v994, %v1227
        %v1264 = vadd.f32 %v995, %v1230
        %vm1281 = vcmask 1046528
        %v1282 = vrot.slane %v440, 1
        %v1283 = vrot.slane %v441, 1
        %v1284 = vsel %vm1281, %v1282, %v1283
        %v1285 = vrot.slane %v442, 1
        %v1286 = vsel %vm1281, %v1283, %v1285
        %v1287 = vrot.slane %v444, 1
        %v1288 = vrot.slane %v445, 1
        %v1289 = vsel %vm1281, %v1287, %v1288
        %v1290 = vrot.slane %v446, 1
        %v1291 = vsel %vm1281, %v1288, %v1290
        %v1292 = vrot.slane %v448, 1
        %v1293 = vrot.slane %v449, 1
        %v1294 = vsel %vm1281, %v1292, %v1293
        %v1295 = vrot.slane %v450, 1
        %v1296 = vsel %vm1281, %v1293, %v1295
        %v1297 = vrot.slane %v452, 1
        %v1298 = vrot.slane %v453, 1
        %v1299 = vsel %vm1281, %v1297, %v1298
        %v1300 = vrot.slane %v454, 1
        %v1301 = vsel %vm1281, %v1298, %v1300
        %v1302 = vrot.slane %v456, 1
        %v1303 = vrot.slane %v457, 1
        %v1304 = vsel %vm1281, %v1302, %v1303
        %v1305 = vrot.slane %v458, 1
        %v1306 = vsel %vm1281, %v1303, %v1305
        %v1307 = vrot.slane %v460, 1
        %v1308 = vrot.slane %v461, 1
        %v1309 = vsel %vm1281, %v1307, %v1308
        %v1310 = vrot.slane %v462, 1
        %v1311 = vsel %vm1281, %v1308, %v1310
        %v1312 = vrot.slane %v464, 1
        %v1313 = vrot.slane %v465, 1
        %v1314 = vsel %vm1281, %v1312, %v1313
        %v1315 = vrot.slane %v466, 1
        %v1316 = vsel %vm1281, %v1313, %v1315
        %v1317 = vrot.slane %v468, 1
        %v1318 = vrot.slane %v469, 1
        %v1319 = vsel %vm1281, %v1317, %v1318
        %v1320 = vrot.slane %v470, 1
        %v1321 = vsel %vm1281, %v1318, %v1320
        %v1322 = vrot.slane %v472, 1
        %v1323 = vrot.slane %v473, 1
        %v1324 = vsel %vm1281, %v1322, %v1323
        %v1325 = vrot.slane %v474, 1
        %v1326 = vsel %vm1281, %v1323, %v1325
        %v1327 = vrot.slane %v476, 1
        %v1328 = vrot.slane %v477, 1
        %v1329 = vsel %vm1281, %v1327, %v1328
        %v1330 = vrot.slane %v478, 1
        %v1331 = vsel %vm1281, %v1328, %v1330
        %v1332 = vrot.slane %v480, 1
        %v1333 = vrot.slane %v481, 1
        %v1334 = vsel %vm1281, %v1332, %v1333
        %v1335 = vrot.slane %v482, 1
        %v1336 = vsel %vm1281, %v1333, %v1335
        %v1337 = vrot.slane %v484, 1
        %v1338 = vrot.slane %v485, 1
        %v1339 = vsel %vm1281, %v1337, %v1338
        %v1340 = vrot.slane %v486, 1
        %v1341 = vsel %vm1281, %v1338, %v1340
        %v1342 = vrot.slane %v488, 1
        %v1343 = vrot.slane %v489, 1
        %v1344 = vsel %vm1281, %v1342, %v1343
        %v1345 = vrot.slane %v490, 1
        %v1346 = vsel %vm1281, %v1343, %v1345
        %v1347 = vrot.slane %v492, 1
        %v1348 = vrot.slane %v493, 1
        %v1349 = vsel %vm1281, %v1347, %v1348
        %v1350 = vrot.slane %v494, 1
        %v1351 = vsel %vm1281, %v1348, %v1350
        %v1352 = vrot.slane %v496, 1
        %v1353 = vrot.slane %v497, 1
        %v1354 = vsel %vm1281, %v1352, %v1353
        %v1355 = vrot.slane %v498, 1
        %v1356 = vsel %vm1281, %v1353, %v1355
        %v1357 = vrot.slane %v500, 1
        %v1358 = vrot.slane %v501, 1
        %v1359 = vsel %vm1281, %v1357, %v1358
        %v1360 = vrot.slane %v502, 1
        %v1361 = vsel %vm1281, %v1358, %v1360
        %v1394 = vpack.c.bf16 %v1286, %v1284
        %v1395 = vpack.c.bf16 %v1291, %v1289
        %v1396 = vpack.c.bf16 %v1296, %v1294
        %v1397 = vpack.c.bf16 %v1301, %v1299
        %v1398 = vpack.c.bf16 %v1306, %v1304
        %v1399 = vpack.c.bf16 %v1311, %v1309
        %v1400 = vpack.c.bf16 %v1316, %v1314
        %v1401 = vpack.c.bf16 %v1321, %v1319
        %v1402 = vpack.c.bf16 %v1326, %v1324
        %v1403 = vpack.c.bf16 %v1331, %v1329
        %v1404 = vpack.c.bf16 %v1336, %v1334
        %v1405 = vpack.c.bf16 %v1341, %v1339
        %v1406 = vpack.c.bf16 %v1346, %v1344
        %v1407 = vpack.c.bf16 %v1351, %v1349
        %v1408 = vpack.c.bf16 %v1356, %v1354
        %v1409 = vpack.c.bf16 %v1361, %v1359
        %v1414 = vunpack.c.l.b16 %v522
        %v1415 = vunpack.c.l.b16 %v523
        %v1416 = vunpack.c.l.b16 %v524
        %v1417 = vunpack.c.l.b16 %v525
        %v1418 = vpack.c.b16 %v1415, %v1414
        %v1419 = vpack.c.b16 %v1417, %v1416
        %v1423 = vsel %vm754, %v1394, 0
        %v1426 = vsel %vm754, %v1395, 0
        %v1429 = vsel %vm754, %v1396, 0
        %v1432 = vsel %vm754, %v1397, 0
        %v1435 = vsel %vm754, %v1398, 0
        %v1438 = vsel %vm754, %v1399, 0
        %v1441 = vsel %vm754, %v1400, 0
        %v1444 = vsel %vm754, %v1401, 0
        %v1447 = vsel %vm754, %v1402, 0
        %v1450 = vsel %vm754, %v1403, 0
        %v1453 = vsel %vm754, %v1404, 0
        %v1456 = vsel %vm754, %v1405, 0
        %v1459 = vsel %vm754, %v1406, 0
        %v1462 = vsel %vm754, %v1407, 0
        %v1465 = vsel %vm754, %v1408, 0
        %v1468 = vsel %vm754, %v1409, 0
        %1470 = vmatprep.subr.bf16.mxu0 0
        %1471 = vmatpush1.bf16.msra.mxu0 %v1418
        %1472 = vmatprep.subr.bf16.mxu0 0
        %1473 = vmatpush1.bf16.msra.mxu0 %v1419
        %1474 = vmatprep.subr.bf16.mxu0 0
        %1475 = vmatpush1.bf16.msra.mxu0 0
        %1476 = vmatprep.subr.bf16.mxu0 0
        %1477 = vmatpush1.bf16.msra.mxu0 0
        %1478 = vmatprep.subr.bf16.mxu0 0
        %1479 = vmatpush1.bf16.msra.mxu0 0
        %1480 = vmatprep.subr.bf16.mxu0 0
        %1481 = vmatpush1.bf16.msra.mxu0 0
        %1482 = vmatprep.subr.bf16.mxu0 0
        %1483 = vmatpush1.bf16.msra.mxu0 0
        %1484 = vmatprep.subr.bf16.mxu0 0
        %1485 = vmatpush1.bf16.msra.mxu0 0
        %1486 = vmatprep.subr.bf16.mxu0 0
        %1487 = vmatpush1.bf16.msra.mxu0 0
        %1488 = vmatprep.subr.bf16.mxu0 0
        %1489 = vmatpush1.bf16.msra.mxu0 0
        %1490 = vmatprep.subr.bf16.mxu0 0
        %1491 = vmatpush1.bf16.msra.mxu0 0
        %1492 = vmatprep.subr.bf16.mxu0 0
        %1493 = vmatpush1.bf16.msra.mxu0 0
        %1494 = vmatprep.subr.bf16.mxu0 0
        %1495 = vmatpush1.bf16.msra.mxu0 0
        %1496 = vmatprep.subr.bf16.mxu0 0
        %1497 = vmatpush1.bf16.msra.mxu0 0
        %1498 = vmatprep.subr.bf16.mxu0 0
        %1499 = vmatpush1.bf16.msra.mxu0 0
        %1500 = vmatprep.subr.bf16.mxu0 0
        %1501 = vmatpush1.bf16.msra.mxu0 0
        %1502 = vmatprep.mubr.bf16.mxu0 0
        %1503 = vmatmul.mubr.bf16.gmra.mrb[0].mxu0 %v1423
        %v1504 = vpop.f32.mrb[0].mxu0
        %v1505 = vadd.f32 0.0, %v1504
        %v1506 = vpop.f32.mrb[0].mxu0
        %v1507 = vpop.f32.mrb[0].mxu0
        %v1508 = vadd.f32 0.0, %v1507
        %v1509 = vpop.f32.mrb[0].mxu0
        %1510 = vmatprep.mubr.bf16.mxu0 0
        %1511 = vmatmul.mubr.bf16.gmra.mrb[0].mxu0 %v1426
        %v1512 = vpop.f32.mrb[0].mxu0
        %v1513 = vadd.f32 0.0, %v1512
        %v1514 = vpop.f32.mrb[0].mxu0
        %v1515 = vpop.f32.mrb[0].mxu0
        %v1516 = vadd.f32 0.0, %v1515
        %v1517 = vpop.f32.mrb[0].mxu0
        %1518 = vmatprep.mubr.bf16.mxu0 0
        %1519 = vmatmul.mubr.bf16.gmra.mrb[0].mxu0 %v1429
        %v1520 = vpop.f32.mrb[0].mxu0
        %v1521 = vadd.f32 0.0, %v1520
        %v1522 = vpop.f32.mrb[0].mxu0
        %v1523 = vpop.f32.mrb[0].mxu0
        %v1524 = vadd.f32 0.0, %v1523
        %v1525 = vpop.f32.mrb[0].mxu0
        %1526 = vmatprep.mubr.bf16.mxu0 0
        %1527 = vmatmul.mubr.bf16.gmra.mrb[0].mxu0 %v1432
        %v1528 = vpop.f32.mrb[0].mxu0
        %v1529 = vadd.f32 0.0, %v1528
        %v1530 = vpop.f32.mrb[0].mxu0
        %v1531 = vpop.f32.mrb[0].mxu0
        %v1532 = vadd.f32 0.0, %v1531
        %v1533 = vpop.f32.mrb[0].mxu0
        %1534 = vmatprep.mubr.bf16.mxu0 0
        %1535 = vmatmul.mubr.bf16.gmra.mrb[0].mxu0 %v1435
        %v1536 = vpop.f32.mrb[0].mxu0
        %v1537 = vadd.f32 0.0, %v1536
        %v1538 = vpop.f32.mrb[0].mxu0
        %v1539 = vpop.f32.mrb[0].mxu0
        %v1540 = vadd.f32 0.0, %v1539
        %v1541 = vpop.f32.mrb[0].mxu0
        %1542 = vmatprep.mubr.bf16.mxu0 0
        %1543 = vmatmul.mubr.bf16.gmra.mrb[0].mxu0 %v1438
        %v1544 = vpop.f32.mrb[0].mxu0
        %v1545 = vadd.f32 0.0, %v1544
        %v1546 = vpop.f32.mrb[0].mxu0
        %v1547 = vpop.f32.mrb[0].mxu0
        %v1548 = vadd.f32 0.0, %v1547
        %v1549 = vpop.f32.mrb[0].mxu0
        %1550 = vmatprep.mubr.bf16.mxu0 0
        %1551 = vmatmul.mubr.bf16.gmra.mrb[0].mxu0 %v1441
        %v1552 = vpop.f32.mrb[0].mxu0
        %v1553 = vadd.f32 0.0, %v1552
        %v1554 = vpop.f32.mrb[0].mxu0
        %v1555 = vpop.f32.mrb[0].mxu0
        %v1556 = vadd.f32 0.0, %v1555
        %v1557 = vpop.f32.mrb[0].mxu0
        %1558 = vmatprep.mubr.bf16.mxu0 0
        %1559 = vmatmul.mubr.bf16.gmra.mrb[0].mxu0 %v1444
        %v1560 = vpop.f32.mrb[0].mxu0
        %v1561 = vadd.f32 0.0, %v1560
        %v1562 = vpop.f32.mrb[0].mxu0
        %v1563 = vpop.f32.mrb[0].mxu0
        %v1564 = vadd.f32 0.0, %v1563
        %v1565 = vpop.f32.mrb[0].mxu0
        %1566 = vmatprep.mubr.bf16.mxu0 0
        %1567 = vmatmul.mubr.bf16.gmra.mrb[0].mxu0 %v1447
        %v1568 = vpop.f32.mrb[0].mxu0
        %v1569 = vadd.f32 0.0, %v1568
        %v1570 = vpop.f32.mrb[0].mxu0
        %v1571 = vpop.f32.mrb[0].mxu0
        %v1572 = vadd.f32 0.0, %v1571
        %v1573 = vpop.f32.mrb[0].mxu0
        %1574 = vmatprep.mubr.bf16.mxu0 0
        %1575 = vmatmul.mubr.bf16.gmra.mrb[0].mxu0 %v1450
        %v1576 = vpop.f32.mrb[0].mxu0
        %v1577 = vadd.f32 0.0, %v1576
        %v1578 = vpop.f32.mrb[0].mxu0
        %v1579 = vpop.f32.mrb[0].mxu0
        %v1580 = vadd.f32 0.0, %v1579
        %v1581 = vpop.f32.mrb[0].mxu0
        %1582 = vmatprep.mubr.bf16.mxu0 0
        %1583 = vmatmul.mubr.bf16.gmra.mrb[0].mxu0 %v1453
        %v1584 = vpop.f32.mrb[0].mxu0
        %v1585 = vadd.f32 0.0, %v1584
        %v1586 = vpop.f32.mrb[0].mxu0
        %v1587 = vpop.f32.mrb[0].mxu0
        %v1588 = vadd.f32 0.0, %v1587
        %v1589 = vpop.f32.mrb[0].mxu0
        %1590 = vmatprep.mubr.bf16.mxu0 0
        %1591 = vmatmul.mubr.bf16.gmra.mrb[0].mxu0 %v1456
        %v1592 = vpop.f32.mrb[0].mxu0
        %v1593 = vadd.f32 0.0, %v1592
        %v1594 = vpop.f32.mrb[0].mxu0
        %v1595 = vpop.f32.mrb[0].mxu0
        %v1596 = vadd.f32 0.0, %v1595
        %v1597 = vpop.f32.mrb[0].mxu0
        %1598 = vmatprep.mubr.bf16.mxu0 0
        %1599 = vmatmul.mubr.bf16.gmra.mrb[0].mxu0 %v1459
        %v1600 = vpop.f32.mrb[0].mxu0
        %v1601 = vadd.f32 0.0, %v1600
        %v1602 = vpop.f32.mrb[0].mxu0
        %v1603 = vpop.f32.mrb[0].mxu0
        %v1604 = vadd.f32 0.0, %v1603
        %v1605 = vpop.f32.mrb[0].mxu0
        %1606 = vmatprep.mubr.bf16.mxu0 0
        %1607 = vmatmul.mubr.bf16.gmra.mrb[0].mxu0 %v1462
        %v1608 = vpop.f32.mrb[0].mxu0
        %v1609 = vadd.f32 0.0, %v1608
        %v1610 = vpop.f32.mrb[0].mxu0
        %v1611 = vpop.f32.mrb[0].mxu0
        %v1612 = vadd.f32 0.0, %v1611
        %v1613 = vpop.f32.mrb[0].mxu0
        %1614 = vmatprep.mubr.bf16.mxu0 0
        %1615 = vmatmul.mubr.bf16.gmra.mrb[0].mxu0 %v1465
        %v1616 = vpop.f32.mrb[0].mxu0
        %v1617 = vadd.f32 0.0, %v1616
        %v1618 = vpop.f32.mrb[0].mxu0
        %v1619 = vpop.f32.mrb[0].mxu0
        %v1620 = vadd.f32 0.0, %v1619
        %v1621 = vpop.f32.mrb[0].mxu0
        %1622 = vmatprep.mubr.bf16.mxu0 0
        %1623 = vmatmul.mubr.bf16.gmra.mrb[0].mxu0 %v1468
        %v1624 = vpop.f32.mrb[0].mxu0
        %v1625 = vadd.f32 0.0, %v1624
        %v1626 = vpop.f32.mrb[0].mxu0
        %v1627 = vpop.f32.mrb[0].mxu0
        %v1628 = vadd.f32 0.0, %v1627
        %v1629 = vpop.f32.mrb[0].mxu0
        %1630 = vdwg.mxu0
        %v1631 = vadd.f32 %v1233, %v1505
        %v1632 = vadd.f32 %v1234, %v1508
        %v1633 = vadd.f32 %v1235, %v1513
        %v1634 = vadd.f32 %v1236, %v1516
        %v1635 = vadd.f32 %v1237, %v1521
        %v1636 = vadd.f32 %v1238, %v1524
        %v1637 = vadd.f32 %v1239, %v1529
        %v1638 = vadd.f32 %v1240, %v1532
        %v1639 = vadd.f32 %v1241, %v1537
        %v1640 = vadd.f32 %v1242, %v1540
        %v1641 = vadd.f32 %v1243, %v1545
        %v1642 = vadd.f32 %v1244, %v1548
        %v1643 = vadd.f32 %v1245, %v1553
        %v1644 = vadd.f32 %v1246, %v1556
        %v1645 = vadd.f32 %v1247, %v1561
        %v1646 = vadd.f32 %v1248, %v1564
        %v1647 = vadd.f32 %v1249, %v1569
        %v1648 = vadd.f32 %v1250, %v1572
        %v1649 = vadd.f32 %v1251, %v1577
        %v1650 = vadd.f32 %v1252, %v1580
        %v1651 = vadd.f32 %v1253, %v1585
        %v1652 = vadd.f32 %v1254, %v1588
        %v1653 = vadd.f32 %v1255, %v1593
        %v1654 = vadd.f32 %v1256, %v1596
        %v1655 = vadd.f32 %v1257, %v1601
        %v1656 = vadd.f32 %v1258, %v1604
        %v1657 = vadd.f32 %v1259, %v1609
        %v1658 = vadd.f32 %v1260, %v1612
        %v1659 = vadd.f32 %v1261, %v1617
        %v1660 = vadd.f32 %v1262, %v1620
        %v1661 = vadd.f32 %v1263, %v1625
        %v1662 = vadd.f32 %v1264, %v1628
        %v1666 = vrot.slane %v503, 7
        %v1667 = vrot.slane %v504, 7
        %v1668 = vsel %vm613, %v1666, %v1667
        %v1669 = vrot.slane %v505, 7
        %v1670 = vsel %vm613, %v1667, %v1669
        %v1673 = vpack.c.bf16 %v1670, %v1668
        %v1678 = vunpack.c.l.b16 %v526
        %v1679 = vunpack.c.l.b16 %v527
        %v1680 = vunpack.c.l.b16 %v528
        %v1681 = vunpack.c.l.b16 %v529
        %v1682 = vpack.c.b16 %v1679, %v1678
        %v1683 = vpack.c.b16 %v1681, %v1680
        %v1687 = vsel %vm754, %v1673, 0
        %1689 = vmatprep.subr.bf16.mxu0 0
        %1690 = vmatpush1.bf16.msra.mxu0 %v1682
        %1691 = vmatprep.subr.bf16.mxu0 0
        %1692 = vmatpush1.bf16.msra.mxu0 %v1683
        %1693 = vmatprep.subr.bf16.mxu0 0
        %1694 = vmatpush1.bf16.msra.mxu0 0
        %1695 = vmatprep.subr.bf16.mxu0 0
        %1696 = vmatpush1.bf16.msra.mxu0 0
        %1697 = vmatprep.subr.bf16.mxu0 0
        %1698 = vmatpush1.bf16.msra.mxu0 0
        %1699 = vmatprep.subr.bf16.mxu0 0
        %1700 = vmatpush1.bf16.msra.mxu0 0
        %1701 = vmatprep.subr.bf16.mxu0 0
        %1702 = vmatpush1.bf16.msra.mxu0 0
        %1703 = vmatprep.subr.bf16.mxu0 0
        %1704 = vmatpush1.bf16.msra.mxu0 0
        %1705 = vmatprep.subr.bf16.mxu0 0
        %1706 = vmatpush1.bf16.msra.mxu0 0
        %1707 = vmatprep.subr.bf16.mxu0 0
        %1708 = vmatpush1.bf16.msra.mxu0 0
        %1709 = vmatprep.subr.bf16.mxu0 0
        %1710 = vmatpush1.bf16.msra.mxu0 0
        %1711 = vmatprep.subr.bf16.mxu0 0
        %1712 = vmatpush1.bf16.msra.mxu0 0
        %1713 = vmatprep.subr.bf16.mxu0 0
        %1714 = vmatpush1.bf16.msra.mxu0 0
        %1715 = vmatprep.subr.bf16.mxu0 0
        %1716 = vmatpush1.bf16.msra.mxu0 0
        %1717 = vmatprep.subr.bf16.mxu0 0
        %1718 = vmatpush1.bf16.msra.mxu0 0
        %1719 = vmatprep.subr.bf16.mxu0 0
        %1720 = vmatpush1.bf16.msra.mxu0 0
        %1721 = vmatprep.mubr.bf16.mxu0 0
        %1722 = vmatmul.mubr.bf16.gmra.mrb[0].mxu0 %v759
        %v1723 = vpop.f32.mrb[0].mxu0
        %v1724 = vadd.f32 0.0, %v1723
        %v1725 = vpop.f32.mrb[0].mxu0
        %v1726 = vpop.f32.mrb[0].mxu0
        %v1727 = vadd.f32 0.0, %v1726
        %v1728 = vpop.f32.mrb[0].mxu0
        %1729 = vmatprep.mubr.bf16.mxu0 0
        %1730 = vmatmul.mubr.bf16.gmra.mrb[0].mxu0 %v762
        %v1731 = vpop.f32.mrb[0].mxu0
        %v1732 = vadd.f32 0.0, %v1731
        %v1733 = vpop.f32.mrb[0].mxu0
        %v1734 = vpop.f32.mrb[0].mxu0
        %v1735 = vadd.f32 0.0, %v1734
        %v1736 = vpop.f32.mrb[0].mxu0
        %1737 = vmatprep.mubr.bf16.mxu0 0
        %1738 = vmatmul.mubr.bf16.gmra.mrb[0].mxu0 %v765
        %v1739 = vpop.f32.mrb[0].mxu0
        %v1740 = vadd.f32 0.0, %v1739
        %v1741 = vpop.f32.mrb[0].mxu0
        %v1742 = vpop.f32.mrb[0].mxu0
        %v1743 = vadd.f32 0.0, %v1742
        %v1744 = vpop.f32.mrb[0].mxu0
        %1745 = vmatprep.mubr.bf16.mxu0 0
        %1746 = vmatmul.mubr.bf16.gmra.mrb[0].mxu0 %v768
        %v1747 = vpop.f32.mrb[0].mxu0
        %v1748 = vadd.f32 0.0, %v1747
        %v1749 = vpop.f32.mrb[0].mxu0
        %v1750 = vpop.f32.mrb[0].mxu0
        %v1751 = vadd.f32 0.0, %v1750
        %v1752 = vpop.f32.mrb[0].mxu0
        %1753 = vmatprep.mubr.bf16.mxu0 0
        %1754 = vmatmul.mubr.bf16.gmra.mrb[0].mxu0 %v771
        %v1755 = vpop.f32.mrb[0].mxu0
        %v1756 = vadd.f32 0.0, %v1755
        %v1757 = vpop.f32.mrb[0].mxu0
        %v1758 = vpop.f32.mrb[0].mxu0
        %v1759 = vadd.f32 0.0, %v1758
        %v1760 = vpop.f32.mrb[0].mxu0
        %1761 = vmatprep.mubr.bf16.mxu0 0
        %1762 = vmatmul.mubr.bf16.gmra.mrb[0].mxu0 %v774
        %v1763 = vpop.f32.mrb[0].mxu0
        %v1764 = vadd.f32 0.0, %v1763
        %v1765 = vpop.f32.mrb[0].mxu0
        %v1766 = vpop.f32.mrb[0].mxu0
        %v1767 = vadd.f32 0.0, %v1766
        %v1768 = vpop.f32.mrb[0].mxu0
        %1769 = vmatprep.mubr.bf16.mxu0 0
        %1770 = vmatmul.mubr.bf16.gmra.mrb[0].mxu0 %v777
        %v1771 = vpop.f32.mrb[0].mxu0
        %v1772 = vadd.f32 0.0, %v1771
        %v1773 = vpop.f32.mrb[0].mxu0
        %v1774 = vpop.f32.mrb[0].mxu0
        %v1775 = vadd.f32 0.0, %v1774
        %v1776 = vpop.f32.mrb[0].mxu0
        %1777 = vmatprep.mubr.bf16.mxu0 0
        %1778 = vmatmul.mubr.bf16.gmra.mrb[0].mxu0 %v780
        %v1779 = vpop.f32.mrb[0].mxu0
        %v1780 = vadd.f32 0.0, %v1779
        %v1781 = vpop.f32.mrb[0].mxu0
        %v1782 = vpop.f32.mrb[0].mxu0
        %v1783 = vadd.f32 0.0, %v1782
        %v1784 = vpop.f32.mrb[0].mxu0
        %1785 = vmatprep.mubr.bf16.mxu0 0
        %1786 = vmatmul.mubr.bf16.gmra.mrb[0].mxu0 %v783
        %v1787 = vpop.f32.mrb[0].mxu0
        %v1788 = vadd.f32 0.0, %v1787
        %v1789 = vpop.f32.mrb[0].mxu0
        %v1790 = vpop.f32.mrb[0].mxu0
        %v1791 = vadd.f32 0.0, %v1790
        %v1792 = vpop.f32.mrb[0].mxu0
        %1793 = vmatprep.mubr.bf16.mxu0 0
        %1794 = vmatmul.mubr.bf16.gmra.mrb[0].mxu0 %v786
        %v1795 = vpop.f32.mrb[0].mxu0
        %v1796 = vadd.f32 0.0, %v1795
        %v1797 = vpop.f32.mrb[0].mxu0
        %v1798 = vpop.f32.mrb[0].mxu0
        %v1799 = vadd.f32 0.0, %v1798
        %v1800 = vpop.f32.mrb[0].mxu0
        %1801 = vmatprep.mubr.bf16.mxu0 0
        %1802 = vmatmul.mubr.bf16.gmra.mrb[0].mxu0 %v789
        %v1803 = vpop.f32.mrb[0].mxu0
        %v1804 = vadd.f32 0.0, %v1803
        %v1805 = vpop.f32.mrb[0].mxu0
        %v1806 = vpop.f32.mrb[0].mxu0
        %v1807 = vadd.f32 0.0, %v1806
        %v1808 = vpop.f32.mrb[0].mxu0
        %1809 = vmatprep.mubr.bf16.mxu0 0
        %1810 = vmatmul.mubr.bf16.gmra.mrb[0].mxu0 %v792
        %v1811 = vpop.f32.mrb[0].mxu0
        %v1812 = vadd.f32 0.0, %v1811
        %v1813 = vpop.f32.mrb[0].mxu0
        %v1814 = vpop.f32.mrb[0].mxu0
        %v1815 = vadd.f32 0.0, %v1814
        %v1816 = vpop.f32.mrb[0].mxu0
        %1817 = vmatprep.mubr.bf16.mxu0 0
        %1818 = vmatmul.mubr.bf16.gmra.mrb[0].mxu0 %v795
        %v1819 = vpop.f32.mrb[0].mxu0
        %v1820 = vadd.f32 0.0, %v1819
        %v1821 = vpop.f32.mrb[0].mxu0
        %v1822 = vpop.f32.mrb[0].mxu0
        %v1823 = vadd.f32 0.0, %v1822
        %v1824 = vpop.f32.mrb[0].mxu0
        %1825 = vmatprep.mubr.bf16.mxu0 0
        %1826 = vmatmul.mubr.bf16.gmra.mrb[0].mxu0 %v798
        %v1827 = vpop.f32.mrb[0].mxu0
        %v1828 = vadd.f32 0.0, %v1827
        %v1829 = vpop.f32.mrb[0].mxu0
        %v1830 = vpop.f32.mrb[0].mxu0
        %v1831 = vadd.f32 0.0, %v1830
        %v1832 = vpop.f32.mrb[0].mxu0
        %1833 = vmatprep.mubr.bf16.mxu0 0
        %1834 = vmatmul.mubr.bf16.gmra.mrb[0].mxu0 %v801
        %v1835 = vpop.f32.mrb[0].mxu0
        %v1836 = vadd.f32 0.0, %v1835
        %v1837 = vpop.f32.mrb[0].mxu0
        %v1838 = vpop.f32.mrb[0].mxu0
        %v1839 = vadd.f32 0.0, %v1838
        %v1840 = vpop.f32.mrb[0].mxu0
        %1841 = vmatprep.mubr.bf16.mxu0 0
        %1842 = vmatmul.mubr.bf16.gmra.mrb[0].mxu0 %v1687
        %v1843 = vpop.f32.mrb[0].mxu0
        %v1844 = vadd.f32 0.0, %v1843
        %v1845 = vpop.f32.mrb[0].mxu0
        %v1846 = vpop.f32.mrb[0].mxu0
        %v1847 = vadd.f32 0.0, %v1846
        %v1848 = vpop.f32.mrb[0].mxu0
        %1849 = vdwg.mxu0
        %v1850 = vadd.f32 %v1631, %v1724
        %v1851 = vadd.f32 %v1632, %v1727
        %v1852 = vadd.f32 %v1633, %v1732
        %v1853 = vadd.f32 %v1634, %v1735
        %v1854 = vadd.f32 %v1635, %v1740
        %v1855 = vadd.f32 %v1636, %v1743
        %v1856 = vadd.f32 %v1637, %v1748
        %v1857 = vadd.f32 %v1638, %v1751
        %v1858 = vadd.f32 %v1639, %v1756
        %v1859 = vadd.f32 %v1640, %v1759
        %v1860 = vadd.f32 %v1641, %v1764
        %v1861 = vadd.f32 %v1642, %v1767
        %v1862 = vadd.f32 %v1643, %v1772
        %v1863 = vadd.f32 %v1644, %v1775
        %v1864 = vadd.f32 %v1645, %v1780
        %v1865 = vadd.f32 %v1646, %v1783
        %v1866 = vadd.f32 %v1647, %v1788
        %v1867 = vadd.f32 %v1648, %v1791
        %v1868 = vadd.f32 %v1649, %v1796
        %v1869 = vadd.f32 %v1650, %v1799
        %v1870 = vadd.f32 %v1651, %v1804
        %v1871 = vadd.f32 %v1652, %v1807
        %v1872 = vadd.f32 %v1653, %v1812
        %v1873 = vadd.f32 %v1654, %v1815
        %v1874 = vadd.f32 %v1655, %v1820
        %v1875 = vadd.f32 %v1656, %v1823
        %v1876 = vadd.f32 %v1657, %v1828
        %v1877 = vadd.f32 %v1658, %v1831
        %v1878 = vadd.f32 %v1659, %v1836
        %v1879 = vadd.f32 %v1660, %v1839
        %v1880 = vadd.f32 %v1661, %v1844
        %v1881 = vadd.f32 %v1662, %v1847
        %v1882 = vpack.c.bf16 %v505, %v504
        %v1887 = vunpack.c.l.b16 %v530
        %v1888 = vunpack.c.l.b16 %v531
        %v1889 = vunpack.c.l.b16 %v532
        %v1890 = vunpack.c.l.b16 %v533
        %v1891 = vpack.c.b16 %v1888, %v1887
        %v1892 = vpack.c.b16 %v1890, %v1889
        %v1896 = vsel %vm754, %v1882, 0
        %1898 = vmatprep.subr.bf16.mxu0 0
        %1899 = vmatpush1.bf16.msra.mxu0 %v1891
        %1900 = vmatprep.subr.bf16.mxu0 0
        %1901 = vmatpush1.bf16.msra.mxu0 %v1892
        %1902 = vmatprep.subr.bf16.mxu0 0
        %1903 = vmatpush1.bf16.msra.mxu0 0
        %1904 = vmatprep.subr.bf16.mxu0 0
        %1905 = vmatpush1.bf16.msra.mxu0 0
        %1906 = vmatprep.subr.bf16.mxu0 0
        %1907 = vmatpush1.bf16.msra.mxu0 0
        %1908 = vmatprep.subr.bf16.mxu0 0
        %1909 = vmatpush1.bf16.msra.mxu0 0
        %1910 = vmatprep.subr.bf16.mxu0 0
        %1911 = vmatpush1.bf16.msra.mxu0 0
        %1912 = vmatprep.subr.bf16.mxu0 0
        %1913 = vmatpush1.bf16.msra.mxu0 0
        %1914 = vmatprep.subr.bf16.mxu0 0
        %1915 = vmatpush1.bf16.msra.mxu0 0
        %1916 = vmatprep.subr.bf16.mxu0 0
        %1917 = vmatpush1.bf16.msra.mxu0 0
        %1918 = vmatprep.subr.bf16.mxu0 0
        %1919 = vmatpush1.bf16.msra.mxu0 0
        %1920 = vmatprep.subr.bf16.mxu0 0
        %1921 = vmatpush1.bf16.msra.mxu0 0
        %1922 = vmatprep.subr.bf16.mxu0 0
        %1923 = vmatpush1.bf16.msra.mxu0 0
        %1924 = vmatprep.subr.bf16.mxu0 0
        %1925 = vmatpush1.bf16.msra.mxu0 0
        %1926 = vmatprep.subr.bf16.mxu0 0
        %1927 = vmatpush1.bf16.msra.mxu0 0
        %1928 = vmatprep.subr.bf16.mxu0 0
        %1929 = vmatpush1.bf16.msra.mxu0 0
        %1930 = vmatprep.mubr.bf16.mxu0 0
        %1931 = vmatmul.mubr.bf16.gmra.mrb[0].mxu0 %v1028
        %v1932 = vpop.f32.mrb[0].mxu0
        %v1933 = vadd.f32 0.0, %v1932
        %v1934 = vpop.f32.mrb[0].mxu0
        %v1935 = vpop.f32.mrb[0].mxu0
        %v1936 = vadd.f32 0.0, %v1935
        %v1937 = vpop.f32.mrb[0].mxu0
        %1938 = vmatprep.mubr.bf16.mxu0 0
        %1939 = vmatmul.mubr.bf16.gmra.mrb[0].mxu0 %v1031
        %v1940 = vpop.f32.mrb[0].mxu0
        %v1941 = vadd.f32 0.0, %v1940
        %v1942 = vpop.f32.mrb[0].mxu0
        %v1943 = vpop.f32.mrb[0].mxu0
        %v1944 = vadd.f32 0.0, %v1943
        %v1945 = vpop.f32.mrb[0].mxu0
        %1946 = vmatprep.mubr.bf16.mxu0 0
        %1947 = vmatmul.mubr.bf16.gmra.mrb[0].mxu0 %v1034
        %v1948 = vpop.f32.mrb[0].mxu0
        %v1949 = vadd.f32 0.0, %v1948
        %v1950 = vpop.f32.mrb[0].mxu0
        %v1951 = vpop.f32.mrb[0].mxu0
        %v1952 = vadd.f32 0.0, %v1951
        %v1953 = vpop.f32.mrb[0].mxu0
        %1954 = vmatprep.mubr.bf16.mxu0 0
        %1955 = vmatmul.mubr.bf16.gmra.mrb[0].mxu0 %v1037
        %v1956 = vpop.f32.mrb[0].mxu0
        %v1957 = vadd.f32 0.0, %v1956
        %v1958 = vpop.f32.mrb[0].mxu0
        %v1959 = vpop.f32.mrb[0].mxu0
        %v1960 = vadd.f32 0.0, %v1959
        %v1961 = vpop.f32.mrb[0].mxu0
        %1962 = vmatprep.mubr.bf16.mxu0 0
        %1963 = vmatmul.mubr.bf16.gmra.mrb[0].mxu0 %v1040
        %v1964 = vpop.f32.mrb[0].mxu0
        %v1965 = vadd.f32 0.0, %v1964
        %v1966 = vpop.f32.mrb[0].mxu0
        %v1967 = vpop.f32.mrb[0].mxu0
        %v1968 = vadd.f32 0.0, %v1967
        %v1969 = vpop.f32.mrb[0].mxu0
        %1970 = vmatprep.mubr.bf16.mxu0 0
        %1971 = vmatmul.mubr.bf16.gmra.mrb[0].mxu0 %v1043
        %v1972 = vpop.f32.mrb[0].mxu0
        %v1973 = vadd.f32 0.0, %v1972
        %v1974 = vpop.f32.mrb[0].mxu0
        %v1975 = vpop.f32.mrb[0].mxu0
        %v1976 = vadd.f32 0.0, %v1975
        %v1977 = vpop.f32.mrb[0].mxu0
        %1978 = vmatprep.mubr.bf16.mxu0 0
        %1979 = vmatmul.mubr.bf16.gmra.mrb[0].mxu0 %v1046
        %v1980 = vpop.f32.mrb[0].mxu0
        %v1981 = vadd.f32 0.0, %v1980
        %v1982 = vpop.f32.mrb[0].mxu0
        %v1983 = vpop.f32.mrb[0].mxu0
        %v1984 = vadd.f32 0.0, %v1983
        %v1985 = vpop.f32.mrb[0].mxu0
        %1986 = vmatprep.mubr.bf16.mxu0 0
        %1987 = vmatmul.mubr.bf16.gmra.mrb[0].mxu0 %v1049
        %v1988 = vpop.f32.mrb[0].mxu0
        %v1989 = vadd.f32 0.0, %v1988
        %v1990 = vpop.f32.mrb[0].mxu0
        %v1991 = vpop.f32.mrb[0].mxu0
        %v1992 = vadd.f32 0.0, %v1991
        %v1993 = vpop.f32.mrb[0].mxu0
        %1994 = vmatprep.mubr.bf16.mxu0 0
        %1995 = vmatmul.mubr.bf16.gmra.mrb[0].mxu0 %v1052
        %v1996 = vpop.f32.mrb[0].mxu0
        %v1997 = vadd.f32 0.0, %v1996
        %v1998 = vpop.f32.mrb[0].mxu0
        %v1999 = vpop.f32.mrb[0].mxu0
        %v2000 = vadd.f32 0.0, %v1999
        %v2001 = vpop.f32.mrb[0].mxu0
        %2002 = vmatprep.mubr.bf16.mxu0 0
        %2003 = vmatmul.mubr.bf16.gmra.mrb[0].mxu0 %v1055
        %v2004 = vpop.f32.mrb[0].mxu0
        %v2005 = vadd.f32 0.0, %v2004
        %v2006 = vpop.f32.mrb[0].mxu0
        %v2007 = vpop.f32.mrb[0].mxu0
        %v2008 = vadd.f32 0.0, %v2007
        %v2009 = vpop.f32.mrb[0].mxu0
        %2010 = vmatprep.mubr.bf16.mxu0 0
        %2011 = vmatmul.mubr.bf16.gmra.mrb[0].mxu0 %v1058
        %v2012 = vpop.f32.mrb[0].mxu0
        %v2013 = vadd.f32 0.0, %v2012
        %v2014 = vpop.f32.mrb[0].mxu0
        %v2015 = vpop.f32.mrb[0].mxu0
        %v2016 = vadd.f32 0.0, %v2015
        %v2017 = vpop.f32.mrb[0].mxu0
        %2018 = vmatprep.mubr.bf16.mxu0 0
        %2019 = vmatmul.mubr.bf16.gmra.mrb[0].mxu0 %v1061
        %v2020 = vpop.f32.mrb[0].mxu0
        %v2021 = vadd.f32 0.0, %v2020
        %v2022 = vpop.f32.mrb[0].mxu0
        %v2023 = vpop.f32.mrb[0].mxu0
        %v2024 = vadd.f32 0.0, %v2023
        %v2025 = vpop.f32.mrb[0].mxu0
        %2026 = vmatprep.mubr.bf16.mxu0 0
        %2027 = vmatmul.mubr.bf16.gmra.mrb[0].mxu0 %v1064
        %v2028 = vpop.f32.mrb[0].mxu0
        %v2029 = vadd.f32 0.0, %v2028
        %v2030 = vpop.f32.mrb[0].mxu0
        %v2031 = vpop.f32.mrb[0].mxu0
        %v2032 = vadd.f32 0.0, %v2031
        %v2033 = vpop.f32.mrb[0].mxu0
        %2034 = vmatprep.mubr.bf16.mxu0 0
        %2035 = vmatmul.mubr.bf16.gmra.mrb[0].mxu0 %v1067
        %v2036 = vpop.f32.mrb[0].mxu0
        %v2037 = vadd.f32 0.0, %v2036
        %v2038 = vpop.f32.mrb[0].mxu0
        %v2039 = vpop.f32.mrb[0].mxu0
        %v2040 = vadd.f32 0.0, %v2039
        %v2041 = vpop.f32.mrb[0].mxu0
        %2042 = vmatprep.mubr.bf16.mxu0 0
        %2043 = vmatmul.mubr.bf16.gmra.mrb[0].mxu0 %v1070
        %v2044 = vpop.f32.mrb[0].mxu0
        %v2045 = vadd.f32 0.0, %v2044
        %v2046 = vpop.f32.mrb[0].mxu0
        %v2047 = vpop.f32.mrb[0].mxu0
        %v2048 = vadd.f32 0.0, %v2047
        %v2049 = vpop.f32.mrb[0].mxu0
        %2050 = vmatprep.mubr.bf16.mxu0 0
        %2051 = vmatmul.mubr.bf16.gmra.mrb[0].mxu0 %v1896
        %v2052 = vpop.f32.mrb[0].mxu0
        %v2053 = vadd.f32 0.0, %v2052
        %v2054 = vpop.f32.mrb[0].mxu0
        %v2055 = vpop.f32.mrb[0].mxu0
        %v2056 = vadd.f32 0.0, %v2055
        %v2057 = vpop.f32.mrb[0].mxu0
        %2058 = vdwg.mxu0
        %v2059 = vadd.f32 %v1850, %v1933
        %v2060 = vadd.f32 %v1851, %v1936
        %v2061 = vadd.f32 %v1852, %v1941
        %v2062 = vadd.f32 %v1853, %v1944
        %v2063 = vadd.f32 %v1854, %v1949
        %v2064 = vadd.f32 %v1855, %v1952
        %v2065 = vadd.f32 %v1856, %v1957
        %v2066 = vadd.f32 %v1857, %v1960
        %v2067 = vadd.f32 %v1858, %v1965
        %v2068 = vadd.f32 %v1859, %v1968
        %v2069 = vadd.f32 %v1860, %v1973
        %v2070 = vadd.f32 %v1861, %v1976
        %v2071 = vadd.f32 %v1862, %v1981
        %v2072 = vadd.f32 %v1863, %v1984
        %v2073 = vadd.f32 %v1864, %v1989
        %v2074 = vadd.f32 %v1865, %v1992
        %v2075 = vadd.f32 %v1866, %v1997
        %v2076 = vadd.f32 %v1867, %v2000
        %v2077 = vadd.f32 %v1868, %v2005
        %v2078 = vadd.f32 %v1869, %v2008
        %v2079 = vadd.f32 %v1870, %v2013
        %v2080 = vadd.f32 %v1871, %v2016
        %v2081 = vadd.f32 %v1872, %v2021
        %v2082 = vadd.f32 %v1873, %v2024
        %v2083 = vadd.f32 %v1874, %v2029
        %v2084 = vadd.f32 %v1875, %v2032
        %v2085 = vadd.f32 %v1876, %v2037
        %v2086 = vadd.f32 %v1877, %v2040
        %v2087 = vadd.f32 %v1878, %v2045
        %v2088 = vadd.f32 %v1879, %v2048
        %v2089 = vadd.f32 %v1880, %v2053
        %v2090 = vadd.f32 %v1881, %v2056
        %v2092 = vrot.slane %v504, 1
        %v2093 = vrot.slane %v505, 1
        %v2094 = vsel %vm1281, %v2092, %v2093
        %v2095 = vrot.slane %v506, 1
        %v2096 = vsel %vm1281, %v2093, %v2095
        %v2099 = vpack.c.bf16 %v2096, %v2094
        %v2104 = vunpack.c.l.b16 %v534
        %v2105 = vunpack.c.l.b16 %v535
        %v2106 = vunpack.c.l.b16 %v536
        %v2107 = vunpack.c.l.b16 %v537
        %v2108 = vpack.c.b16 %v2105, %v2104
        %v2109 = vpack.c.b16 %v2107, %v2106
        %v2113 = vsel %vm754, %v2099, 0
        %2115 = vmatprep.subr.bf16.mxu0 0
        %2116 = vmatpush1.bf16.msra.mxu0 %v2108
        %2117 = vmatprep.subr.bf16.mxu0 0
        %2118 = vmatpush1.bf16.msra.mxu0 %v2109
        %2119 = vmatprep.subr.bf16.mxu0 0
        %2120 = vmatpush1.bf16.msra.mxu0 0
        %2121 = vmatprep.subr.bf16.mxu0 0
        %2122 = vmatpush1.bf16.msra.mxu0 0
        %2123 = vmatprep.subr.bf16.mxu0 0
        %2124 = vmatpush1.bf16.msra.mxu0 0
        %2125 = vmatprep.subr.bf16.mxu0 0
        %2126 = vmatpush1.bf16.msra.mxu0 0
        %2127 = vmatprep.subr.bf16.mxu0 0
        %2128 = vmatpush1.bf16.msra.mxu0 0
        %2129 = vmatprep.subr.bf16.mxu0 0
        %2130 = vmatpush1.bf16.msra.mxu0 0
        %2131 = vmatprep.subr.bf16.mxu0 0
        %2132 = vmatpush1.bf16.msra.mxu0 0
        %2133 = vmatprep.subr.bf16.mxu0 0
        %2134 = vmatpush1.bf16.msra.mxu0 0
        %2135 = vmatprep.subr.bf16.mxu0 0
        %2136 = vmatpush1.bf16.msra.mxu0 0
        %2137 = vmatprep.subr.bf16.mxu0 0
        %2138 = vmatpush1.bf16.msra.mxu0 0
        %2139 = vmatprep.subr.bf16.mxu0 0
        %2140 = vmatpush1.bf16.msra.mxu0 0
        %2141 = vmatprep.subr.bf16.mxu0 0
        %2142 = vmatpush1.bf16.msra.mxu0 0
        %2143 = vmatprep.subr.bf16.mxu0 0
        %2144 = vmatpush1.bf16.msra.mxu0 0
        %2145 = vmatprep.subr.bf16.mxu0 0
        %2146 = vmatpush1.bf16.msra.mxu0 0
        %2147 = vmatprep.mubr.bf16.mxu0 0
        %2148 = vmatmul.mubr.bf16.gmra.mrb[0].mxu0 %v1426
        %v2149 = vpop.f32.mrb[0].mxu0
        %v2150 = vadd.f32 0.0, %v2149
        %v2151 = vpop.f32.mrb[0].mxu0
        %v2152 = vpop.f32.mrb[0].mxu0
        %v2153 = vadd.f32 0.0, %v2152
        %v2154 = vpop.f32.mrb[0].mxu0
        %2155 = vmatprep.mubr.bf16.mxu0 0
        %2156 = vmatmul.mubr.bf16.gmra.mrb[0].mxu0 %v1429
        %v2157 = vpop.f32.mrb[0].mxu0
        %v2158 = vadd.f32 0.0, %v2157
        %v2159 = vpop.f32.mrb[0].mxu0
        %v2160 = vpop.f32.mrb[0].mxu0
        %v2161 = vadd.f32 0.0, %v2160
        %v2162 = vpop.f32.mrb[0].mxu0
        %2163 = vmatprep.mubr.bf16.mxu0 0
        %2164 = vmatmul.mubr.bf16.gmra.mrb[0].mxu0 %v1432
        %v2165 = vpop.f32.mrb[0].mxu0
        %v2166 = vadd.f32 0.0, %v2165
        %v2167 = vpop.f32.mrb[0].mxu0
        %v2168 = vpop.f32.mrb[0].mxu0
        %v2169 = vadd.f32 0.0, %v2168
        %v2170 = vpop.f32.mrb[0].mxu0
        %2171 = vmatprep.mubr.bf16.mxu0 0
        %2172 = vmatmul.mubr.bf16.gmra.mrb[0].mxu0 %v1435
        %v2173 = vpop.f32.mrb[0].mxu0
        %v2174 = vadd.f32 0.0, %v2173
        %v2175 = vpop.f32.mrb[0].mxu0
        %v2176 = vpop.f32.mrb[0].mxu0
        %v2177 = vadd.f32 0.0, %v2176
        %v2178 = vpop.f32.mrb[0].mxu0
        %2179 = vmatprep.mubr.bf16.mxu0 0
        %2180 = vmatmul.mubr.bf16.gmra.mrb[0].mxu0 %v1438
        %v2181 = vpop.f32.mrb[0].mxu0
        %v2182 = vadd.f32 0.0, %v2181
        %v2183 = vpop.f32.mrb[0].mxu0
        %v2184 = vpop.f32.mrb[0].mxu0
        %v2185 = vadd.f32 0.0, %v2184
        %v2186 = vpop.f32.mrb[0].mxu0
        %2187 = vmatprep.mubr.bf16.mxu0 0
        %2188 = vmatmul.mubr.bf16.gmra.mrb[0].mxu0 %v1441
        %v2189 = vpop.f32.mrb[0].mxu0
        %v2190 = vadd.f32 0.0, %v2189
        %v2191 = vpop.f32.mrb[0].mxu0
        %v2192 = vpop.f32.mrb[0].mxu0
        %v2193 = vadd.f32 0.0, %v2192
        %v2194 = vpop.f32.mrb[0].mxu0
        %2195 = vmatprep.mubr.bf16.mxu0 0
        %2196 = vmatmul.mubr.bf16.gmra.mrb[0].mxu0 %v1444
        %v2197 = vpop.f32.mrb[0].mxu0
        %v2198 = vadd.f32 0.0, %v2197
        %v2199 = vpop.f32.mrb[0].mxu0
        %v2200 = vpop.f32.mrb[0].mxu0
        %v2201 = vadd.f32 0.0, %v2200
        %v2202 = vpop.f32.mrb[0].mxu0
        %2203 = vmatprep.mubr.bf16.mxu0 0
        %2204 = vmatmul.mubr.bf16.gmra.mrb[0].mxu0 %v1447
        %v2205 = vpop.f32.mrb[0].mxu0
        %v2206 = vadd.f32 0.0, %v2205
        %v2207 = vpop.f32.mrb[0].mxu0
        %v2208 = vpop.f32.mrb[0].mxu0
        %v2209 = vadd.f32 0.0, %v2208
        %v2210 = vpop.f32.mrb[0].mxu0
        %2211 = vmatprep.mubr.bf16.mxu0 0
        %2212 = vmatmul.mubr.bf16.gmra.mrb[0].mxu0 %v1450
        %v2213 = vpop.f32.mrb[0].mxu0
        %v2214 = vadd.f32 0.0, %v2213
        %v2215 = vpop.f32.mrb[0].mxu0
        %v2216 = vpop.f32.mrb[0].mxu0
        %v2217 = vadd.f32 0.0, %v2216
        %v2218 = vpop.f32.mrb[0].mxu0
        %2219 = vmatprep.mubr.bf16.mxu0 0
        %2220 = vmatmul.mubr.bf16.gmra.mrb[0].mxu0 %v1453
        %v2221 = vpop.f32.mrb[0].mxu0
        %v2222 = vadd.f32 0.0, %v2221
        %v2223 = vpop.f32.mrb[0].mxu0
        %v2224 = vpop.f32.mrb[0].mxu0
        %v2225 = vadd.f32 0.0, %v2224
        %v2226 = vpop.f32.mrb[0].mxu0
        %2227 = vmatprep.mubr.bf16.mxu0 0
        %2228 = vmatmul.mubr.bf16.gmra.mrb[0].mxu0 %v1456
        %v2229 = vpop.f32.mrb[0].mxu0
        %v2230 = vadd.f32 0.0, %v2229
        %v2231 = vpop.f32.mrb[0].mxu0
        %v2232 = vpop.f32.mrb[0].mxu0
        %v2233 = vadd.f32 0.0, %v2232
        %v2234 = vpop.f32.mrb[0].mxu0
        %2235 = vmatprep.mubr.bf16.mxu0 0
        %2236 = vmatmul.mubr.bf16.gmra.mrb[0].mxu0 %v1459
        %v2237 = vpop.f32.mrb[0].mxu0
        %v2238 = vadd.f32 0.0, %v2237
        %v2239 = vpop.f32.mrb[0].mxu0
        %v2240 = vpop.f32.mrb[0].mxu0
        %v2241 = vadd.f32 0.0, %v2240
        %v2242 = vpop.f32.mrb[0].mxu0
        %2243 = vmatprep.mubr.bf16.mxu0 0
        %2244 = vmatmul.mubr.bf16.gmra.mrb[0].mxu0 %v1462
        %v2245 = vpop.f32.mrb[0].mxu0
        %v2246 = vadd.f32 0.0, %v2245
        %v2247 = vpop.f32.mrb[0].mxu0
        %v2248 = vpop.f32.mrb[0].mxu0
        %v2249 = vadd.f32 0.0, %v2248
        %v2250 = vpop.f32.mrb[0].mxu0
        %2251 = vmatprep.mubr.bf16.mxu0 0
        %2252 = vmatmul.mubr.bf16.gmra.mrb[0].mxu0 %v1465
        %v2253 = vpop.f32.mrb[0].mxu0
        %v2254 = vadd.f32 0.0, %v2253
        %v2255 = vpop.f32.mrb[0].mxu0
        %v2256 = vpop.f32.mrb[0].mxu0
        %v2257 = vadd.f32 0.0, %v2256
        %v2258 = vpop.f32.mrb[0].mxu0
        %2259 = vmatprep.mubr.bf16.mxu0 0
        %2260 = vmatmul.mubr.bf16.gmra.mrb[0].mxu0 %v1468
        %v2261 = vpop.f32.mrb[0].mxu0
        %v2262 = vadd.f32 0.0, %v2261
        %v2263 = vpop.f32.mrb[0].mxu0
        %v2264 = vpop.f32.mrb[0].mxu0
        %v2265 = vadd.f32 0.0, %v2264
        %v2266 = vpop.f32.mrb[0].mxu0
        %2267 = vmatprep.mubr.bf16.mxu0 0
        %2268 = vmatmul.mubr.bf16.gmra.mrb[0].mxu0 %v2113
        %v2269 = vpop.f32.mrb[0].mxu0
        %v2270 = vadd.f32 0.0, %v2269
        %v2271 = vpop.f32.mrb[0].mxu0
        %v2272 = vpop.f32.mrb[0].mxu0
        %v2273 = vadd.f32 0.0, %v2272
        %v2274 = vpop.f32.mrb[0].mxu0
        %2275 = vdwg.mxu0
        %v2276 = vadd.f32 %v2059, %v2150
        %v2277 = vadd.f32 %v2060, %v2153
        %v2278 = vadd.f32 %v2061, %v2158
        %v2279 = vadd.f32 %v2062, %v2161
        %v2280 = vadd.f32 %v2063, %v2166
        %v2281 = vadd.f32 %v2064, %v2169
        %v2282 = vadd.f32 %v2065, %v2174
        %v2283 = vadd.f32 %v2066, %v2177
        %v2284 = vadd.f32 %v2067, %v2182
        %v2285 = vadd.f32 %v2068, %v2185
        %v2286 = vadd.f32 %v2069, %v2190
        %v2287 = vadd.f32 %v2070, %v2193
        %v2288 = vadd.f32 %v2071, %v2198
        %v2289 = vadd.f32 %v2072, %v2201
        %v2290 = vadd.f32 %v2073, %v2206
        %v2291 = vadd.f32 %v2074, %v2209
        %v2292 = vadd.f32 %v2075, %v2214
        %v2293 = vadd.f32 %v2076, %v2217
        %v2294 = vadd.f32 %v2077, %v2222
        %v2295 = vadd.f32 %v2078, %v2225
        %v2296 = vadd.f32 %v2079, %v2230
        %v2297 = vadd.f32 %v2080, %v2233
        %v2298 = vadd.f32 %v2081, %v2238
        %v2299 = vadd.f32 %v2082, %v2241
        %v2300 = vadd.f32 %v2083, %v2246
        %v2301 = vadd.f32 %v2084, %v2249
        %v2302 = vadd.f32 %v2085, %v2254
        %v2303 = vadd.f32 %v2086, %v2257
        %v2304 = vadd.f32 %v2087, %v2262
        %v2305 = vadd.f32 %v2088, %v2265
        %v2306 = vadd.f32 %v2089, %v2270
        %v2307 = vadd.f32 %v2090, %v2273
        %v2311 = vrot.slane %v507, 7
        %v2312 = vrot.slane %v508, 7
        %v2313 = vsel %vm613, %v2311, %v2312
        %v2314 = vrot.slane %v509, 7
        %v2315 = vsel %vm613, %v2312, %v2314
        %v2318 = vpack.c.bf16 %v2315, %v2313
        %v2323 = vunpack.c.l.b16 %v538
        %v2324 = vunpack.c.l.b16 %v539
        %v2325 = vunpack.c.l.b16 %v540
        %v2326 = vunpack.c.l.b16 %v541
        %v2327 = vpack.c.b16 %v2324, %v2323
        %v2328 = vpack.c.b16 %v2326, %v2325
        %v2332 = vsel %vm754, %v2318, 0
        %2334 = vmatprep.subr.bf16.mxu0 0
        %2335 = vmatpush1.bf16.msra.mxu0 %v2327
        %2336 = vmatprep.subr.bf16.mxu0 0
        %2337 = vmatpush1.bf16.msra.mxu0 %v2328
        %2338 = vmatprep.subr.bf16.mxu0 0
        %2339 = vmatpush1.bf16.msra.mxu0 0
        %2340 = vmatprep.subr.bf16.mxu0 0
        %2341 = vmatpush1.bf16.msra.mxu0 0
        %2342 = vmatprep.subr.bf16.mxu0 0
        %2343 = vmatpush1.bf16.msra.mxu0 0
        %2344 = vmatprep.subr.bf16.mxu0 0
        %2345 = vmatpush1.bf16.msra.mxu0 0
        %2346 = vmatprep.subr.bf16.mxu0 0
        %2347 = vmatpush1.bf16.msra.mxu0 0
        %2348 = vmatprep.subr.bf16.mxu0 0
        %2349 = vmatpush1.bf16.msra.mxu0 0
        %2350 = vmatprep.subr.bf16.mxu0 0
        %2351 = vmatpush1.bf16.msra.mxu0 0
        %2352 = vmatprep.subr.bf16.mxu0 0
        %2353 = vmatpush1.bf16.msra.mxu0 0
        %2354 = vmatprep.subr.bf16.mxu0 0
        %2355 = vmatpush1.bf16.msra.mxu0 0
        %2356 = vmatprep.subr.bf16.mxu0 0
        %2357 = vmatpush1.bf16.msra.mxu0 0
        %2358 = vmatprep.subr.bf16.mxu0 0
        %2359 = vmatpush1.bf16.msra.mxu0 0
        %2360 = vmatprep.subr.bf16.mxu0 0
        %2361 = vmatpush1.bf16.msra.mxu0 0
        %2362 = vmatprep.subr.bf16.mxu0 0
        %2363 = vmatpush1.bf16.msra.mxu0 0
        %2364 = vmatprep.subr.bf16.mxu0 0
        %2365 = vmatpush1.bf16.msra.mxu0 0
        %2366 = vmatprep.mubr.bf16.mxu0 0
        %2367 = vmatmul.mubr.bf16.gmra.mrb[0].mxu0 %v762
        %v2368 = vpop.f32.mrb[0].mxu0
        %v2369 = vadd.f32 0.0, %v2368
        %v2370 = vpop.f32.mrb[0].mxu0
        %v2371 = vpop.f32.mrb[0].mxu0
        %v2372 = vadd.f32 0.0, %v2371
        %v2373 = vpop.f32.mrb[0].mxu0
        %2374 = vmatprep.mubr.bf16.mxu0 0
        %2375 = vmatmul.mubr.bf16.gmra.mrb[0].mxu0 %v765
        %v2376 = vpop.f32.mrb[0].mxu0
        %v2377 = vadd.f32 0.0, %v2376
        %v2378 = vpop.f32.mrb[0].mxu0
        %v2379 = vpop.f32.mrb[0].mxu0
        %v2380 = vadd.f32 0.0, %v2379
        %v2381 = vpop.f32.mrb[0].mxu0
        %2382 = vmatprep.mubr.bf16.mxu0 0
        %2383 = vmatmul.mubr.bf16.gmra.mrb[0].mxu0 %v768
        %v2384 = vpop.f32.mrb[0].mxu0
        %v2385 = vadd.f32 0.0, %v2384
        %v2386 = vpop.f32.mrb[0].mxu0
        %v2387 = vpop.f32.mrb[0].mxu0
        %v2388 = vadd.f32 0.0, %v2387
        %v2389 = vpop.f32.mrb[0].mxu0
        %2390 = vmatprep.mubr.bf16.mxu0 0
        %2391 = vmatmul.mubr.bf16.gmra.mrb[0].mxu0 %v771
        %v2392 = vpop.f32.mrb[0].mxu0
        %v2393 = vadd.f32 0.0, %v2392
        %v2394 = vpop.f32.mrb[0].mxu0
        %v2395 = vpop.f32.mrb[0].mxu0
        %v2396 = vadd.f32 0.0, %v2395
        %v2397 = vpop.f32.mrb[0].mxu0
        %2398 = vmatprep.mubr.bf16.mxu0 0
        %2399 = vmatmul.mubr.bf16.gmra.mrb[0].mxu0 %v774
        %v2400 = vpop.f32.mrb[0].mxu0
        %v2401 = vadd.f32 0.0, %v2400
        %v2402 = vpop.f32.mrb[0].mxu0
        %v2403 = vpop.f32.mrb[0].mxu0
        %v2404 = vadd.f32 0.0, %v2403
        %v2405 = vpop.f32.mrb[0].mxu0
        %2406 = vmatprep.mubr.bf16.mxu0 0
        %2407 = vmatmul.mubr.bf16.gmra.mrb[0].mxu0 %v777
        %v2408 = vpop.f32.mrb[0].mxu0
        %v2409 = vadd.f32 0.0, %v2408
        %v2410 = vpop.f32.mrb[0].mxu0
        %v2411 = vpop.f32.mrb[0].mxu0
        %v2412 = vadd.f32 0.0, %v2411
        %v2413 = vpop.f32.mrb[0].mxu0
        %2414 = vmatprep.mubr.bf16.mxu0 0
        %2415 = vmatmul.mubr.bf16.gmra.mrb[0].mxu0 %v780
        %v2416 = vpop.f32.mrb[0].mxu0
        %v2417 = vadd.f32 0.0, %v2416
        %v2418 = vpop.f32.mrb[0].mxu0
        %v2419 = vpop.f32.mrb[0].mxu0
        %v2420 = vadd.f32 0.0, %v2419
        %v2421 = vpop.f32.mrb[0].mxu0
        %2422 = vmatprep.mubr.bf16.mxu0 0
        %2423 = vmatmul.mubr.bf16.gmra.mrb[0].mxu0 %v783
        %v2424 = vpop.f32.mrb[0].mxu0
        %v2425 = vadd.f32 0.0, %v2424
        %v2426 = vpop.f32.mrb[0].mxu0
        %v2427 = vpop.f32.mrb[0].mxu0
        %v2428 = vadd.f32 0.0, %v2427
        %v2429 = vpop.f32.mrb[0].mxu0
        %2430 = vmatprep.mubr.bf16.mxu0 0
        %2431 = vmatmul.mubr.bf16.gmra.mrb[0].mxu0 %v786
        %v2432 = vpop.f32.mrb[0].mxu0
        %v2433 = vadd.f32 0.0, %v2432
        %v2434 = vpop.f32.mrb[0].mxu0
        %v2435 = vpop.f32.mrb[0].mxu0
        %v2436 = vadd.f32 0.0, %v2435
        %v2437 = vpop.f32.mrb[0].mxu0
        %2438 = vmatprep.mubr.bf16.mxu0 0
        %2439 = vmatmul.mubr.bf16.gmra.mrb[0].mxu0 %v789
        %v2440 = vpop.f32.mrb[0].mxu0
        %v2441 = vadd.f32 0.0, %v2440
        %v2442 = vpop.f32.mrb[0].mxu0
        %v2443 = vpop.f32.mrb[0].mxu0
        %v2444 = vadd.f32 0.0, %v2443
        %v2445 = vpop.f32.mrb[0].mxu0
        %2446 = vmatprep.mubr.bf16.mxu0 0
        %2447 = vmatmul.mubr.bf16.gmra.mrb[0].mxu0 %v792
        %v2448 = vpop.f32.mrb[0].mxu0
        %v2449 = vadd.f32 0.0, %v2448
        %v2450 = vpop.f32.mrb[0].mxu0
        %v2451 = vpop.f32.mrb[0].mxu0
        %v2452 = vadd.f32 0.0, %v2451
        %v2453 = vpop.f32.mrb[0].mxu0
        %2454 = vmatprep.mubr.bf16.mxu0 0
        %2455 = vmatmul.mubr.bf16.gmra.mrb[0].mxu0 %v795
        %v2456 = vpop.f32.mrb[0].mxu0
        %v2457 = vadd.f32 0.0, %v2456
        %v2458 = vpop.f32.mrb[0].mxu0
        %v2459 = vpop.f32.mrb[0].mxu0
        %v2460 = vadd.f32 0.0, %v2459
        %v2461 = vpop.f32.mrb[0].mxu0
        %2462 = vmatprep.mubr.bf16.mxu0 0
        %2463 = vmatmul.mubr.bf16.gmra.mrb[0].mxu0 %v798
        %v2464 = vpop.f32.mrb[0].mxu0
        %v2465 = vadd.f32 0.0, %v2464
        %v2466 = vpop.f32.mrb[0].mxu0
        %v2467 = vpop.f32.mrb[0].mxu0
        %v2468 = vadd.f32 0.0, %v2467
        %v2469 = vpop.f32.mrb[0].mxu0
        %2470 = vmatprep.mubr.bf16.mxu0 0
        %2471 = vmatmul.mubr.bf16.gmra.mrb[0].mxu0 %v801
        %v2472 = vpop.f32.mrb[0].mxu0
        %v2473 = vadd.f32 0.0, %v2472
        %v2474 = vpop.f32.mrb[0].mxu0
        %v2475 = vpop.f32.mrb[0].mxu0
        %v2476 = vadd.f32 0.0, %v2475
        %v2477 = vpop.f32.mrb[0].mxu0
        %2478 = vmatprep.mubr.bf16.mxu0 0
        %2479 = vmatmul.mubr.bf16.gmra.mrb[0].mxu0 %v1687
        %v2480 = vpop.f32.mrb[0].mxu0
        %v2481 = vadd.f32 0.0, %v2480
        %v2482 = vpop.f32.mrb[0].mxu0
        %v2483 = vpop.f32.mrb[0].mxu0
        %v2484 = vadd.f32 0.0, %v2483
        %v2485 = vpop.f32.mrb[0].mxu0
        %2486 = vmatprep.mubr.bf16.mxu0 0
        %2487 = vmatmul.mubr.bf16.gmra.mrb[0].mxu0 %v2332
        %v2488 = vpop.f32.mrb[0].mxu0
        %v2489 = vadd.f32 0.0, %v2488
        %v2490 = vpop.f32.mrb[0].mxu0
        %v2491 = vpop.f32.mrb[0].mxu0
        %v2492 = vadd.f32 0.0, %v2491
        %v2493 = vpop.f32.mrb[0].mxu0
        %2494 = vdwg.mxu0
        %v2495 = vadd.f32 %v2276, %v2369
        %v2496 = vadd.f32 %v2277, %v2372
        %v2497 = vadd.f32 %v2278, %v2377
        %v2498 = vadd.f32 %v2279, %v2380
        %v2499 = vadd.f32 %v2280, %v2385
        %v2500 = vadd.f32 %v2281, %v2388
        %v2501 = vadd.f32 %v2282, %v2393
        %v2502 = vadd.f32 %v2283, %v2396
        %v2503 = vadd.f32 %v2284, %v2401
        %v2504 = vadd.f32 %v2285, %v2404
        %v2505 = vadd.f32 %v2286, %v2409
        %v2506 = vadd.f32 %v2287, %v2412
        %v2507 = vadd.f32 %v2288, %v2417
        %v2508 = vadd.f32 %v2289, %v2420
        %v2509 = vadd.f32 %v2290, %v2425
        %v2510 = vadd.f32 %v2291, %v2428
        %v2511 = vadd.f32 %v2292, %v2433
        %v2512 = vadd.f32 %v2293, %v2436
        %v2513 = vadd.f32 %v2294, %v2441
        %v2514 = vadd.f32 %v2295, %v2444
        %v2515 = vadd.f32 %v2296, %v2449
        %v2516 = vadd.f32 %v2297, %v2452
        %v2517 = vadd.f32 %v2298, %v2457
        %v2518 = vadd.f32 %v2299, %v2460
        %v2519 = vadd.f32 %v2300, %v2465
        %v2520 = vadd.f32 %v2301, %v2468
        %v2521 = vadd.f32 %v2302, %v2473
        %v2522 = vadd.f32 %v2303, %v2476
        %v2523 = vadd.f32 %v2304, %v2481
        %v2524 = vadd.f32 %v2305, %v2484
        %v2525 = vadd.f32 %v2306, %v2489
        %v2526 = vadd.f32 %v2307, %v2492
        %v2527 = vpack.c.bf16 %v509, %v508
        %v2532 = vunpack.c.l.b16 %v542
        %v2533 = vunpack.c.l.b16 %v543
        %v2534 = vunpack.c.l.b16 %v544
        %v2535 = vunpack.c.l.b16 %v545
        %v2536 = vpack.c.b16 %v2533, %v2532
        %v2537 = vpack.c.b16 %v2535, %v2534
        %v2541 = vsel %vm754, %v2527, 0
        %2543 = vmatprep.subr.bf16.mxu0 0
        %2544 = vmatpush1.bf16.msra.mxu0 %v2536
        %2545 = vmatprep.subr.bf16.mxu0 0
        %2546 = vmatpush1.bf16.msra.mxu0 %v2537
        %2547 = vmatprep.subr.bf16.mxu0 0
        %2548 = vmatpush1.bf16.msra.mxu0 0
        %2549 = vmatprep.subr.bf16.mxu0 0
        %2550 = vmatpush1.bf16.msra.mxu0 0
        %2551 = vmatprep.subr.bf16.mxu0 0
        %2552 = vmatpush1.bf16.msra.mxu0 0
        %2553 = vmatprep.subr.bf16.mxu0 0
        %2554 = vmatpush1.bf16.msra.mxu0 0
        %2555 = vmatprep.subr.bf16.mxu0 0
        %2556 = vmatpush1.bf16.msra.mxu0 0
        %2557 = vmatprep.subr.bf16.mxu0 0
        %2558 = vmatpush1.bf16.msra.mxu0 0
        %2559 = vmatprep.subr.bf16.mxu0 0
        %2560 = vmatpush1.bf16.msra.mxu0 0
        %2561 = vmatprep.subr.bf16.mxu0 0
        %2562 = vmatpush1.bf16.msra.mxu0 0
        %2563 = vmatprep.subr.bf16.mxu0 0
        %2564 = vmatpush1.bf16.msra.mxu0 0
        %2565 = vmatprep.subr.bf16.mxu0 0
        %2566 = vmatpush1.bf16.msra.mxu0 0
        %2567 = vmatprep.subr.bf16.mxu0 0
        %2568 = vmatpush1.bf16.msra.mxu0 0
        %2569 = vmatprep.subr.bf16.mxu0 0
        %2570 = vmatpush1.bf16.msra.mxu0 0
        %2571 = vmatprep.subr.bf16.mxu0 0
        %2572 = vmatpush1.bf16.msra.mxu0 0
        %2573 = vmatprep.subr.bf16.mxu0 0
        %2574 = vmatpush1.bf16.msra.mxu0 0
        %2575 = vmatprep.mubr.bf16.mxu0 0
        %2576 = vmatmul.mubr.bf16.gmra.mrb[0].mxu0 %v1031
        %v2577 = vpop.f32.mrb[0].mxu0
        %v2578 = vadd.f32 0.0, %v2577
        %v2579 = vpop.f32.mrb[0].mxu0
        %v2580 = vpop.f32.mrb[0].mxu0
        %v2581 = vadd.f32 0.0, %v2580
        %v2582 = vpop.f32.mrb[0].mxu0
        %2583 = vmatprep.mubr.bf16.mxu0 0
        %2584 = vmatmul.mubr.bf16.gmra.mrb[0].mxu0 %v1034
        %v2585 = vpop.f32.mrb[0].mxu0
        %v2586 = vadd.f32 0.0, %v2585
        %v2587 = vpop.f32.mrb[0].mxu0
        %v2588 = vpop.f32.mrb[0].mxu0
        %v2589 = vadd.f32 0.0, %v2588
        %v2590 = vpop.f32.mrb[0].mxu0
        %2591 = vmatprep.mubr.bf16.mxu0 0
        %2592 = vmatmul.mubr.bf16.gmra.mrb[0].mxu0 %v1037
        %v2593 = vpop.f32.mrb[0].mxu0
        %v2594 = vadd.f32 0.0, %v2593
        %v2595 = vpop.f32.mrb[0].mxu0
        %v2596 = vpop.f32.mrb[0].mxu0
        %v2597 = vadd.f32 0.0, %v2596
        %v2598 = vpop.f32.mrb[0].mxu0
        %2599 = vmatprep.mubr.bf16.mxu0 0
        %2600 = vmatmul.mubr.bf16.gmra.mrb[0].mxu0 %v1040
        %v2601 = vpop.f32.mrb[0].mxu0
        %v2602 = vadd.f32 0.0, %v2601
        %v2603 = vpop.f32.mrb[0].mxu0
        %v2604 = vpop.f32.mrb[0].mxu0
        %v2605 = vadd.f32 0.0, %v2604
        %v2606 = vpop.f32.mrb[0].mxu0
        %2607 = vmatprep.mubr.bf16.mxu0 0
        %2608 = vmatmul.mubr.bf16.gmra.mrb[0].mxu0 %v1043
        %v2609 = vpop.f32.mrb[0].mxu0
        %v2610 = vadd.f32 0.0, %v2609
        %v2611 = vpop.f32.mrb[0].mxu0
        %v2612 = vpop.f32.mrb[0].mxu0
        %v2613 = vadd.f32 0.0, %v2612
        %v2614 = vpop.f32.mrb[0].mxu0
        %2615 = vmatprep.mubr.bf16.mxu0 0
        %2616 = vmatmul.mubr.bf16.gmra.mrb[0].mxu0 %v1046
        %v2617 = vpop.f32.mrb[0].mxu0
        %v2618 = vadd.f32 0.0, %v2617
        %v2619 = vpop.f32.mrb[0].mxu0
        %v2620 = vpop.f32.mrb[0].mxu0
        %v2621 = vadd.f32 0.0, %v2620
        %v2622 = vpop.f32.mrb[0].mxu0
        %2623 = vmatprep.mubr.bf16.mxu0 0
        %2624 = vmatmul.mubr.bf16.gmra.mrb[0].mxu0 %v1049
        %v2625 = vpop.f32.mrb[0].mxu0
        %v2626 = vadd.f32 0.0, %v2625
        %v2627 = vpop.f32.mrb[0].mxu0
        %v2628 = vpop.f32.mrb[0].mxu0
        %v2629 = vadd.f32 0.0, %v2628
        %v2630 = vpop.f32.mrb[0].mxu0
        %2631 = vmatprep.mubr.bf16.mxu0 0
        %2632 = vmatmul.mubr.bf16.gmra.mrb[0].mxu0 %v1052
        %v2633 = vpop.f32.mrb[0].mxu0
        %v2634 = vadd.f32 0.0, %v2633
        %v2635 = vpop.f32.mrb[0].mxu0
        %v2636 = vpop.f32.mrb[0].mxu0
        %v2637 = vadd.f32 0.0, %v2636
        %v2638 = vpop.f32.mrb[0].mxu0
        %2639 = vmatprep.mubr.bf16.mxu0 0
        %2640 = vmatmul.mubr.bf16.gmra.mrb[0].mxu0 %v1055
        %v2641 = vpop.f32.mrb[0].mxu0
        %v2642 = vadd.f32 0.0, %v2641
        %v2643 = vpop.f32.mrb[0].mxu0
        %v2644 = vpop.f32.mrb[0].mxu0
        %v2645 = vadd.f32 0.0, %v2644
        %v2646 = vpop.f32.mrb[0].mxu0
        %2647 = vmatprep.mubr.bf16.mxu0 0
        %2648 = vmatmul.mubr.bf16.gmra.mrb[0].mxu0 %v1058
        %v2649 = vpop.f32.mrb[0].mxu0
        %v2650 = vadd.f32 0.0, %v2649
        %v2651 = vpop.f32.mrb[0].mxu0
        %v2652 = vpop.f32.mrb[0].mxu0
        %v2653 = vadd.f32 0.0, %v2652
        %v2654 = vpop.f32.mrb[0].mxu0
        %2655 = vmatprep.mubr.bf16.mxu0 0
        %2656 = vmatmul.mubr.bf16.gmra.mrb[0].mxu0 %v1061
        %v2657 = vpop.f32.mrb[0].mxu0
        %v2658 = vadd.f32 0.0, %v2657
        %v2659 = vpop.f32.mrb[0].mxu0
        %v2660 = vpop.f32.mrb[0].mxu0
        %v2661 = vadd.f32 0.0, %v2660
        %v2662 = vpop.f32.mrb[0].mxu0
        %2663 = vmatprep.mubr.bf16.mxu0 0
        %2664 = vmatmul.mubr.bf16.gmra.mrb[0].mxu0 %v1064
        %v2665 = vpop.f32.mrb[0].mxu0
        %v2666 = vadd.f32 0.0, %v2665
        %v2667 = vpop.f32.mrb[0].mxu0
        %v2668 = vpop.f32.mrb[0].mxu0
        %v2669 = vadd.f32 0.0, %v2668
        %v2670 = vpop.f32.mrb[0].mxu0
        %2671 = vmatprep.mubr.bf16.mxu0 0
        %2672 = vmatmul.mubr.bf16.gmra.mrb[0].mxu0 %v1067
        %v2673 = vpop.f32.mrb[0].mxu0
        %v2674 = vadd.f32 0.0, %v2673
        %v2675 = vpop.f32.mrb[0].mxu0
        %v2676 = vpop.f32.mrb[0].mxu0
        %v2677 = vadd.f32 0.0, %v2676
        %v2678 = vpop.f32.mrb[0].mxu0
        %2679 = vmatprep.mubr.bf16.mxu0 0
        %2680 = vmatmul.mubr.bf16.gmra.mrb[0].mxu0 %v1070
        %v2681 = vpop.f32.mrb[0].mxu0
        %v2682 = vadd.f32 0.0, %v2681
        %v2683 = vpop.f32.mrb[0].mxu0
        %v2684 = vpop.f32.mrb[0].mxu0
        %v2685 = vadd.f32 0.0, %v2684
        %v2686 = vpop.f32.mrb[0].mxu0
        %2687 = vmatprep.mubr.bf16.mxu0 0
        %2688 = vmatmul.mubr.bf16.gmra.mrb[0].mxu0 %v1896
        %v2689 = vpop.f32.mrb[0].mxu0
        %v2690 = vadd.f32 0.0, %v2689
        %v2691 = vpop.f32.mrb[0].mxu0
        %v2692 = vpop.f32.mrb[0].mxu0
        %v2693 = vadd.f32 0.0, %v2692
        %v2694 = vpop.f32.mrb[0].mxu0
        %2695 = vmatprep.mubr.bf16.mxu0 0
        %2696 = vmatmul.mubr.bf16.gmra.mrb[0].mxu0 %v2541
        %v2697 = vpop.f32.mrb[0].mxu0
        %v2698 = vadd.f32 0.0, %v2697
        %v2699 = vpop.f32.mrb[0].mxu0
        %v2700 = vpop.f32.mrb[0].mxu0
        %v2701 = vadd.f32 0.0, %v2700
        %v2702 = vpop.f32.mrb[0].mxu0
        %2703 = vdwg.mxu0
        %v2704 = vadd.f32 %v2495, %v2578
        %v2705 = vadd.f32 %v2496, %v2581
        %v2706 = vadd.f32 %v2497, %v2586
        %v2707 = vadd.f32 %v2498, %v2589
        %v2708 = vadd.f32 %v2499, %v2594
        %v2709 = vadd.f32 %v2500, %v2597
        %v2710 = vadd.f32 %v2501, %v2602
        %v2711 = vadd.f32 %v2502, %v2605
        %v2712 = vadd.f32 %v2503, %v2610
        %v2713 = vadd.f32 %v2504, %v2613
        %v2714 = vadd.f32 %v2505, %v2618
        %v2715 = vadd.f32 %v2506, %v2621
        %v2716 = vadd.f32 %v2507, %v2626
        %v2717 = vadd.f32 %v2508, %v2629
        %v2718 = vadd.f32 %v2509, %v2634
        %v2719 = vadd.f32 %v2510, %v2637
        %v2720 = vadd.f32 %v2511, %v2642
        %v2721 = vadd.f32 %v2512, %v2645
        %v2722 = vadd.f32 %v2513, %v2650
        %v2723 = vadd.f32 %v2514, %v2653
        %v2724 = vadd.f32 %v2515, %v2658
        %v2725 = vadd.f32 %v2516, %v2661
        %v2726 = vadd.f32 %v2517, %v2666
        %v2727 = vadd.f32 %v2518, %v2669
        %v2728 = vadd.f32 %v2519, %v2674
        %v2729 = vadd.f32 %v2520, %v2677
        %v2730 = vadd.f32 %v2521, %v2682
        %v2731 = vadd.f32 %v2522, %v2685
        %v2732 = vadd.f32 %v2523, %v2690
        %v2733 = vadd.f32 %v2524, %v2693
        %v2734 = vadd.f32 %v2525, %v2698
        %v2735 = vadd.f32 %v2526, %v2701
        %v2737 = vrot.slane %v508, 1
        %v2738 = vrot.slane %v509, 1
        %v2739 = vsel %vm1281, %v2737, %v2738
        %v2740 = vrot.slane %v510, 1
        %v2741 = vsel %vm1281, %v2738, %v2740
        %v2744 = vpack.c.bf16 %v2741, %v2739
        %v2749 = vunpack.c.l.b16 %v546
        %v2750 = vunpack.c.l.b16 %v547
        %v2751 = vunpack.c.l.b16 %v548
        %v2752 = vunpack.c.l.b16 %v549
        %v2753 = vpack.c.b16 %v2750, %v2749
        %v2754 = vpack.c.b16 %v2752, %v2751
        %v2758 = vsel %vm754, %v2744, 0
        %2760 = vmatprep.subr.bf16.mxu0 0
        %2761 = vmatpush1.bf16.msra.mxu0 %v2753
        %2762 = vmatprep.subr.bf16.mxu0 0
        %2763 = vmatpush1.bf16.msra.mxu0 %v2754
        %2764 = vmatprep.subr.bf16.mxu0 0
        %2765 = vmatpush1.bf16.msra.mxu0 0
        %2766 = vmatprep.subr.bf16.mxu0 0
        %2767 = vmatpush1.bf16.msra.mxu0 0
        %2768 = vmatprep.subr.bf16.mxu0 0
        %2769 = vmatpush1.bf16.msra.mxu0 0
        %2770 = vmatprep.subr.bf16.mxu0 0
        %2771 = vmatpush1.bf16.msra.mxu0 0
        %2772 = vmatprep.subr.bf16.mxu0 0
        %2773 = vmatpush1.bf16.msra.mxu0 0
        %2774 = vmatprep.subr.bf16.mxu0 0
        %2775 = vmatpush1.bf16.msra.mxu0 0
        %2776 = vmatprep.subr.bf16.mxu0 0
        %2777 = vmatpush1.bf16.msra.mxu0 0
        %2778 = vmatprep.subr.bf16.mxu0 0
        %2779 = vmatpush1.bf16.msra.mxu0 0
        %2780 = vmatprep.subr.bf16.mxu0 0
        %2781 = vmatpush1.bf16.msra.mxu0 0
        %2782 = vmatprep.subr.bf16.mxu0 0
        %2783 = vmatpush1.bf16.msra.mxu0 0
        %2784 = vmatprep.subr.bf16.mxu0 0
        %2785 = vmatpush1.bf16.msra.mxu0 0
        %2786 = vmatprep.subr.bf16.mxu0 0
        %2787 = vmatpush1.bf16.msra.mxu0 0
        %2788 = vmatprep.subr.bf16.mxu0 0
        %2789 = vmatpush1.bf16.msra.mxu0 0
        %2790 = vmatprep.subr.bf16.mxu0 0
        %2791 = vmatpush1.bf16.msra.mxu0 0
        %2792 = vmatprep.mubr.bf16.mxu0 0
        %2793 = vmatmul.mubr.bf16.gmra.mrb[0].mxu0 %v1429
        %v2794 = vpop.f32.mrb[0].mxu0
        %v2795 = vadd.f32 0.0, %v2794
        %v2796 = vpop.f32.mrb[0].mxu0
        %v2797 = vpop.f32.mrb[0].mxu0
        %v2798 = vadd.f32 0.0, %v2797
        %v2799 = vpop.f32.mrb[0].mxu0
        %2800 = vmatprep.mubr.bf16.mxu0 0
        %2801 = vmatmul.mubr.bf16.gmra.mrb[0].mxu0 %v1432
        %v2802 = vpop.f32.mrb[0].mxu0
        %v2803 = vadd.f32 0.0, %v2802
        %v2804 = vpop.f32.mrb[0].mxu0
        %v2805 = vpop.f32.mrb[0].mxu0
        %v2806 = vadd.f32 0.0, %v2805
        %v2807 = vpop.f32.mrb[0].mxu0
        %2808 = vmatprep.mubr.bf16.mxu0 0
        %2809 = vmatmul.mubr.bf16.gmra.mrb[0].mxu0 %v1435
        %v2810 = vpop.f32.mrb[0].mxu0
        %v2811 = vadd.f32 0.0, %v2810
        %v2812 = vpop.f32.mrb[0].mxu0
        %v2813 = vpop.f32.mrb[0].mxu0
        %v2814 = vadd.f32 0.0, %v2813
        %v2815 = vpop.f32.mrb[0].mxu0
        %2816 = vmatprep.mubr.bf16.mxu0 0
        %2817 = vmatmul.mubr.bf16.gmra.mrb[0].mxu0 %v1438
        %v2818 = vpop.f32.mrb[0].mxu0
        %v2819 = vadd.f32 0.0, %v2818
        %v2820 = vpop.f32.mrb[0].mxu0
        %v2821 = vpop.f32.mrb[0].mxu0
        %v2822 = vadd.f32 0.0, %v2821
        %v2823 = vpop.f32.mrb[0].mxu0
        %2824 = vmatprep.mubr.bf16.mxu0 0
        %2825 = vmatmul.mubr.bf16.gmra.mrb[0].mxu0 %v1441
        %v2826 = vpop.f32.mrb[0].mxu0
        %v2827 = vadd.f32 0.0, %v2826
        %v2828 = vpop.f32.mrb[0].mxu0
        %v2829 = vpop.f32.mrb[0].mxu0
        %v2830 = vadd.f32 0.0, %v2829
        %v2831 = vpop.f32.mrb[0].mxu0
        %2832 = vmatprep.mubr.bf16.mxu0 0
        %2833 = vmatmul.mubr.bf16.gmra.mrb[0].mxu0 %v1444
        %v2834 = vpop.f32.mrb[0].mxu0
        %v2835 = vadd.f32 0.0, %v2834
        %v2836 = vpop.f32.mrb[0].mxu0
        %v2837 = vpop.f32.mrb[0].mxu0
        %v2838 = vadd.f32 0.0, %v2837
        %v2839 = vpop.f32.mrb[0].mxu0
        %2840 = vmatprep.mubr.bf16.mxu0 0
        %2841 = vmatmul.mubr.bf16.gmra.mrb[0].mxu0 %v1447
        %v2842 = vpop.f32.mrb[0].mxu0
        %v2843 = vadd.f32 0.0, %v2842
        %v2844 = vpop.f32.mrb[0].mxu0
        %v2845 = vpop.f32.mrb[0].mxu0
        %v2846 = vadd.f32 0.0, %v2845
        %v2847 = vpop.f32.mrb[0].mxu0
        %2848 = vmatprep.mubr.bf16.mxu0 0
        %2849 = vmatmul.mubr.bf16.gmra.mrb[0].mxu0 %v1450
        %v2850 = vpop.f32.mrb[0].mxu0
        %v2851 = vadd.f32 0.0, %v2850
        %v2852 = vpop.f32.mrb[0].mxu0
        %v2853 = vpop.f32.mrb[0].mxu0
        %v2854 = vadd.f32 0.0, %v2853
        %v2855 = vpop.f32.mrb[0].mxu0
        %2856 = vmatprep.mubr.bf16.mxu0 0
        %2857 = vmatmul.mubr.bf16.gmra.mrb[0].mxu0 %v1453
        %v2858 = vpop.f32.mrb[0].mxu0
        %v2859 = vadd.f32 0.0, %v2858
        %v2860 = vpop.f32.mrb[0].mxu0
        %v2861 = vpop.f32.mrb[0].mxu0
        %v2862 = vadd.f32 0.0, %v2861
        %v2863 = vpop.f32.mrb[0].mxu0
        %2864 = vmatprep.mubr.bf16.mxu0 0
        %2865 = vmatmul.mubr.bf16.gmra.mrb[0].mxu0 %v1456
        %v2866 = vpop.f32.mrb[0].mxu0
        %v2867 = vadd.f32 0.0, %v2866
        %v2868 = vpop.f32.mrb[0].mxu0
        %v2869 = vpop.f32.mrb[0].mxu0
        %v2870 = vadd.f32 0.0, %v2869
        %v2871 = vpop.f32.mrb[0].mxu0
        %2872 = vmatprep.mubr.bf16.mxu0 0
        %2873 = vmatmul.mubr.bf16.gmra.mrb[0].mxu0 %v1459
        %v2874 = vpop.f32.mrb[0].mxu0
        %v2875 = vadd.f32 0.0, %v2874
        %v2876 = vpop.f32.mrb[0].mxu0
        %v2877 = vpop.f32.mrb[0].mxu0
        %v2878 = vadd.f32 0.0, %v2877
        %v2879 = vpop.f32.mrb[0].mxu0
        %2880 = vmatprep.mubr.bf16.mxu0 0
        %2881 = vmatmul.mubr.bf16.gmra.mrb[0].mxu0 %v1462
        %v2882 = vpop.f32.mrb[0].mxu0
        %v2883 = vadd.f32 0.0, %v2882
        %v2884 = vpop.f32.mrb[0].mxu0
        %v2885 = vpop.f32.mrb[0].mxu0
        %v2886 = vadd.f32 0.0, %v2885
        %v2887 = vpop.f32.mrb[0].mxu0
        %2888 = vmatprep.mubr.bf16.mxu0 0
        %2889 = vmatmul.mubr.bf16.gmra.mrb[0].mxu0 %v1465
        %v2890 = vpop.f32.mrb[0].mxu0
        %v2891 = vadd.f32 0.0, %v2890
        %v2892 = vpop.f32.mrb[0].mxu0
        %v2893 = vpop.f32.mrb[0].mxu0
        %v2894 = vadd.f32 0.0, %v2893
        %v2895 = vpop.f32.mrb[0].mxu0
        %2896 = vmatprep.mubr.bf16.mxu0 0
        %2897 = vmatmul.mubr.bf16.gmra.mrb[0].mxu0 %v1468
        %v2898 = vpop.f32.mrb[0].mxu0
        %v2899 = vadd.f32 0.0, %v2898
        %v2900 = vpop.f32.mrb[0].mxu0
        %v2901 = vpop.f32.mrb[0].mxu0
        %v2902 = vadd.f32 0.0, %v2901
        %v2903 = vpop.f32.mrb[0].mxu0
        %2904 = vmatprep.mubr.bf16.mxu0 0
        %2905 = vmatmul.mubr.bf16.gmra.mrb[0].mxu0 %v2113
        %v2906 = vpop.f32.mrb[0].mxu0
        %v2907 = vadd.f32 0.0, %v2906
        %v2908 = vpop.f32.mrb[0].mxu0
        %v2909 = vpop.f32.mrb[0].mxu0
        %v2910 = vadd.f32 0.0, %v2909
        %v2911 = vpop.f32.mrb[0].mxu0
        %2912 = vmatprep.mubr.bf16.mxu0 0
        %2913 = vmatmul.mubr.bf16.gmra.mrb[0].mxu0 %v2758
        %v2914 = vpop.f32.mrb[0].mxu0
        %v2915 = vadd.f32 0.0, %v2914
        %v2916 = vpop.f32.mrb[0].mxu0
        %v2917 = vpop.f32.mrb[0].mxu0
        %v2918 = vadd.f32 0.0, %v2917
        %v2919 = vpop.f32.mrb[0].mxu0
        %2920 = vdwg.mxu0
        %v2921 = vadd.f32 %v2704, %v2795
        %v2922 = vadd.f32 %v2705, %v2798
        %v2923 = vadd.f32 %v2706, %v2803
        %v2924 = vadd.f32 %v2707, %v2806
        %v2925 = vadd.f32 %v2708, %v2811
        %v2926 = vadd.f32 %v2709, %v2814
        %v2927 = vadd.f32 %v2710, %v2819
        %v2928 = vadd.f32 %v2711, %v2822
        %v2929 = vadd.f32 %v2712, %v2827
        %v2930 = vadd.f32 %v2713, %v2830
        %v2931 = vadd.f32 %v2714, %v2835
        %v2932 = vadd.f32 %v2715, %v2838
        %v2933 = vadd.f32 %v2716, %v2843
        %v2934 = vadd.f32 %v2717, %v2846
        %v2935 = vadd.f32 %v2718, %v2851
        %v2936 = vadd.f32 %v2719, %v2854
        %v2937 = vadd.f32 %v2720, %v2859
        %v2938 = vadd.f32 %v2721, %v2862
        %v2939 = vadd.f32 %v2722, %v2867
        %v2940 = vadd.f32 %v2723, %v2870
        %v2941 = vadd.f32 %v2724, %v2875
        %v2942 = vadd.f32 %v2725, %v2878
        %v2943 = vadd.f32 %v2726, %v2883
        %v2944 = vadd.f32 %v2727, %v2886
        %v2945 = vadd.f32 %v2728, %v2891
        %v2946 = vadd.f32 %v2729, %v2894
        %v2947 = vadd.f32 %v2730, %v2899
        %v2948 = vadd.f32 %v2731, %v2902
        %v2949 = vadd.f32 %v2732, %v2907
        %v2950 = vadd.f32 %v2733, %v2910
        %v2951 = vadd.f32 %v2734, %v2915
        %v2952 = vadd.f32 %v2735, %v2918
        %v2953 = vmax.f32 %v2921, 0.0
        %v2954 = vmax.f32 %v2922, 0.0
        %v2955 = vmax.f32 %v2923, 0.0
        %v2956 = vmax.f32 %v2924, 0.0
        %v2957 = vmax.f32 %v2925, 0.0
        %v2958 = vmax.f32 %v2926, 0.0
        %v2959 = vmax.f32 %v2927, 0.0
        %v2960 = vmax.f32 %v2928, 0.0
        %v2961 = vmax.f32 %v2929, 0.0
        %v2962 = vmax.f32 %v2930, 0.0
        %v2963 = vmax.f32 %v2931, 0.0
        %v2964 = vmax.f32 %v2932, 0.0
        %v2965 = vmax.f32 %v2933, 0.0
        %v2966 = vmax.f32 %v2934, 0.0
        %v2967 = vmax.f32 %v2935, 0.0
        %v2968 = vmax.f32 %v2936, 0.0
        %v2969 = vmax.f32 %v2937, 0.0
        %v2970 = vmax.f32 %v2938, 0.0
        %v2971 = vmax.f32 %v2939, 0.0
        %v2972 = vmax.f32 %v2940, 0.0
        %v2973 = vmax.f32 %v2941, 0.0
        %v2974 = vmax.f32 %v2942, 0.0
        %v2975 = vmax.f32 %v2943, 0.0
        %v2976 = vmax.f32 %v2944, 0.0
        %v2977 = vmax.f32 %v2945, 0.0
        %v2978 = vmax.f32 %v2946, 0.0
        %v2979 = vmax.f32 %v2947, 0.0
        %v2980 = vmax.f32 %v2948, 0.0
        %v2981 = vmax.f32 %v2949, 0.0
        %v2982 = vmax.f32 %v2950, 0.0
        %v2983 = vmax.f32 %v2951, 0.0
        %v2984 = vmax.f32 %v2952, 0.0
        %v2985 = vpack.c.bf16 %v2954, %v2953
        %v2986 = vpack.c.bf16 %v2956, %v2955
        %v2987 = vpack.c.bf16 %v2958, %v2957
        %v2988 = vpack.c.bf16 %v2960, %v2959
        %v2989 = vpack.c.bf16 %v2962, %v2961
        %v2990 = vpack.c.bf16 %v2964, %v2963
        %v2991 = vpack.c.bf16 %v2966, %v2965
        %v2992 = vpack.c.bf16 %v2968, %v2967
        %v2993 = vpack.c.bf16 %v2970, %v2969
        %v2994 = vpack.c.bf16 %v2972, %v2971
        %v2995 = vpack.c.bf16 %v2974, %v2973
        %v2996 = vpack.c.bf16 %v2976, %v2975
        %v2997 = vpack.c.bf16 %v2978, %v2977
        %v2998 = vpack.c.bf16 %v2980, %v2979
        %v2999 = vpack.c.bf16 %v2982, %v2981
        %v3000 = vpack.c.bf16 %v2984, %v2983
        %v3002 = vlaneseq
        %v3003 = vshrl.u32 %v3002, 7
        %v3004 = vsub.s32 0, %v3003
        %v3005 = vrot.slane %v558, %v3004
        %v3009 = vunpack.c.l.b16 %v555
        %v3010 = vunpack.c.l.b16 %v556
        %v3011 = vpack.c.b16 %v3010, %v3009
        %vm3013 = vcmask 130048
        %v3015 = vsel %vm3013, %v2985, 0
        %v3018 = vsel %vm3013, %v2986, 0
        %v3021 = vsel %vm3013, %v2987, 0
        %v3024 = vsel %vm3013, %v2988, 0
        %v3027 = vsel %vm3013, %v2989, 0
        %v3030 = vsel %vm3013, %v2990, 0
        %v3033 = vsel %vm3013, %v2991, 0
        %v3036 = vsel %vm3013, %v2992, 0
        %v3039 = vsel %vm3013, %v2993, 0
        %v3042 = vsel %vm3013, %v2994, 0
        %v3045 = vsel %vm3013, %v2995, 0
        %v3048 = vsel %vm3013, %v2996, 0
        %v3051 = vsel %vm3013, %v2997, 0
        %v3054 = vsel %vm3013, %v2998, 0
        %v3057 = vsel %vm3013, %v2999, 0
        %v3060 = vsel %vm3013, %v3000, 0
        %3062 = vmatprep.subr.bf16.mxu0 0
        %3063 = vmatpush1.bf16.msra.mxu0 %v3011
        %3064 = vmatprep.subr.bf16.mxu0 0
        %3065 = vmatpush1.bf16.msra.mxu0 0
        %3066 = vmatprep.subr.bf16.mxu0 0
        %3067 = vmatpush1.bf16.msra.mxu0 0
        %3068 = vmatprep.subr.bf16.mxu0 0
        %3069 = vmatpush1.bf16.msra.mxu0 0
        %3070 = vmatprep.subr.bf16.mxu0 0
        %3071 = vmatpush1.bf16.msra.mxu0 0
        %3072 = vmatprep.subr.bf16.mxu0 0
        %3073 = vmatpush1.bf16.msra.mxu0 0
        %3074 = vmatprep.subr.bf16.mxu0 0
        %3075 = vmatpush1.bf16.msra.mxu0 0
        %3076 = vmatprep.subr.bf16.mxu0 0
        %3077 = vmatpush1.bf16.msra.mxu0 0
        %3078 = vmatprep.subr.bf16.mxu0 0
        %3079 = vmatpush1.bf16.msra.mxu0 0
        %3080 = vmatprep.subr.bf16.mxu0 0
        %3081 = vmatpush1.bf16.msra.mxu0 0
        %3082 = vmatprep.subr.bf16.mxu0 0
        %3083 = vmatpush1.bf16.msra.mxu0 0
        %3084 = vmatprep.subr.bf16.mxu0 0
        %3085 = vmatpush1.bf16.msra.mxu0 0
        %3086 = vmatprep.subr.bf16.mxu0 0
        %3087 = vmatpush1.bf16.msra.mxu0 0
        %3088 = vmatprep.subr.bf16.mxu0 0
        %3089 = vmatpush1.bf16.msra.mxu0 0
        %3090 = vmatprep.subr.bf16.mxu0 0
        %3091 = vmatpush1.bf16.msra.mxu0 0
        %3092 = vmatprep.subr.bf16.mxu0 0
        %3093 = vmatpush1.bf16.msra.mxu0 0
        %3094 = vmatprep.mubr.bf16.mxu0 0
        %3095 = vmatmul.mubr.bf16.gmra.mrb[0].mxu0 %v3015
        %v3096 = vpop.f32.mrb[0].mxu0
        %v3097 = vadd.f32 %v3005, %v3096
        %v3098 = vpop.f32.mrb[0].mxu0
        %v3099 = vpop.f32.mrb[0].mxu0
        %v3100 = vadd.f32 %v3005, %v3099
        %v3101 = vpop.f32.mrb[0].mxu0
        %3102 = vmatprep.mubr.bf16.mxu0 0
        %3103 = vmatmul.mubr.bf16.gmra.mrb[0].mxu0 %v3018
        %v3104 = vpop.f32.mrb[0].mxu0
        %v3105 = vadd.f32 %v3005, %v3104
        %v3106 = vpop.f32.mrb[0].mxu0
        %v3107 = vpop.f32.mrb[0].mxu0
        %v3108 = vadd.f32 %v3005, %v3107
        %v3109 = vpop.f32.mrb[0].mxu0
        %3110 = vmatprep.mubr.bf16.mxu0 0
        %3111 = vmatmul.mubr.bf16.gmra.mrb[0].mxu0 %v3021
        %v3112 = vpop.f32.mrb[0].mxu0
        %v3113 = vadd.f32 %v3005, %v3112
        %v3114 = vpop.f32.mrb[0].mxu0
        %v3115 = vpop.f32.mrb[0].mxu0
        %v3116 = vadd.f32 %v3005, %v3115
        %v3117 = vpop.f32.mrb[0].mxu0
        %3118 = vmatprep.mubr.bf16.mxu0 0
        %3119 = vmatmul.mubr.bf16.gmra.mrb[0].mxu0 %v3024
        %v3120 = vpop.f32.mrb[0].mxu0
        %v3121 = vadd.f32 %v3005, %v3120
        %v3122 = vpop.f32.mrb[0].mxu0
        %v3123 = vpop.f32.mrb[0].mxu0
        %v3124 = vadd.f32 %v3005, %v3123
        %v3125 = vpop.f32.mrb[0].mxu0
        %3126 = vmatprep.mubr.bf16.mxu0 0
        %3127 = vmatmul.mubr.bf16.gmra.mrb[0].mxu0 %v3027
        %v3128 = vpop.f32.mrb[0].mxu0
        %v3129 = vadd.f32 %v3005, %v3128
        %v3130 = vpop.f32.mrb[0].mxu0
        %v3131 = vpop.f32.mrb[0].mxu0
        %v3132 = vadd.f32 %v3005, %v3131
        %v3133 = vpop.f32.mrb[0].mxu0
        %3134 = vmatprep.mubr.bf16.mxu0 0
        %3135 = vmatmul.mubr.bf16.gmra.mrb[0].mxu0 %v3030
        %v3136 = vpop.f32.mrb[0].mxu0
        %v3137 = vadd.f32 %v3005, %v3136
        %v3138 = vpop.f32.mrb[0].mxu0
        %v3139 = vpop.f32.mrb[0].mxu0
        %v3140 = vadd.f32 %v3005, %v3139
        %v3141 = vpop.f32.mrb[0].mxu0
        %3142 = vmatprep.mubr.bf16.mxu0 0
        %3143 = vmatmul.mubr.bf16.gmra.mrb[0].mxu0 %v3033
        %v3144 = vpop.f32.mrb[0].mxu0
        %v3145 = vadd.f32 %v3005, %v3144
        %v3146 = vpop.f32.mrb[0].mxu0
        %v3147 = vpop.f32.mrb[0].mxu0
        %v3148 = vadd.f32 %v3005, %v3147
        %v3149 = vpop.f32.mrb[0].mxu0
        %3150 = vmatprep.mubr.bf16.mxu0 0
        %3151 = vmatmul.mubr.bf16.gmra.mrb[0].mxu0 %v3036
        %v3152 = vpop.f32.mrb[0].mxu0
        %v3153 = vadd.f32 %v3005, %v3152
        %v3154 = vpop.f32.mrb[0].mxu0
        %v3155 = vpop.f32.mrb[0].mxu0
        %v3156 = vadd.f32 %v3005, %v3155
        %v3157 = vpop.f32.mrb[0].mxu0
        %3158 = vmatprep.mubr.bf16.mxu0 0
        %3159 = vmatmul.mubr.bf16.gmra.mrb[0].mxu0 %v3039
        %v3160 = vpop.f32.mrb[0].mxu0
        %v3161 = vadd.f32 %v3005, %v3160
        %v3162 = vpop.f32.mrb[0].mxu0
        %v3163 = vpop.f32.mrb[0].mxu0
        %v3164 = vadd.f32 %v3005, %v3163
        %v3165 = vpop.f32.mrb[0].mxu0
        %3166 = vmatprep.mubr.bf16.mxu0 0
        %3167 = vmatmul.mubr.bf16.gmra.mrb[0].mxu0 %v3042
        %v3168 = vpop.f32.mrb[0].mxu0
        %v3169 = vadd.f32 %v3005, %v3168
        %v3170 = vpop.f32.mrb[0].mxu0
        %v3171 = vpop.f32.mrb[0].mxu0
        %v3172 = vadd.f32 %v3005, %v3171
        %v3173 = vpop.f32.mrb[0].mxu0
        %3174 = vmatprep.mubr.bf16.mxu0 0
        %3175 = vmatmul.mubr.bf16.gmra.mrb[0].mxu0 %v3045
        %v3176 = vpop.f32.mrb[0].mxu0
        %v3177 = vadd.f32 %v3005, %v3176
        %v3178 = vpop.f32.mrb[0].mxu0
        %v3179 = vpop.f32.mrb[0].mxu0
        %v3180 = vadd.f32 %v3005, %v3179
        %v3181 = vpop.f32.mrb[0].mxu0
        %3182 = vmatprep.mubr.bf16.mxu0 0
        %3183 = vmatmul.mubr.bf16.gmra.mrb[0].mxu0 %v3048
        %v3184 = vpop.f32.mrb[0].mxu0
        %v3185 = vadd.f32 %v3005, %v3184
        %v3186 = vpop.f32.mrb[0].mxu0
        %v3187 = vpop.f32.mrb[0].mxu0
        %v3188 = vadd.f32 %v3005, %v3187
        %v3189 = vpop.f32.mrb[0].mxu0
        %3190 = vmatprep.mubr.bf16.mxu0 0
        %3191 = vmatmul.mubr.bf16.gmra.mrb[0].mxu0 %v3051
        %v3192 = vpop.f32.mrb[0].mxu0
        %v3193 = vadd.f32 %v3005, %v3192
        %v3194 = vpop.f32.mrb[0].mxu0
        %v3195 = vpop.f32.mrb[0].mxu0
        %v3196 = vadd.f32 %v3005, %v3195
        %v3197 = vpop.f32.mrb[0].mxu0
        %3198 = vmatprep.mubr.bf16.mxu0 0
        %3199 = vmatmul.mubr.bf16.gmra.mrb[0].mxu0 %v3054
        %v3200 = vpop.f32.mrb[0].mxu0
        %v3201 = vadd.f32 %v3005, %v3200
        %v3202 = vpop.f32.mrb[0].mxu0
        %v3203 = vpop.f32.mrb[0].mxu0
        %v3204 = vadd.f32 %v3005, %v3203
        %v3205 = vpop.f32.mrb[0].mxu0
        %3206 = vmatprep.mubr.bf16.mxu0 0
        %3207 = vmatmul.mubr.bf16.gmra.mrb[0].mxu0 %v3057
        %v3208 = vpop.f32.mrb[0].mxu0
        %v3209 = vadd.f32 %v3005, %v3208
        %v3210 = vpop.f32.mrb[0].mxu0
        %v3211 = vpop.f32.mrb[0].mxu0
        %v3212 = vadd.f32 %v3005, %v3211
        %v3213 = vpop.f32.mrb[0].mxu0
        %3214 = vmatprep.mubr.bf16.mxu0 0
        %3215 = vmatmul.mubr.bf16.gmra.mrb[0].mxu0 %v3060
        %v3216 = vpop.f32.mrb[0].mxu0
        %v3217 = vadd.f32 %v3005, %v3216
        %v3218 = vpop.f32.mrb[0].mxu0
        %v3219 = vpop.f32.mrb[0].mxu0
        %v3220 = vadd.f32 %v3005, %v3219
        %v3221 = vpop.f32.mrb[0].mxu0
        %3222 = vdwg.mxu0
        %v3223 = vadd.f32 %v372, %v3097
        %v3224 = vadd.f32 %v373, %v3100
        %v3225 = vadd.f32 %v376, %v3105
        %v3226 = vadd.f32 %v377, %v3108
        %v3227 = vadd.f32 %v380, %v3113
        %v3228 = vadd.f32 %v381, %v3116
        %v3229 = vadd.f32 %v384, %v3121
        %v3230 = vadd.f32 %v385, %v3124
        %v3231 = vadd.f32 %v388, %v3129
        %v3232 = vadd.f32 %v389, %v3132
        %v3233 = vadd.f32 %v392, %v3137
        %v3234 = vadd.f32 %v393, %v3140
        %v3235 = vadd.f32 %v396, %v3145
        %v3236 = vadd.f32 %v397, %v3148
        %v3237 = vadd.f32 %v400, %v3153
        %v3238 = vadd.f32 %v401, %v3156
        %v3239 = vadd.f32 %v404, %v3161
        %v3240 = vadd.f32 %v405, %v3164
        %v3241 = vadd.f32 %v408, %v3169
        %v3242 = vadd.f32 %v409, %v3172
        %v3243 = vadd.f32 %v412, %v3177
        %v3244 = vadd.f32 %v413, %v3180
        %v3245 = vadd.f32 %v416, %v3185
        %v3246 = vadd.f32 %v417, %v3188
        %v3247 = vadd.f32 %v420, %v3193
        %v3248 = vadd.f32 %v421, %v3196
        %v3249 = vadd.f32 %v424, %v3201
        %v3250 = vadd.f32 %v425, %v3204
        %v3251 = vadd.f32 %v428, %v3209
        %v3252 = vadd.f32 %v429, %v3212
        %v3253 = vadd.f32 %v432, %v3217
        %v3254 = vadd.f32 %v433, %v3220
        %p3255 = scmp.lt.s32.totalorder %s27, 1
        // Predicated region
        $region49: #{tpu_custom_call.1} parent=39 // pred_check
          %p3256 = pneg %p3255
        $region50: #{tpu_custom_call.1} parent=39 // pred_check_branch
          %3258 = sbr.rel (%p3256) target = $region52
        $region51: #{tpu_custom_call.1} parent=39 // pred_region
          %s3259 = scalar_lea.vmem [#allocation2], 32
          %3260 = vst.msk [vmem:[%s3259 + $0x8] sm:$0xff] %vm754, %v3223
          %3261 = vst.msk [vmem:[%s3259 + $0x10] sm:$0xff] %vm754, %v3224
          %3262 = vst.msk [vmem:[%s3259 + $0x28] sm:$0xff] %vm754, %v3225
          %3263 = vst.msk [vmem:[%s3259 + $0x30] sm:$0xff] %vm754, %v3226
          %3264 = vst.msk [vmem:[%s3259 + $0x48] sm:$0xff] %vm754, %v3227
          %3265 = vst.msk [vmem:[%s3259 + $0x50] sm:$0xff] %vm754, %v3228
          %3266 = vst.msk [vmem:[%s3259 + $0x68] sm:$0xff] %vm754, %v3229
          %3267 = vst.msk [vmem:[%s3259 + $0x70] sm:$0xff] %vm754, %v3230
          %3268 = vst.msk [vmem:[%s3259 + $0x88] sm:$0xff] %vm754, %v3231
          %3269 = vst.msk [vmem:[%s3259 + $0x90] sm:$0xff] %vm754, %v3232
          %3270 = vst.msk [vmem:[%s3259 + $0xa8] sm:$0xff] %vm754, %v3233
          %3271 = vst.msk [vmem:[%s3259 + $0xb0] sm:$0xff] %vm754, %v3234
          %3272 = vst.msk [vmem:[%s3259 + $0xc8] sm:$0xff] %vm754, %v3235
          %3273 = vst.msk [vmem:[%s3259 + $0xd0] sm:$0xff] %vm754, %v3236
          %3274 = vst.msk [vmem:[%s3259 + $0xe8] sm:$0xff] %vm754, %v3237
          %3275 = vst.msk [vmem:[%s3259 + $0xf0] sm:$0xff] %vm754, %v3238
          %3276 = vst.msk [vmem:[%s3259 + $0x108] sm:$0xff] %vm754, %v3239
          %3277 = vst.msk [vmem:[%s3259 + $0x110] sm:$0xff] %vm754, %v3240
          %3278 = vst.msk [vmem:[%s3259 + $0x128] sm:$0xff] %vm754, %v3241
          %3279 = vst.msk [vmem:[%s3259 + $0x130] sm:$0xff] %vm754, %v3242
          %3280 = vst.msk [vmem:[%s3259 + $0x148] sm:$0xff] %vm754, %v3243
          %3281 = vst.msk [vmem:[%s3259 + $0x150] sm:$0xff] %vm754, %v3244
          %3282 = vst.msk [vmem:[%s3259 + $0x168] sm:$0xff] %vm754, %v3245
          %3283 = vst.msk [vmem:[%s3259 + $0x170] sm:$0xff] %vm754, %v3246
          %3284 = vst.msk [vmem:[%s3259 + $0x188] sm:$0xff] %vm754, %v3247
          %3285 = vst.msk [vmem:[%s3259 + $0x190] sm:$0xff] %vm754, %v3248
          %3286 = vst.msk [vmem:[%s3259 + $0x1a8] sm:$0xff] %vm754, %v3249
          %3287 = vst.msk [vmem:[%s3259 + $0x1b0] sm:$0xff] %vm754, %v3250
          %3288 = vst.msk [vmem:[%s3259 + $0x1c8] sm:$0xff] %vm754, %v3251
          %3289 = vst.msk [vmem:[%s3259 + $0x1d0] sm:$0xff] %vm754, %v3252
          %3290 = vst.msk [vmem:[%s3259 + $0x1e8] sm:$0xff] %vm754, %v3253
          %3291 = vst.msk [vmem:[%s3259 + $0x1f0] sm:$0xff] %vm754, %v3254
        $region52: #{tpu_custom_call.1} parent=39 // pred_fallthru
          _
        %p3292 = scmp.eq.s32.totalorder %s27, 1
        // Predicated region
        $region53: #{tpu_custom_call.1} parent=39 // pred_check
          %p3293 = pneg %p3292
        $region54: #{tpu_custom_call.1} parent=39 // pred_check_branch
          %3295 = sbr.rel (%p3293) target = $region56
        $region55: #{tpu_custom_call.1} parent=39 // pred_region
          %v3296 = vmax.f32 %v3223, 0.0
          %v3297 = vmax.f32 %v3224, 0.0
          %v3298 = vmax.f32 %v3225, 0.0
          %v3299 = vmax.f32 %v3226, 0.0
          %v3300 = vmax.f32 %v3227, 0.0
          %v3301 = vmax.f32 %v3228, 0.0
          %v3302 = vmax.f32 %v3229, 0.0
          %v3303 = vmax.f32 %v3230, 0.0
          %v3304 = vmax.f32 %v3231, 0.0
          %v3305 = vmax.f32 %v3232, 0.0
          %v3306 = vmax.f32 %v3233, 0.0
          %v3307 = vmax.f32 %v3234, 0.0
          %v3308 = vmax.f32 %v3235, 0.0
          %v3309 = vmax.f32 %v3236, 0.0
          %v3310 = vmax.f32 %v3237, 0.0
          %v3311 = vmax.f32 %v3238, 0.0
          %v3312 = vmax.f32 %v3239, 0.0
          %v3313 = vmax.f32 %v3240, 0.0
          %v3314 = vmax.f32 %v3241, 0.0
          %v3315 = vmax.f32 %v3242, 0.0
          %v3316 = vmax.f32 %v3243, 0.0
          %v3317 = vmax.f32 %v3244, 0.0
          %v3318 = vmax.f32 %v3245, 0.0
          %v3319 = vmax.f32 %v3246, 0.0
          %v3320 = vmax.f32 %v3247, 0.0
          %v3321 = vmax.f32 %v3248, 0.0
          %v3322 = vmax.f32 %v3249, 0.0
          %v3323 = vmax.f32 %v3250, 0.0
          %v3324 = vmax.f32 %v3251, 0.0
          %v3325 = vmax.f32 %v3252, 0.0
          %v3326 = vmax.f32 %v3253, 0.0
          %v3327 = vmax.f32 %v3254, 0.0
          %3328 = vst.msk [vmem:[%s254] sm:$0xff] %vm754, %v3296
          %3329 = vst.msk [vmem:[%s254 + $0x8] sm:$0xff] %vm754, %v3297
          %3330 = vst.msk [vmem:[%s254 + $0x10] sm:$0xff] %vm754, %v3298
          %3331 = vst.msk [vmem:[%s254 + $0x18] sm:$0xff] %vm754, %v3299
          %3332 = vst.msk [vmem:[%s254 + $0x20] sm:$0xff] %vm754, %v3300
          %3333 = vst.msk [vmem:[%s254 + $0x28] sm:$0xff] %vm754, %v3301
          %3334 = vst.msk [vmem:[%s254 + $0x30] sm:$0xff] %vm754, %v3302
          %3335 = vst.msk [vmem:[%s254 + $0x38] sm:$0xff] %vm754, %v3303
          %3336 = vst.msk [vmem:[%s254 + $0x40] sm:$0xff] %vm754, %v3304
          %3337 = vst.msk [vmem:[%s254 + $0x48] sm:$0xff] %vm754, %v3305
          %3338 = vst.msk [vmem:[%s254 + $0x50] sm:$0xff] %vm754, %v3306
          %3339 = vst.msk [vmem:[%s254 + $0x58] sm:$0xff] %vm754, %v3307
          %3340 = vst.msk [vmem:[%s254 + $0x60] sm:$0xff] %vm754, %v3308
          %3341 = vst.msk [vmem:[%s254 + $0x68] sm:$0xff] %vm754, %v3309
          %3342 = vst.msk [vmem:[%s254 + $0x70] sm:$0xff] %vm754, %v3310
          %3343 = vst.msk [vmem:[%s254 + $0x78] sm:$0xff] %vm754, %v3311
          %3344 = vst.msk [vmem:[%s254 + $0x80] sm:$0xff] %vm754, %v3312
          %3345 = vst.msk [vmem:[%s254 + $0x88] sm:$0xff] %vm754, %v3313
          %3346 = vst.msk [vmem:[%s254 + $0x90] sm:$0xff] %vm754, %v3314
          %3347 = vst.msk [vmem:[%s254 + $0x98] sm:$0xff] %vm754, %v3315
          %3348 = vst.msk [vmem:[%s254 + $0xa0] sm:$0xff] %vm754, %v3316
          %3349 = vst.msk [vmem:[%s254 + $0xa8] sm:$0xff] %vm754, %v3317
          %3350 = vst.msk [vmem:[%s254 + $0xb0] sm:$0xff] %vm754, %v3318
          %3351 = vst.msk [vmem:[%s254 + $0xb8] sm:$0xff] %vm754, %v3319
          %3352 = vst.msk [vmem:[%s254 + $0xc0] sm:$0xff] %vm754, %v3320
          %3353 = vst.msk [vmem:[%s254 + $0xc8] sm:$0xff] %vm754, %v3321
          %3354 = vst.msk [vmem:[%s254 + $0xd0] sm:$0xff] %vm754, %v3322
          %3355 = vst.msk [vmem:[%s254 + $0xd8] sm:$0xff] %vm754, %v3323
          %3356 = vst.msk [vmem:[%s254 + $0xe0] sm:$0xff] %vm754, %v3324
          %3357 = vst.msk [vmem:[%s254 + $0xe8] sm:$0xff] %vm754, %v3325
          %3358 = vst.msk [vmem:[%s254 + $0xf0] sm:$0xff] %vm754, %v3326
          %3359 = vst.msk [vmem:[%s254 + $0xf8] sm:$0xff] %vm754, %v3327
        $region56: #{tpu_custom_call.1} parent=39 // pred_fallthru
          _
        %s3360 = sand.u32 %s152, 1
        %s3361 = scalar_lea.sflag [#allocation5], %s3360
        %s3362 = sand.u32 %s152, 1
        %s3363 = smul.addr %s3362, 256
        %s3364 = scalar_lea.vmem [#allocation6], %s3363
        // Predicated region
        $region57: #{tpu_custom_call.1} parent=39 // pred_check
          %p3365 = pneg %p162
        $region58: #{tpu_custom_call.1} parent=39 // pred_check_branch
          %3367 = sbr.rel (%p3365) target = $region60
        $region59: #{tpu_custom_call.1} parent=39 // pred_region
          %s3369 = ssub.s32 4096, 4096
          %3370 = vsyncadd %s3361, %s3369
          %s3371 = smul.addr %s26, 32
          %s3372 = smul.addr %s3371, 128
          %s3373 = scalar_lea.hbm %s5, %s3372
          %s3374 = sshll.u32 %s3364, 4
          %s3375 = int_to_ptr.vmem [resolvable:$true] %s3374
          %3380 = dma.vmem_to_hbm [thread:$0]  %s3375, 4096, %s3373, %s3361, 128, 128, 8
        $region60: #{tpu_custom_call.1} parent=39 // pred_fallthru
          _
      $region40: #{tpu_custom_call.1} parent=5 // pred_fallthru
        _
      %p3381 = scmp.le.s32.totalorder 2, %s17
      // Predicated region
      $region61: #{tpu_custom_call.1} parent=5 // pred_check
        %p3382 = pneg %p3381
      $region62: #{tpu_custom_call.1} parent=5 // pred_check_branch
        %3384 = sbr.rel (%p3382) target = $region64
      $region63: #{tpu_custom_call.1} parent=5 // pred_region
        %s3385 = ssub.s32 %s17, 2
        // Predicated region
        $region65: #{tpu_custom_call.1} parent=63 // pred_check
          %p3386 = pneg %p168
        $region66: #{tpu_custom_call.1} parent=63 // pred_check_branch
          %3388 = sbr.rel (%p3386) target = $region68
        $region67: #{tpu_custom_call.1} parent=63 // pred_region
          %s3389 = sand.u32 %s153, 1
          %s3390 = scalar_lea.sflag [#allocation5], %s3389
          %s3391 = sand.u32 %s153, 1
          %s3392 = smul.addr %s3391, 256
          %s3393 = scalar_lea.vmem [#allocation6], %s3392
          %3394 = dma.done %s3390, 4096
        $region68: #{tpu_custom_call.1} parent=63 // pred_fallthru
          _
      $region64: #{tpu_custom_call.1} parent=5 // pred_fallthru
        _
    $region6: #{tpu_custom_call.1} parent=1 // loop_footer
      %s21 = sadd.s32 1, %s17
    $region7: #{tpu_custom_call.1} parent=1 // loop_footer_branch
      %16 = sbr.rel target = $region3
    $region8: #{tpu_custom_call.1} parent=1 // loop_exit
      _
    %3395 = vsyncpa [#allocation4], 1
    %s3396 = scalar_lea.sflag [#allocation4], 1
    %3397 = vsyncpa %s3396, 1
    %3398 = vsyncpa [#allocation5], 1
    %s3399 = scalar_lea.sflag [#allocation5], 1
    %3400 = vsyncpa %s3399, 1

</llo_original>
